<compile_context>
chip_gen: v5e
topology: v5e:2x2
jax: 0.10.0
libtpu: 0.0.40
codegen_flags: <defaults>
</compile_context>

<pallas_src>
import functools
import math

import jax
import jax.numpy as jnp
from jax.experimental import pallas as pl
from jax.experimental.pallas import tpu as pltpu

_SQRT_HALF = math.sqrt(0.5)


# ----------------------------------------------------------------------------
# small helpers
# ----------------------------------------------------------------------------
def _vmem_cap_bytes():
    """Generation-aware VMEM limit: physical capacity minus headroom
    (~48 MiB on v7x, ~112 MiB on v5e/v6e)."""
    try:
        cap = int(pltpu.get_tpu_info().vmem_capacity_bytes)
    except Exception:
        cap = 64 << 20                       # conservative (v7x-sized) fallback
    return int(max(min(cap - (16 << 20), 112 << 20), 32 << 20))


def _fused_block_bytes(Bb, *, L, K, C, emb, n_head, d_k, d_v, di1, di2,
                       mm_bytes, attn_bytes):
    """Rough per-grid-step VMEM footprint of the fused kernel (for Bb choice)."""
    f4 = 4
    D2 = 2 * C
    hdk, hdv = n_head * d_k, n_head * d_v
    io = (2 * Bb * L * K * f4 + Bb * emb * f4          # x, cond, demb in
          + 2 * Bb * L * K * f4                        # res, skip out
          + Bb * n_head * L * L * attn_bytes)          # averaged attn out
    io *= 2                                            # double buffering
    weights = mm_bytes * (
        emb * C + 2 * K * C + 2 * C * D2 + C * 2 * K
        + C * (2 * hdk + hdv) + hdv * C + C * di1 + di1 * C
        + D2 * (2 * hdk + hdv) + hdv * D2 + D2 * di2 + di2 * D2)
    scratch = Bb * L * hdv * f4
    live = (Bb * L * (2 * D2 + 2 * hdk + hdv + max(di1, di2) + 2 * C + 2 * K) * f4
            + 4 * L * L * f4)
    return io + weights + scratch + live


def _pick_bb(B, L, est, budget):
    """Batch-block size: fold batch elements into one grid step so the row
    dimension of the LN/QKV/fc/FFN matmuls fills the MXU, while keeping >= 2
    grid steps (megacore / DMA pipelining) once the rows are already filled,
    and staying inside the VMEM budget."""
    best = 1
    for bb in range(1, min(B, 16) + 1):
        if B % bb != 0 or bb * L > 2048:
            continue
        if est(bb) > budget:
            continue
        if B // bb < 2 and best * L >= 256:
            continue
        best = bb
    return best


def _layernorm(x, g, b, eps):
    mu = jnp.mean(x, axis=-1, keepdims=True)
    var = jnp.mean((x - mu) ** 2, axis=-1, keepdims=True)
    return (x - mu) * jax.lax.rsqrt(var + eps) * g + b


# ----------------------------------------------------------------------------
# shared attention + FFN body (SAITS EncoderLayer, Pre-LN, diagonal mask)
# operates on a flattened (Bb*L, D) slab; attention is done per batch element.
# ----------------------------------------------------------------------------
def _attn_ffn(x2d, enc, attn_ref, ctx_scr, *, second, Bb, L, n_head, d_k, d_v,
              diag_mask, approx_recip, attn_dtype):
    (g1, b1, wq, wk, wv, wfc, g2, b2, w1, bb1, w2, bb2) = enc
    mm = wq.dtype                          # matmul operand dtype (bf16 or f32)
    f32 = jnp.float32

    # Pre-LN (eps=1e-5, torch default) in f32, then cast operands for the MXU.
    xn = _layernorm(x2d, g1[...], b1[...], 1e-5).astype(mm)
    q = jnp.dot(xn, wq[...], preferred_element_type=f32)
    k = jnp.dot(xn, wk[...], preferred_element_type=f32)
    v = jnp.dot(xn, wv[...], preferred_element_type=f32)

    if diag_mask:
        rows = jax.lax.broadcasted_iota(jnp.int32, (L, L), 0)
        cols = jax.lax.broadcasted_iota(jnp.int32, (L, L), 1)
        is_diag = rows == cols

    inv_temp = 1.0 / math.sqrt(d_k)
    dn = (((1,), (1,)), ((), ()))          # contract last dims -> (L, L), no .T
    for b in range(Bb):                    # static unroll over batch block
        r0 = b * L
        for h in range(n_head):            # static unroll over heads
            qh = q[r0:r0 + L, h * d_k:(h + 1) * d_k] * inv_temp
            kh = k[r0:r0 + L, h * d_k:(h + 1) * d_k]
            vh = v[r0:r0 + L, h * d_v:(h + 1) * d_v]
            s = jax.lax.dot_general(qh, kh, dn, preferred_element_type=f32)
            if diag_mask:
                s = jnp.where(is_diag, -1e9, s)         # masked_fill(mask==1, -1e9)
            # f32 softmax; the row-divide goes to the EUP via pl.reciprocal.
            p = jnp.exp(s - jnp.max(s, axis=-1, keepdims=True))
            a = p * pl.reciprocal(jnp.sum(p, axis=-1, keepdims=True),
                                  approx=approx_recip)
            if second:                      # fused (attn1 + attn2) / 2, in place
                prev = attn_ref[b, h, :, :].astype(f32)
                attn_ref[b, h, :, :] = ((prev + a) * 0.5).astype(attn_dtype)
            else:                           # stage attn1 in the output block (VMEM)
                attn_ref[b, h, :, :] = a.astype(attn_dtype)
            # head context written straight into VMEM scratch (no concatenate)
            ctx_scr[r0:r0 + L, h * d_v:(h + 1) * d_v] = jnp.dot(
                a.astype(mm), vh.astype(mm), preferred_element_type=f32)

    # One fc matmul over all heads (contraction n_head*d_v), residual in f32.
    o = jnp.dot(ctx_scr[...].astype(mm), wfc[...], preferred_element_type=f32) + x2d

    # PositionWiseFeedForward: Pre-LN (eps=1e-6) -> w2(relu(w1(.))) -> residual.
    on = _layernorm(o, g2[...], b2[...], 1e-6).astype(mm)
    h1 = jnp.maximum(
        jnp.dot(on, w1[...], preferred_element_type=f32) + bb1[...], 0.0)
    ff = jnp.dot(h1.astype(mm), w2[...], preferred_element_type=f32) + bb2[...]
    return ff + o


# ----------------------------------------------------------------------------
# fully fused GTA kernel (one grid step = Bb batch elements)
# ----------------------------------------------------------------------------
def _gta_fused_kernel(
        x_ref, cond_ref, demb_ref,
        diff_w, diff_b, init_w, init_b, cproj_w, cproj_b,
        convl_w, convl_b, convc_w, convc_b, rs_w, rs_b,
        e1_g1, e1_b1, e1_wq, e1_wk, e1_wv, e1_wfc,
        e1_g2, e1_b2, e1_w1, e1_bb1, e1_w2, e1_bb2,
        e2_g1, e2_b1, e2_wq, e2_wk, e2_wv, e2_wfc,
        e2_g2, e2_b2, e2_w1, e2_bb1, e2_w2, e2_bb2,
        res_ref, skip_ref, attn_ref, ctx_scr,
        *, Bb, L, n_head, d_k, d_v, channels, d_model,
        diag_mask, approx_recip, attn_dtype):
    mm = init_w.dtype
    f32 = jnp.float32
    BbL = Bb * L

    x2d = x_ref[...].reshape(BbL, d_model)                 # (Bb*L, K)
    c2d = cond_ref[...].reshape(BbL, d_model)

    # diffusion_projection(diffusion_emb): (Bb, C)
    diff = (jnp.dot(demb_ref[...].reshape(Bb, -1).astype(mm), diff_w[...],
                    preferred_element_type=f32) + diff_b[...])
    # init_proj(x) + diffusion broadcast over L (no HBM intermediate)
    y = (jnp.dot(x2d.astype(mm), init_w[...], preferred_element_type=f32)
         + init_b[...])
    y = (y.reshape(Bb, L, channels) + diff[:, None, :]).reshape(BbL, channels)

    enc1 = (e1_g1, e1_b1, e1_wq, e1_wk, e1_wv, e1_wfc,
            e1_g2, e1_b2, e1_w1, e1_bb1, e1_w2, e1_bb2)
    y = _attn_ffn(y, enc1, attn_ref, ctx_scr, second=False, Bb=Bb, L=L,
                  n_head=n_head, d_k=d_k, d_v=d_v, diag_mask=diag_mask,
                  approx_recip=approx_recip, attn_dtype=attn_dtype)

    # cond_proj(cond); conv_layer(y) + conv_cond(cond_proj)
    cp = (jnp.dot(c2d.astype(mm), cproj_w[...], preferred_element_type=f32)
          + cproj_b[...])
    z = (jnp.dot(y.astype(mm), convl_w[...], preferred_element_type=f32)
         + convl_b[...]
         + jnp.dot(cp.astype(mm), convc_w[...], preferred_element_type=f32)
         + convc_b[...])

    enc2 = (e2_g1, e2_b1, e2_wq, e2_wk, e2_wv, e2_wfc,
            e2_g2, e2_b2, e2_w1, e2_bb1, e2_w2, e2_bb2)
    z = _attn_ffn(z, enc2, attn_ref, ctx_scr, second=True, Bb=Bb, L=L,
                  n_head=n_head, d_k=d_k, d_v=d_v, diag_mask=diag_mask,
                  approx_recip=approx_recip, attn_dtype=attn_dtype)

    # sigmoid*tanh gate + fused res|skip projection (single matmul) + scaling
    gate = jax.nn.sigmoid(z[:, :channels]) * jnp.tanh(z[:, channels:])
    rs = (jnp.dot(gate.astype(mm), rs_w[...], preferred_element_type=f32)
          + rs_b[...])
    res_ref[...] = ((x2d + rs[:, :d_model]) * _SQRT_HALF
                    ).reshape(Bb, L, d_model).astype(res_ref.dtype)
    skip_ref[...] = rs[:, d_model:].reshape(Bb, L, d_model).astype(skip_ref.dtype)


# ----------------------------------------------------------------------------
# parameter preparation (done ONCE, outside the jitted step)
# ----------------------------------------------------------------------------
def prepare_params(params, mm_dtype=jnp.bfloat16):
    """Cast matmul weights to mm_dtype (bf16 default), reshape biases / LN params
    to (1, n) f32, and fuse the res/skip projection weights into one matmul."""
    f32 = jnp.float32

    def enc(p, D, d_inner):
        return dict(
            ln1_g=p["ln1_g"].reshape(1, D).astype(f32),
            ln1_b=p["ln1_b"].reshape(1, D).astype(f32),
            wq=p["wq"].astype(mm_dtype), wk=p["wk"].astype(mm_dtype),
            wv=p["wv"].astype(mm_dtype), wfc=p["wfc"].astype(mm_dtype),
            ln2_g=p["ln2_g"].reshape(1, D).astype(f32),
            ln2_b=p["ln2_b"].reshape(1, D).astype(f32),
            w1=p["w1"].astype(mm_dtype),
            b1=p["b1"].reshape(1, d_inner).astype(f32),
            w2=p["w2"].astype(mm_dtype),
            b2=p["b2"].reshape(1, D).astype(f32),
        )

    K, C = params["init_w"].shape
    di1 = params["enc1"]["w1"].shape[1]
    di2 = params["enc2"]["w1"].shape[1]
    return dict(
        diff_w=params["diff_w"].astype(mm_dtype),
        diff_b=params["diff_b"].reshape(1, C).astype(f32),
        init_w=params["init_w"].astype(mm_dtype),
        init_b=params["init_b"].reshape(1, C).astype(f32),
        cond_w=params["cond_w"].astype(mm_dtype),
        cond_b=params["cond_b"].reshape(1, C).astype(f32),
        convl_w=params["convl_w"].astype(mm_dtype),
        convl_b=params["convl_b"].reshape(1, 2 * C).astype(f32),
        convc_w=params["convc_w"].astype(mm_dtype),
        convc_b=params["convc_b"].reshape(1, 2 * C).astype(f32),
        rs_w=jnp.concatenate([params["res_w"], params["skip_w"]],
                             axis=1).astype(mm_dtype),
        rs_b=jnp.concatenate([params["res_b"],
                              params["skip_b"]]).reshape(1, 2 * K).astype(f32),
        enc1=enc(params["enc1"], C, di1),
        enc2=enc(params["enc2"], 2 * C, di2),
    )


def _enc_specs(D, hdk, hdv, d_inner):
    w = lambda shape: pl.BlockSpec(shape, lambda i: (0, 0))
    return [w((1, D)), w((1, D)),                    # ln1
            w((D, hdk)), w((D, hdk)), w((D, hdv)),   # wq, wk, wv
            w((hdv, D)),                             # fc
            w((1, D)), w((1, D)),                    # ln2
            w((D, d_inner)), w((1, d_inner)),        # ffn w1, b1
            w((d_inner, D)), w((1, D))]              # ffn w2, b2


def _enc_args(p):
    return (p["ln1_g"], p["ln1_b"], p["wq"], p["wk"], p["wv"], p["wfc"],
            p["ln2_g"], p["ln2_b"], p["w1"], p["b1"], p["w2"], p["b2"])


# ----------------------------------------------------------------------------
# GTA forward (single pallas_call)
# ----------------------------------------------------------------------------
def gta_forward(prep, x, cond, diffusion_emb, *, n_head, d_k, d_v, diag_mask=True):
    B, L, K = x.shape
    C = prep["init_w"].shape[1]
    emb = prep["diff_w"].shape[0]
    di1 = prep["enc1"]["w1"].shape[1]
    di2 = prep["enc2"]["w1"].shape[1]
    hdk, hdv = n_head * d_k, n_head * d_v

    mm_dtype = prep["init_w"].dtype
    is_bf16 = (mm_dtype == jnp.bfloat16)
    attn_dtype = jnp.bfloat16 if is_bf16 else jnp.float32
    mm_bytes = jnp.dtype(mm_dtype).itemsize
    attn_bytes = jnp.dtype(attn_dtype).itemsize

    cap = _vmem_cap_bytes()
    est = functools.partial(_fused_block_bytes, L=L, K=K, C=C, emb=emb,
                            n_head=n_head, d_k=d_k, d_v=d_v, di1=di1, di2=di2,
                            mm_bytes=mm_bytes, attn_bytes=attn_bytes)
    Bb = _pick_bb(B, L, est, budget=cap // 2)

    kern = functools.partial(
        _gta_fused_kernel, Bb=Bb, L=L, n_head=n_head, d_k=d_k, d_v=d_v,
        channels=C, d_model=K, diag_mask=diag_mask,
        approx_recip=is_bf16, attn_dtype=attn_dtype)

    _w = lambda shape: pl.BlockSpec(shape, lambda i: (0, 0))
    in_specs = [
        pl.BlockSpec((Bb, L, K), lambda i: (i, 0, 0)),      # x
        pl.BlockSpec((Bb, L, K), lambda i: (i, 0, 0)),      # cond
        pl.BlockSpec((Bb, 1, emb), lambda i: (i, 0, 0)),    # diffusion_emb
        _w((emb, C)), _w((1, C)),                           # diffusion_projection
        _w((K, C)), _w((1, C)),                             # init_proj
        _w((K, C)), _w((1, C)),                             # cond_proj
        _w((C, 2 * C)), _w((1, 2 * C)),                     # conv_layer
        _w((C, 2 * C)), _w((1, 2 * C)),                     # conv_cond
        _w((C, 2 * K)), _w((1, 2 * K)),                     # res|skip fused
    ] + _enc_specs(C, hdk, hdv, di1) + _enc_specs(2 * C, hdk, hdv, di2)

    out_specs = (
        pl.BlockSpec((Bb, L, K), lambda i: (i, 0, 0)),
        pl.BlockSpec((Bb, L, K), lambda i: (i, 0, 0)),
        pl.BlockSpec((Bb, n_head, L, L), lambda i: (i, 0, 0, 0)),
    )
    out_shape = (jax.ShapeDtypeStruct((B, L, K), jnp.float32),
                 jax.ShapeDtypeStruct((B, L, K), jnp.float32),
                 jax.ShapeDtypeStruct((B, n_head, L, L), attn_dtype))

    res, skip, attn = pl.pallas_call(
        kern,
        out_shape=out_shape,
        grid=(B // Bb,),
        in_specs=in_specs,
        out_specs=out_specs,
        scratch_shapes=[pltpu.VMEM((Bb * L, hdv), jnp.float32)],
        compiler_params=pltpu.CompilerParams(
            dimension_semantics=("parallel",), vmem_limit_bytes=cap),
    )(
        x, cond, diffusion_emb.reshape(B, 1, emb),
        prep["diff_w"], prep["diff_b"], prep["init_w"], prep["init_b"],
        prep["cond_w"], prep["cond_b"], prep["convl_w"], prep["convl_b"],
        prep["convc_w"], prep["convc_b"], prep["rs_w"], prep["rs_b"],
        *_enc_args(prep["enc1"]), *_enc_args(prep["enc2"]),
    )
    return res, skip, attn


# ----------------------------------------------------------------------------
# Pure-JAX reference (mirrors the PyTorch module) for correctness checks
# ----------------------------------------------------------------------------
def _ln(x, g, b, eps):
    mu = jnp.mean(x, -1, keepdims=True)
    var = jnp.mean((x - mu) ** 2, -1, keepdims=True)
    return (x - mu) / jnp.sqrt(var + eps) * g + b


def _ref_encoder(y, p, n_head, d_k, d_v):
    B, L, D = y.shape
    xn = _ln(y, p["ln1_g"], p["ln1_b"], 1e-5)
    q = (xn @ p["wq"]).reshape(B, L, n_head, d_k).transpose(0, 2, 1, 3)
    k = (xn @ p["wk"]).reshape(B, L, n_head, d_k).transpose(0, 2, 1, 3)
    v = (xn @ p["wv"]).reshape(B, L, n_head, d_v).transpose(0, 2, 1, 3)
    s = jnp.einsum("bhld,bhmd->bhlm", q / (d_k ** 0.5), k)
    s = jnp.where(jnp.eye(L, dtype=bool)[None, None], -1e9, s)
    a = jax.nn.softmax(s, -1)
    ctx = jnp.einsum("bhlm,bhmd->bhld", a, v).transpose(0, 2, 1, 3).reshape(B, L, -1)
    o = ctx @ p["wfc"] + y
    on = _ln(o, p["ln2_g"], p["ln2_b"], 1e-6)
    ff = jnp.maximum(on @ p["w1"] + p["b1"], 0.0) @ p["w2"] + p["b2"]
    return ff + o, a


def ref_gta(params, x, cond, demb, *, n_head, d_k, d_v):
    C = params["init_w"].shape[1]
    x_proj = x @ params["init_w"] + params["init_b"]
    cond_p = cond @ params["cond_w"] + params["cond_b"]
    diff = demb @ params["diff_w"] + params["diff_b"]
    y = x_proj + diff[:, None, :]
    y, a1 = _ref_encoder(y, params["enc1"], n_head, d_k, d_v)
    y = (y @ params["convl_w"] + params["convl_b"]
         + cond_p @ params["convc_w"] + params["convc_b"])
    y, a2 = _ref_encoder(y, params["enc2"], n_head, d_k, d_v)
    gate = jax.nn.sigmoid(y[..., :C]) * jnp.tanh(y[..., C:])
    res = gate @ params["res_w"] + params["res_b"]
    skip = gate @ params["skip_w"] + params["skip_b"]
    return (x + res) * math.sqrt(0.5), skip, (a1 + a2) / 2.0


# ----------------------------------------------------------------------------
# Deterministic parameter initialization (shapes from GTA.__init__)
# ----------------------------------------------------------------------------
def init_params(key, *, K, C, d_inner, n_head, d_k, d_v, emb_dim):
    keys = iter(jax.random.split(key, 64))

    def nrm(shape, fan_in):        # kaiming-normal-like
        return jax.random.normal(next(keys), shape, jnp.float32) * (2.0 / fan_in) ** 0.5

    def unif(shape, fan_in):       # torch default bias init
        b = 1.0 / fan_in ** 0.5
        return jax.random.uniform(next(keys), shape, jnp.float32, -b, b)

    def enc(D):
        return dict(
            ln1_g=jnp.ones((D,), jnp.float32), ln1_b=jnp.zeros((D,), jnp.float32),
            wq=nrm((D, n_head * d_k), D), wk=nrm((D, n_head * d_k), D),
            wv=nrm((D, n_head * d_v), D), wfc=nrm((n_head * d_v, D), n_head * d_v),
            ln2_g=jnp.ones((D,), jnp.float32), ln2_b=jnp.zeros((D,), jnp.float32),
            w1=nrm((D, d_inner), D), b1=unif((d_inner,), D),
            w2=nrm((d_inner, D), d_inner), b2=unif((D,), d_inner),
        )

    return dict(
        init_w=nrm((K, C), K), init_b=unif((C,), K),
        cond_w=nrm((K, C), K), cond_b=unif((C,), K),
        diff_w=nrm((emb_dim, C), emb_dim), diff_b=unif((C,), emb_dim),
        convl_w=nrm((C, 2 * C), C), convl_b=unif((2 * C,), C),
        convc_w=nrm((C, 2 * C), C), convc_b=unif((2 * C,), C),
        res_w=nrm((C, K), C), res_b=unif((K,), C),
        skip_w=nrm((C, K), C), skip_b=unif((K,), C),
        enc1=enc(C), enc2=enc(2 * C),
    )


if __name__ == "__main__":
    # Small shapes: B=2, L(=d_time)=8, K(=d_model)=4, channels=8, d_inner=16,
    # n_head=2, d_k=d_v=4, diffusion_embedding_dim=16, diagonal_attention_mask=True.
    # Dropout layers are identity (rate 0 / eval mode).
    B, L, K = 2, 8, 4
    C, d_inner, n_head, d_k, d_v, emb_dim = 8, 16, 2, 4, 4, 16

    key = jax.random.PRNGKey(0)
    kx, kc, ke, kp = jax.random.split(key, 4)
    x = jax.random.normal(kx, (B, L, K), jnp.float32)
    cond = jax.random.normal(kc, (B, L, K), jnp.float32)
    demb = jax.random.normal(ke, (B, emb_dim), jnp.float32)
    params = init_params(kp, K=K, C=C, d_inner=d_inner,
                         n_head=n_head, d_k=d_k, d_v=d_v, emb_dim=emb_dim)

    r_out, r_skip, r_attn = ref_gta(params, x, cond, demb,
                                    n_head=n_head, d_k=d_k, d_v=d_v)

    fwd = jax.jit(functools.partial(gta_forward, n_head=n_head, d_k=d_k, d_v=d_v))

    # Exact path (f32 MXU operands, f32 attention output): strict check.
    prep_f32 = prepare_params(params, mm_dtype=jnp.float32)
    out, skip, attn = fwd(prep_f32, x, cond, demb)
    jax.block_until_ready((out, skip, attn))
    assert out.shape == (B, L, K) and skip.shape == (B, L, K)
    assert attn.shape == (B, n_head, L, L)
    assert jnp.allclose(out, r_out, atol=1e-4, rtol=1e-4)
    assert jnp.allclose(skip, r_skip, atol=1e-4, rtol=1e-4)
    assert jnp.allclose(attn, r_attn, atol=1e-4, rtol=1e-4)

    # Default fast path: bf16 MXU operands + bf16 attention output (f32 LN,
    # softmax and accumulation), weight casts hoisted outside the jitted step.
    prep_bf16 = prepare_params(params)                    # bf16 default
    out_bf, skip_bf, attn_bf = fwd(prep_bf16, x, cond, demb)
    jax.block_until_ready((out_bf, skip_bf, attn_bf))
    assert out_bf.shape == (B, L, K) and skip_bf.shape == (B, L, K)
    assert attn_bf.shape == (B, n_head, L, L)
    assert attn_bf.dtype == jnp.bfloat16
    assert bool(jnp.all(jnp.isfinite(out_bf)))
    assert bool(jnp.all(jnp.isfinite(skip_bf)))
    assert float(jnp.max(jnp.abs(out_bf - r_out))) < 0.3
    assert float(jnp.max(jnp.abs(skip_bf - r_skip))) < 0.3
    assert float(jnp.max(jnp.abs(attn_bf.astype(jnp.float32) - r_attn))) < 0.08

    print("KERNEL_OK")
</pallas_src>

<mosaic_0001>
module attributes {stable_mosaic.version = 11 : i64} {
  func.func @_gta_fused_kernel(%arg0: i32, %arg1: memref<2x8x4xf32, #tpu.memory_space<vmem>>, %arg2: memref<2x8x4xf32, #tpu.memory_space<vmem>>, %arg3: memref<2x1x16xf32, #tpu.memory_space<vmem>>, %arg4: memref<16x8xf32, #tpu.memory_space<vmem>>, %arg5: memref<1x8xf32, #tpu.memory_space<vmem>>, %arg6: memref<4x8xf32, #tpu.memory_space<vmem>>, %arg7: memref<1x8xf32, #tpu.memory_space<vmem>>, %arg8: memref<4x8xf32, #tpu.memory_space<vmem>>, %arg9: memref<1x8xf32, #tpu.memory_space<vmem>>, %arg10: memref<8x16xf32, #tpu.memory_space<vmem>>, %arg11: memref<1x16xf32, #tpu.memory_space<vmem>>, %arg12: memref<8x16xf32, #tpu.memory_space<vmem>>, %arg13: memref<1x16xf32, #tpu.memory_space<vmem>>, %arg14: memref<8x8xf32, #tpu.memory_space<vmem>>, %arg15: memref<1x8xf32, #tpu.memory_space<vmem>>, %arg16: memref<1x8xf32, #tpu.memory_space<vmem>>, %arg17: memref<1x8xf32, #tpu.memory_space<vmem>>, %arg18: memref<8x8xf32, #tpu.memory_space<vmem>>, %arg19: memref<8x8xf32, #tpu.memory_space<vmem>>, %arg20: memref<8x8xf32, #tpu.memory_space<vmem>>, %arg21: memref<8x8xf32, #tpu.memory_space<vmem>>, %arg22: memref<1x8xf32, #tpu.memory_space<vmem>>, %arg23: memref<1x8xf32, #tpu.memory_space<vmem>>, %arg24: memref<8x16xf32, #tpu.memory_space<vmem>>, %arg25: memref<1x16xf32, #tpu.memory_space<vmem>>, %arg26: memref<16x8xf32, #tpu.memory_space<vmem>>, %arg27: memref<1x8xf32, #tpu.memory_space<vmem>>, %arg28: memref<1x16xf32, #tpu.memory_space<vmem>>, %arg29: memref<1x16xf32, #tpu.memory_space<vmem>>, %arg30: memref<16x8xf32, #tpu.memory_space<vmem>>, %arg31: memref<16x8xf32, #tpu.memory_space<vmem>>, %arg32: memref<16x8xf32, #tpu.memory_space<vmem>>, %arg33: memref<8x16xf32, #tpu.memory_space<vmem>>, %arg34: memref<1x16xf32, #tpu.memory_space<vmem>>, %arg35: memref<1x16xf32, #tpu.memory_space<vmem>>, %arg36: memref<16x16xf32, #tpu.memory_space<vmem>>, %arg37: memref<1x16xf32, #tpu.memory_space<vmem>>, %arg38: memref<16x16xf32, #tpu.memory_space<vmem>>, %arg39: memref<1x16xf32, #tpu.memory_space<vmem>>, %arg40: memref<2x8x4xf32, #tpu.memory_space<vmem>>, %arg41: memref<2x8x4xf32, #tpu.memory_space<vmem>>, %arg42: memref<2x2x8x8xf32, #tpu.memory_space<vmem>>, %arg43: memref<16x8xf32, #tpu.memory_space<vmem>>) attributes {dimension_semantics = [#tpu.dimension_semantics<parallel>], iteration_bounds = array<i64: 1>, scalar_prefetch = 0 : i64, scratch_operands = 1 : i64, tpu.core_type = #tpu.core_type<tc>, window_params = [{transform_indices = @transform_0, window_bounds = array<i64: 2, 8, 4>}, {transform_indices = @transform_1, window_bounds = array<i64: 2, 8, 4>}, {transform_indices = @transform_2, window_bounds = array<i64: 2, 1, 16>}, {pipeline_mode = #tpu.pipeline_mode<synchronous>, transform_indices = @transform_3, window_bounds = array<i64: 16, 8>}, {pipeline_mode = #tpu.pipeline_mode<synchronous>, transform_indices = @transform_4, window_bounds = array<i64: 1, 8>}, {pipeline_mode = #tpu.pipeline_mode<synchronous>, transform_indices = @transform_5, window_bounds = array<i64: 4, 8>}, {pipeline_mode = #tpu.pipeline_mode<synchronous>, transform_indices = @transform_6, window_bounds = array<i64: 1, 8>}, {pipeline_mode = #tpu.pipeline_mode<synchronous>, transform_indices = @transform_7, window_bounds = array<i64: 4, 8>}, {pipeline_mode = #tpu.pipeline_mode<synchronous>, transform_indices = @transform_8, window_bounds = array<i64: 1, 8>}, {pipeline_mode = #tpu.pipeline_mode<synchronous>, transform_indices = @transform_9, window_bounds = array<i64: 8, 16>}, {pipeline_mode = #tpu.pipeline_mode<synchronous>, transform_indices = @transform_10, window_bounds = array<i64: 1, 16>}, {pipeline_mode = #tpu.pipeline_mode<synchronous>, transform_indices = @transform_11, window_bounds = array<i64: 8, 16>}, {pipeline_mode = #tpu.pipeline_mode<synchronous>, transform_indices = @transform_12, window_bounds = array<i64: 1, 16>}, {pipeline_mode = #tpu.pipeline_mode<synchronous>, transform_indices = @transform_13, window_bounds = array<i64: 8, 8>}, {pipeline_mode = #tpu.pipeline_mode<synchronous>, transform_indices = @transform_14, window_bounds = array<i64: 1, 8>}, {pipeline_mode = #tpu.pipeline_mode<synchronous>, transform_indices = @transform_15, window_bounds = array<i64: 1, 8>}, {pipeline_mode = #tpu.pipeline_mode<synchronous>, transform_indices = @transform_16, window_bounds = array<i64: 1, 8>}, {pipeline_mode = #tpu.pipeline_mode<synchronous>, transform_indices = @transform_17, window_bounds = array<i64: 8, 8>}, {pipeline_mode = #tpu.pipeline_mode<synchronous>, transform_indices = @transform_18, window_bounds = array<i64: 8, 8>}, {pipeline_mode = #tpu.pipeline_mode<synchronous>, transform_indices = @transform_19, window_bounds = array<i64: 8, 8>}, {pipeline_mode = #tpu.pipeline_mode<synchronous>, transform_indices = @transform_20, window_bounds = array<i64: 8, 8>}, {pipeline_mode = #tpu.pipeline_mode<synchronous>, transform_indices = @transform_21, window_bounds = array<i64: 1, 8>}, {pipeline_mode = #tpu.pipeline_mode<synchronous>, transform_indices = @transform_22, window_bounds = array<i64: 1, 8>}, {pipeline_mode = #tpu.pipeline_mode<synchronous>, transform_indices = @transform_23, window_bounds = array<i64: 8, 16>}, {pipeline_mode = #tpu.pipeline_mode<synchronous>, transform_indices = @transform_24, window_bounds = array<i64: 1, 16>}, {pipeline_mode = #tpu.pipeline_mode<synchronous>, transform_indices = @transform_25, window_bounds = array<i64: 16, 8>}, {pipeline_mode = #tpu.pipeline_mode<synchronous>, transform_indices = @transform_26, window_bounds = array<i64: 1, 8>}, {pipeline_mode = #tpu.pipeline_mode<synchronous>, transform_indices = @transform_27, window_bounds = array<i64: 1, 16>}, {pipeline_mode = #tpu.pipeline_mode<synchronous>, transform_indices = @transform_28, window_bounds = array<i64: 1, 16>}, {pipeline_mode = #tpu.pipeline_mode<synchronous>, transform_indices = @transform_29, window_bounds = array<i64: 16, 8>}, {pipeline_mode = #tpu.pipeline_mode<synchronous>, transform_indices = @transform_30, window_bounds = array<i64: 16, 8>}, {pipeline_mode = #tpu.pipeline_mode<synchronous>, transform_indices = @transform_31, window_bounds = array<i64: 16, 8>}, {pipeline_mode = #tpu.pipeline_mode<synchronous>, transform_indices = @transform_32, window_bounds = array<i64: 8, 16>}, {pipeline_mode = #tpu.pipeline_mode<synchronous>, transform_indices = @transform_33, window_bounds = array<i64: 1, 16>}, {pipeline_mode = #tpu.pipeline_mode<synchronous>, transform_indices = @transform_34, window_bounds = array<i64: 1, 16>}, {pipeline_mode = #tpu.pipeline_mode<synchronous>, transform_indices = @transform_35, window_bounds = array<i64: 16, 16>}, {pipeline_mode = #tpu.pipeline_mode<synchronous>, transform_indices = @transform_36, window_bounds = array<i64: 1, 16>}, {pipeline_mode = #tpu.pipeline_mode<synchronous>, transform_indices = @transform_37, window_bounds = array<i64: 16, 16>}, {pipeline_mode = #tpu.pipeline_mode<synchronous>, transform_indices = @transform_38, window_bounds = array<i64: 1, 16>}, {transform_indices = @transform_39, window_bounds = array<i64: 2, 8, 4>}, {transform_indices = @transform_40, window_bounds = array<i64: 2, 8, 4>}, {transform_indices = @transform_41, window_bounds = array<i64: 2, 2, 8, 8>}]} {
    %c0 = arith.constant 0 : index
    %c0_0 = arith.constant 0 : index
    %c0_1 = arith.constant 0 : index
    %0 = vector.load %arg1[%c0, %c0_0, %c0_1] : memref<2x8x4xf32, #tpu.memory_space<vmem>>, vector<2x8x4xf32>
    %1 = vector.shape_cast %0 : vector<2x8x4xf32> to vector<16x4xf32>
    %c0_2 = arith.constant 0 : index
    %c0_3 = arith.constant 0 : index
    %c0_4 = arith.constant 0 : index
    %2 = vector.load %arg2[%c0_2, %c0_3, %c0_4] : memref<2x8x4xf32, #tpu.memory_space<vmem>>, vector<2x8x4xf32>
    %3 = vector.shape_cast %2 : vector<2x8x4xf32> to vector<16x4xf32>
    %c0_5 = arith.constant 0 : index
    %c0_6 = arith.constant 0 : index
    %c0_7 = arith.constant 0 : index
    %4 = vector.load %arg3[%c0_5, %c0_6, %c0_7] : memref<2x1x16xf32, #tpu.memory_space<vmem>>, vector<2x1x16xf32>
    %5 = vector.shape_cast %4 : vector<2x1x16xf32> to vector<2x16xf32>
    %c0_8 = arith.constant 0 : index
    %c0_9 = arith.constant 0 : index
    %6 = vector.load %arg4[%c0_8, %c0_9] : memref<16x8xf32, #tpu.memory_space<vmem>>, vector<16x8xf32>
    %cst = arith.constant dense<0.000000e+00> : vector<2x8xf32>
    %7 = tpu.matmul %5, %6, %cst {dimension_numbers = #tpu.dot_dimension_numbers<[1], [0], [0], [1], [0, 0, 1, 1], [], []>} : vector<2x16xf32>, vector<16x8xf32>, vector<2x8xf32> -> vector<2x8xf32>
    %c0_10 = arith.constant 0 : index
    %c0_11 = arith.constant 0 : index
    %8 = vector.load %arg5[%c0_10, %c0_11] : memref<1x8xf32, #tpu.memory_space<vmem>>, vector<1x8xf32>
    %9 = vector.broadcast %8 : vector<1x8xf32> to vector<2x8xf32>
    %10 = arith.addf %7, %9 : vector<2x8xf32>
    %c0_12 = arith.constant 0 : index
    %c0_13 = arith.constant 0 : index
    %11 = vector.load %arg6[%c0_12, %c0_13] : memref<4x8xf32, #tpu.memory_space<vmem>>, vector<4x8xf32>
    %cst_14 = arith.constant dense<0.000000e+00> : vector<16x8xf32>
    %12 = tpu.matmul %1, %11, %cst_14 {dimension_numbers = #tpu.dot_dimension_numbers<[1], [0], [0], [1], [0, 0, 1, 1], [], []>} : vector<16x4xf32>, vector<4x8xf32>, vector<16x8xf32> -> vector<16x8xf32>
    %c0_15 = arith.constant 0 : index
    %c0_16 = arith.constant 0 : index
    %13 = vector.load %arg7[%c0_15, %c0_16] : memref<1x8xf32, #tpu.memory_space<vmem>>, vector<1x8xf32>
    %14 = vector.broadcast %13 : vector<1x8xf32> to vector<16x8xf32>
    %15 = arith.addf %12, %14 : vector<16x8xf32>
    %16 = vector.shape_cast %15 : vector<16x8xf32> to vector<2x8x8xf32>
    %17 = vector.shape_cast %10 : vector<2x8xf32> to vector<2x1x8xf32>
    %18 = vector.broadcast %17 : vector<2x1x8xf32> to vector<2x8x8xf32>
    %19 = arith.addf %16, %18 : vector<2x8x8xf32>
    %20 = vector.shape_cast %19 : vector<2x8x8xf32> to vector<16x8xf32>
    %c0_17 = arith.constant 0 : index
    %c0_18 = arith.constant 0 : index
    %21 = vector.load %arg16[%c0_17, %c0_18] : memref<1x8xf32, #tpu.memory_space<vmem>>, vector<1x8xf32>
    %c0_19 = arith.constant 0 : index
    %c0_20 = arith.constant 0 : index
    %22 = vector.load %arg17[%c0_19, %c0_20] : memref<1x8xf32, #tpu.memory_space<vmem>>, vector<1x8xf32>
    %cst_21 = arith.constant dense<0.000000e+00> : vector<16xf32>
    %23 = vector.multi_reduction <add>, %20, %cst_21 [1] : vector<16x8xf32> to vector<16xf32>
    %24 = vector.shape_cast %23 : vector<16xf32> to vector<16x1xf32>
    %cst_22 = arith.constant 8.000000e+00 : f32
    %25 = vector.broadcast %cst_22 : f32 to vector<16x1xf32>
    %26 = arith.divf %24, %25 : vector<16x1xf32>
    %27 = vector.broadcast %26 : vector<16x1xf32> to vector<16x8xf32>
    %28 = arith.subf %20, %27 : vector<16x8xf32>
    %29 = arith.mulf %28, %28 : vector<16x8xf32>
    %cst_23 = arith.constant dense<0.000000e+00> : vector<16xf32>
    %30 = vector.multi_reduction <add>, %29, %cst_23 [1] : vector<16x8xf32> to vector<16xf32>
    %31 = vector.shape_cast %30 : vector<16xf32> to vector<16x1xf32>
    %cst_24 = arith.constant 8.000000e+00 : f32
    %32 = vector.broadcast %cst_24 : f32 to vector<16x1xf32>
    %33 = arith.divf %31, %32 : vector<16x1xf32>
    %34 = vector.broadcast %26 : vector<16x1xf32> to vector<16x8xf32>
    %35 = arith.subf %20, %34 : vector<16x8xf32>
    %cst_25 = arith.constant 9.99999974E-6 : f32
    %36 = vector.broadcast %cst_25 : f32 to vector<16x1xf32>
    %37 = arith.addf %33, %36 : vector<16x1xf32>
    %38 = math.rsqrt %37 : vector<16x1xf32>
    %39 = vector.broadcast %38 : vector<16x1xf32> to vector<16x8xf32>
    %40 = arith.mulf %35, %39 : vector<16x8xf32>
    %41 = vector.broadcast %21 : vector<1x8xf32> to vector<16x8xf32>
    %42 = arith.mulf %40, %41 : vector<16x8xf32>
    %43 = vector.broadcast %22 : vector<1x8xf32> to vector<16x8xf32>
    %44 = arith.addf %42, %43 : vector<16x8xf32>
    %c0_26 = arith.constant 0 : index
    %c0_27 = arith.constant 0 : index
    %45 = vector.load %arg18[%c0_26, %c0_27] : memref<8x8xf32, #tpu.memory_space<vmem>>, vector<8x8xf32>
    %cst_28 = arith.constant dense<0.000000e+00> : vector<16x8xf32>
    %46 = tpu.matmul %44, %45, %cst_28 {dimension_numbers = #tpu.dot_dimension_numbers<[1], [0], [0], [1], [0, 0, 1, 1], [], []>} : vector<16x8xf32>, vector<8x8xf32>, vector<16x8xf32> -> vector<16x8xf32>
    %c0_29 = arith.constant 0 : index
    %c0_30 = arith.constant 0 : index
    %47 = vector.load %arg19[%c0_29, %c0_30] : memref<8x8xf32, #tpu.memory_space<vmem>>, vector<8x8xf32>
    %cst_31 = arith.constant dense<0.000000e+00> : vector<16x8xf32>
    %48 = tpu.matmul %44, %47, %cst_31 {dimension_numbers = #tpu.dot_dimension_numbers<[1], [0], [0], [1], [0, 0, 1, 1], [], []>} : vector<16x8xf32>, vector<8x8xf32>, vector<16x8xf32> -> vector<16x8xf32>
    %c0_32 = arith.constant 0 : index
    %c0_33 = arith.constant 0 : index
    %49 = vector.load %arg20[%c0_32, %c0_33] : memref<8x8xf32, #tpu.memory_space<vmem>>, vector<8x8xf32>
    %cst_34 = arith.constant dense<0.000000e+00> : vector<16x8xf32>
    %50 = tpu.matmul %44, %49, %cst_34 {dimension_numbers = #tpu.dot_dimension_numbers<[1], [0], [0], [1], [0, 0, 1, 1], [], []>} : vector<16x8xf32>, vector<8x8xf32>, vector<16x8xf32> -> vector<16x8xf32>
    %51 = tpu.iota {dimensions = array<i32: 0>} : vector<8x8xi32>
    %52 = tpu.iota {dimensions = array<i32: 1>} : vector<8x8xi32>
    %53 = arith.cmpi eq, %51, %52 : vector<8x8xi32>
    %54 = vector.extract_strided_slice %46 {offsets = [0, 0], sizes = [8, 4], strides = [1, 1]} : vector<16x8xf32> to vector<8x4xf32>
    %cst_35 = arith.constant 5.000000e-01 : f32
    %55 = vector.broadcast %cst_35 : f32 to vector<8x4xf32>
    %56 = arith.mulf %54, %55 : vector<8x4xf32>
    %57 = vector.extract_strided_slice %48 {offsets = [0, 0], sizes = [8, 4], strides = [1, 1]} : vector<16x8xf32> to vector<8x4xf32>
    %58 = vector.extract_strided_slice %50 {offsets = [0, 0], sizes = [8, 4], strides = [1, 1]} : vector<16x8xf32> to vector<8x4xf32>
    %cst_36 = arith.constant dense<0.000000e+00> : vector<8x8xf32>
    %59 = tpu.matmul %56, %57, %cst_36 {dimension_numbers = #tpu.dot_dimension_numbers<[1], [1], [0], [0], [0, 0, 1, 0], [], []>} : vector<8x4xf32>, vector<8x4xf32>, vector<8x8xf32> -> vector<8x8xf32>
    %cst_37 = arith.constant -1.000000e+09 : f32
    %60 = vector.broadcast %cst_37 : f32 to vector<8x8xf32>
    %61 = arith.select %53, %60, %59 : vector<8x8xi1>, vector<8x8xf32>
    %cst_38 = arith.constant dense<0xFF800000> : vector<8xf32>
    %62 = vector.multi_reduction <maximumf>, %61, %cst_38 [1] : vector<8x8xf32> to vector<8xf32>
    %63 = vector.shape_cast %62 : vector<8xf32> to vector<8x1xf32>
    %64 = vector.broadcast %63 : vector<8x1xf32> to vector<8x8xf32>
    %65 = arith.subf %61, %64 : vector<8x8xf32>
    %66 = math.exp %65 : vector<8x8xf32>
    %cst_39 = arith.constant dense<0.000000e+00> : vector<8xf32>
    %67 = vector.multi_reduction <add>, %66, %cst_39 [1] : vector<8x8xf32> to vector<8xf32>
    %68 = vector.shape_cast %67 : vector<8xf32> to vector<8x1xf32>
    %69 = tpu.reciprocal %68 : vector<8x1xf32> -> vector<8x1xf32>
    %70 = vector.broadcast %69 : vector<8x1xf32> to vector<8x8xf32>
    %71 = arith.mulf %66, %70 : vector<8x8xf32>
    %c0_40 = arith.constant 0 : index
    %c0_41 = arith.constant 0 : index
    %c0_42 = arith.constant 0 : index
    %c0_43 = arith.constant 0 : index
    %72 = vector.load %arg42[%c0_40, %c0_41, %c0_42, %c0_43] : memref<2x2x8x8xf32, #tpu.memory_space<vmem>>, vector<1x1x8x8xf32>
    %73 = vector.shape_cast %72 : vector<1x1x8x8xf32> to vector<8x8xf32>
    %74 = vector.shape_cast %71 : vector<8x8xf32> to vector<1x1x8x8xf32>
    tpu.vector_store %arg42[%c0_40, %c0_41, %c0_42, %c0_43], %74 {strides = array<i32>} : memref<2x2x8x8xf32, #tpu.memory_space<vmem>>, vector<1x1x8x8xf32>,
    %cst_44 = arith.constant dense<0.000000e+00> : vector<8x4xf32>
    %75 = tpu.matmul %71, %58, %cst_44 {dimension_numbers = #tpu.dot_dimension_numbers<[1], [0], [0], [1], [0, 0, 1, 1], [], []>} : vector<8x8xf32>, vector<8x4xf32>, vector<8x4xf32> -> vector<8x4xf32>
    %c0_45 = arith.constant 0 : index
    %c0_46 = arith.constant 0 : index
    %76 = vector.load %arg43[%c0_45, %c0_46] : memref<16x8xf32, #tpu.memory_space<vmem>>, vector<8x4xf32>
    tpu.vector_store %arg43[%c0_45, %c0_46], %75 {strides = array<i32>} : memref<16x8xf32, #tpu.memory_space<vmem>>, vector<8x4xf32>,
    %77 = vector.extract_strided_slice %46 {offsets = [0, 4], sizes = [8, 4], strides = [1, 1]} : vector<16x8xf32> to vector<8x4xf32>
    %cst_47 = arith.constant 5.000000e-01 : f32
    %78 = vector.broadcast %cst_47 : f32 to vector<8x4xf32>
    %79 = arith.mulf %77, %78 : vector<8x4xf32>
    %80 = vector.extract_strided_slice %48 {offsets = [0, 4], sizes = [8, 4], strides = [1, 1]} : vector<16x8xf32> to vector<8x4xf32>
    %81 = vector.extract_strided_slice %50 {offsets = [0, 4], sizes = [8, 4], strides = [1, 1]} : vector<16x8xf32> to vector<8x4xf32>
    %cst_48 = arith.constant dense<0.000000e+00> : vector<8x8xf32>
    %82 = tpu.matmul %79, %80, %cst_48 {dimension_numbers = #tpu.dot_dimension_numbers<[1], [1], [0], [0], [0, 0, 1, 0], [], []>} : vector<8x4xf32>, vector<8x4xf32>, vector<8x8xf32> -> vector<8x8xf32>
    %cst_49 = arith.constant -1.000000e+09 : f32
    %83 = vector.broadcast %cst_49 : f32 to vector<8x8xf32>
    %84 = arith.select %53, %83, %82 : vector<8x8xi1>, vector<8x8xf32>
    %cst_50 = arith.constant dense<0xFF800000> : vector<8xf32>
    %85 = vector.multi_reduction <maximumf>, %84, %cst_50 [1] : vector<8x8xf32> to vector<8xf32>
    %86 = vector.shape_cast %85 : vector<8xf32> to vector<8x1xf32>
    %87 = vector.broadcast %86 : vector<8x1xf32> to vector<8x8xf32>
    %88 = arith.subf %84, %87 : vector<8x8xf32>
    %89 = math.exp %88 : vector<8x8xf32>
    %cst_51 = arith.constant dense<0.000000e+00> : vector<8xf32>
    %90 = vector.multi_reduction <add>, %89, %cst_51 [1] : vector<8x8xf32> to vector<8xf32>
    %91 = vector.shape_cast %90 : vector<8xf32> to vector<8x1xf32>
    %92 = tpu.reciprocal %91 : vector<8x1xf32> -> vector<8x1xf32>
    %93 = vector.broadcast %92 : vector<8x1xf32> to vector<8x8xf32>
    %94 = arith.mulf %89, %93 : vector<8x8xf32>
    %c0_52 = arith.constant 0 : index
    %c1 = arith.constant 1 : index
    %c0_53 = arith.constant 0 : index
    %c0_54 = arith.constant 0 : index
    %95 = vector.load %arg42[%c0_52, %c1, %c0_53, %c0_54] : memref<2x2x8x8xf32, #tpu.memory_space<vmem>>, vector<1x1x8x8xf32>
    %96 = vector.shape_cast %95 : vector<1x1x8x8xf32> to vector<8x8xf32>
    %97 = vector.shape_cast %94 : vector<8x8xf32> to vector<1x1x8x8xf32>
    tpu.vector_store %arg42[%c0_52, %c1, %c0_53, %c0_54], %97 {strides = array<i32>} : memref<2x2x8x8xf32, #tpu.memory_space<vmem>>, vector<1x1x8x8xf32>,
    %cst_55 = arith.constant dense<0.000000e+00> : vector<8x4xf32>
    %98 = tpu.matmul %94, %81, %cst_55 {dimension_numbers = #tpu.dot_dimension_numbers<[1], [0], [0], [1], [0, 0, 1, 1], [], []>} : vector<8x8xf32>, vector<8x4xf32>, vector<8x4xf32> -> vector<8x4xf32>
    %c0_56 = arith.constant 0 : index
    %c4 = arith.constant 4 : index
    %99 = vector.load %arg43[%c0_56, %c4] : memref<16x8xf32, #tpu.memory_space<vmem>>, vector<8x4xf32>
    tpu.vector_store %arg43[%c0_56, %c4], %98 {strides = array<i32>} : memref<16x8xf32, #tpu.memory_space<vmem>>, vector<8x4xf32>,
    %100 = vector.extract_strided_slice %46 {offsets = [8, 0], sizes = [8, 4], strides = [1, 1]} : vector<16x8xf32> to vector<8x4xf32>
    %cst_57 = arith.constant 5.000000e-01 : f32
    %101 = vector.broadcast %cst_57 : f32 to vector<8x4xf32>
    %102 = arith.mulf %100, %101 : vector<8x4xf32>
    %103 = vector.extract_strided_slice %48 {offsets = [8, 0], sizes = [8, 4], strides = [1, 1]} : vector<16x8xf32> to vector<8x4xf32>
    %104 = vector.extract_strided_slice %50 {offsets = [8, 0], sizes = [8, 4], strides = [1, 1]} : vector<16x8xf32> to vector<8x4xf32>
    %cst_58 = arith.constant dense<0.000000e+00> : vector<8x8xf32>
    %105 = tpu.matmul %102, %103, %cst_58 {dimension_numbers = #tpu.dot_dimension_numbers<[1], [1], [0], [0], [0, 0, 1, 0], [], []>} : vector<8x4xf32>, vector<8x4xf32>, vector<8x8xf32> -> vector<8x8xf32>
    %cst_59 = arith.constant -1.000000e+09 : f32
    %106 = vector.broadcast %cst_59 : f32 to vector<8x8xf32>
    %107 = arith.select %53, %106, %105 : vector<8x8xi1>, vector<8x8xf32>
    %cst_60 = arith.constant dense<0xFF800000> : vector<8xf32>
    %108 = vector.multi_reduction <maximumf>, %107, %cst_60 [1] : vector<8x8xf32> to vector<8xf32>
    %109 = vector.shape_cast %108 : vector<8xf32> to vector<8x1xf32>
    %110 = vector.broadcast %109 : vector<8x1xf32> to vector<8x8xf32>
    %111 = arith.subf %107, %110 : vector<8x8xf32>
    %112 = math.exp %111 : vector<8x8xf32>
    %cst_61 = arith.constant dense<0.000000e+00> : vector<8xf32>
    %113 = vector.multi_reduction <add>, %112, %cst_61 [1] : vector<8x8xf32> to vector<8xf32>
    %114 = vector.shape_cast %113 : vector<8xf32> to vector<8x1xf32>
    %115 = tpu.reciprocal %114 : vector<8x1xf32> -> vector<8x1xf32>
    %116 = vector.broadcast %115 : vector<8x1xf32> to vector<8x8xf32>
    %117 = arith.mulf %112, %116 : vector<8x8xf32>
    %c1_62 = arith.constant 1 : index
    %c0_63 = arith.constant 0 : index
    %c0_64 = arith.constant 0 : index
    %c0_65 = arith.constant 0 : index
    %118 = vector.load %arg42[%c1_62, %c0_63, %c0_64, %c0_65] : memref<2x2x8x8xf32, #tpu.memory_space<vmem>>, vector<1x1x8x8xf32>
    %119 = vector.shape_cast %118 : vector<1x1x8x8xf32> to vector<8x8xf32>
    %120 = vector.shape_cast %117 : vector<8x8xf32> to vector<1x1x8x8xf32>
    tpu.vector_store %arg42[%c1_62, %c0_63, %c0_64, %c0_65], %120 {strides = array<i32>} : memref<2x2x8x8xf32, #tpu.memory_space<vmem>>, vector<1x1x8x8xf32>,
    %cst_66 = arith.constant dense<0.000000e+00> : vector<8x4xf32>
    %121 = tpu.matmul %117, %104, %cst_66 {dimension_numbers = #tpu.dot_dimension_numbers<[1], [0], [0], [1], [0, 0, 1, 1], [], []>} : vector<8x8xf32>, vector<8x4xf32>, vector<8x4xf32> -> vector<8x4xf32>
    %c8 = arith.constant 8 : index
    %c0_67 = arith.constant 0 : index
    %122 = vector.load %arg43[%c8, %c0_67] : memref<16x8xf32, #tpu.memory_space<vmem>>, vector<8x4xf32>
    tpu.vector_store %arg43[%c8, %c0_67], %121 {strides = array<i32>} : memref<16x8xf32, #tpu.memory_space<vmem>>, vector<8x4xf32>,
    %123 = vector.extract_strided_slice %46 {offsets = [8, 4], sizes = [8, 4], strides = [1, 1]} : vector<16x8xf32> to vector<8x4xf32>
    %cst_68 = arith.constant 5.000000e-01 : f32
    %124 = vector.broadcast %cst_68 : f32 to vector<8x4xf32>
    %125 = arith.mulf %123, %124 : vector<8x4xf32>
    %126 = vector.extract_strided_slice %48 {offsets = [8, 4], sizes = [8, 4], strides = [1, 1]} : vector<16x8xf32> to vector<8x4xf32>
    %127 = vector.extract_strided_slice %50 {offsets = [8, 4], sizes = [8, 4], strides = [1, 1]} : vector<16x8xf32> to vector<8x4xf32>
    %cst_69 = arith.constant dense<0.000000e+00> : vector<8x8xf32>
    %128 = tpu.matmul %125, %126, %cst_69 {dimension_numbers = #tpu.dot_dimension_numbers<[1], [1], [0], [0], [0, 0, 1, 0], [], []>} : vector<8x4xf32>, vector<8x4xf32>, vector<8x8xf32> -> vector<8x8xf32>
    %cst_70 = arith.constant -1.000000e+09 : f32
    %129 = vector.broadcast %cst_70 : f32 to vector<8x8xf32>
    %130 = arith.select %53, %129, %128 : vector<8x8xi1>, vector<8x8xf32>
    %cst_71 = arith.constant dense<0xFF800000> : vector<8xf32>
    %131 = vector.multi_reduction <maximumf>, %130, %cst_71 [1] : vector<8x8xf32> to vector<8xf32>
    %132 = vector.shape_cast %131 : vector<8xf32> to vector<8x1xf32>
    %133 = vector.broadcast %132 : vector<8x1xf32> to vector<8x8xf32>
    %134 = arith.subf %130, %133 : vector<8x8xf32>
    %135 = math.exp %134 : vector<8x8xf32>
    %cst_72 = arith.constant dense<0.000000e+00> : vector<8xf32>
    %136 = vector.multi_reduction <add>, %135, %cst_72 [1] : vector<8x8xf32> to vector<8xf32>
    %137 = vector.shape_cast %136 : vector<8xf32> to vector<8x1xf32>
    %138 = tpu.reciprocal %137 : vector<8x1xf32> -> vector<8x1xf32>
    %139 = vector.broadcast %138 : vector<8x1xf32> to vector<8x8xf32>
    %140 = arith.mulf %135, %139 : vector<8x8xf32>
    %c1_73 = arith.constant 1 : index
    %c1_74 = arith.constant 1 : index
    %c0_75 = arith.constant 0 : index
    %c0_76 = arith.constant 0 : index
    %141 = vector.load %arg42[%c1_73, %c1_74, %c0_75, %c0_76] : memref<2x2x8x8xf32, #tpu.memory_space<vmem>>, vector<1x1x8x8xf32>
    %142 = vector.shape_cast %141 : vector<1x1x8x8xf32> to vector<8x8xf32>
    %143 = vector.shape_cast %140 : vector<8x8xf32> to vector<1x1x8x8xf32>
    tpu.vector_store %arg42[%c1_73, %c1_74, %c0_75, %c0_76], %143 {strides = array<i32>} : memref<2x2x8x8xf32, #tpu.memory_space<vmem>>, vector<1x1x8x8xf32>,
    %cst_77 = arith.constant dense<0.000000e+00> : vector<8x4xf32>
    %144 = tpu.matmul %140, %127, %cst_77 {dimension_numbers = #tpu.dot_dimension_numbers<[1], [0], [0], [1], [0, 0, 1, 1], [], []>} : vector<8x8xf32>, vector<8x4xf32>, vector<8x4xf32> -> vector<8x4xf32>
    %c8_78 = arith.constant 8 : index
    %c4_79 = arith.constant 4 : index
    %145 = vector.load %arg43[%c8_78, %c4_79] : memref<16x8xf32, #tpu.memory_space<vmem>>, vector<8x4xf32>
    tpu.vector_store %arg43[%c8_78, %c4_79], %144 {strides = array<i32>} : memref<16x8xf32, #tpu.memory_space<vmem>>, vector<8x4xf32>,
    %c0_80 = arith.constant 0 : index
    %c0_81 = arith.constant 0 : index
    %146 = vector.load %arg43[%c0_80, %c0_81] : memref<16x8xf32, #tpu.memory_space<vmem>>, vector<16x8xf32>
    %c0_82 = arith.constant 0 : index
    %c0_83 = arith.constant 0 : index
    %147 = vector.load %arg21[%c0_82, %c0_83] : memref<8x8xf32, #tpu.memory_space<vmem>>, vector<8x8xf32>
    %cst_84 = arith.constant dense<0.000000e+00> : vector<16x8xf32>
    %148 = tpu.matmul %146, %147, %cst_84 {dimension_numbers = #tpu.dot_dimension_numbers<[1], [0], [0], [1], [0, 0, 1, 1], [], []>} : vector<16x8xf32>, vector<8x8xf32>, vector<16x8xf32> -> vector<16x8xf32>
    %149 = arith.addf %148, %20 : vector<16x8xf32>
    %c0_85 = arith.constant 0 : index
    %c0_86 = arith.constant 0 : index
    %150 = vector.load %arg22[%c0_85, %c0_86] : memref<1x8xf32, #tpu.memory_space<vmem>>, vector<1x8xf32>
    %c0_87 = arith.constant 0 : index
    %c0_88 = arith.constant 0 : index
    %151 = vector.load %arg23[%c0_87, %c0_88] : memref<1x8xf32, #tpu.memory_space<vmem>>, vector<1x8xf32>
    %cst_89 = arith.constant dense<0.000000e+00> : vector<16xf32>
    %152 = vector.multi_reduction <add>, %149, %cst_89 [1] : vector<16x8xf32> to vector<16xf32>
    %153 = vector.shape_cast %152 : vector<16xf32> to vector<16x1xf32>
    %cst_90 = arith.constant 8.000000e+00 : f32
    %154 = vector.broadcast %cst_90 : f32 to vector<16x1xf32>
    %155 = arith.divf %153, %154 : vector<16x1xf32>
    %156 = vector.broadcast %155 : vector<16x1xf32> to vector<16x8xf32>
    %157 = arith.subf %149, %156 : vector<16x8xf32>
    %158 = arith.mulf %157, %157 : vector<16x8xf32>
    %cst_91 = arith.constant dense<0.000000e+00> : vector<16xf32>
    %159 = vector.multi_reduction <add>, %158, %cst_91 [1] : vector<16x8xf32> to vector<16xf32>
    %160 = vector.shape_cast %159 : vector<16xf32> to vector<16x1xf32>
    %cst_92 = arith.constant 8.000000e+00 : f32
    %161 = vector.broadcast %cst_92 : f32 to vector<16x1xf32>
    %162 = arith.divf %160, %161 : vector<16x1xf32>
    %163 = vector.broadcast %155 : vector<16x1xf32> to vector<16x8xf32>
    %164 = arith.subf %149, %163 : vector<16x8xf32>
    %cst_93 = arith.constant 9.99999997E-7 : f32
    %165 = vector.broadcast %cst_93 : f32 to vector<16x1xf32>
    %166 = arith.addf %162, %165 : vector<16x1xf32>
    %167 = math.rsqrt %166 : vector<16x1xf32>
    %168 = vector.broadcast %167 : vector<16x1xf32> to vector<16x8xf32>
    %169 = arith.mulf %164, %168 : vector<16x8xf32>
    %170 = vector.broadcast %150 : vector<1x8xf32> to vector<16x8xf32>
    %171 = arith.mulf %169, %170 : vector<16x8xf32>
    %172 = vector.broadcast %151 : vector<1x8xf32> to vector<16x8xf32>
    %173 = arith.addf %171, %172 : vector<16x8xf32>
    %c0_94 = arith.constant 0 : index
    %c0_95 = arith.constant 0 : index
    %174 = vector.load %arg24[%c0_94, %c0_95] : memref<8x16xf32, #tpu.memory_space<vmem>>, vector<8x16xf32>
    %cst_96 = arith.constant dense<0.000000e+00> : vector<16x16xf32>
    %175 = tpu.matmul %173, %174, %cst_96 {dimension_numbers = #tpu.dot_dimension_numbers<[1], [0], [0], [1], [0, 0, 1, 1], [], []>} : vector<16x8xf32>, vector<8x16xf32>, vector<16x16xf32> -> vector<16x16xf32>
    %c0_97 = arith.constant 0 : index
    %c0_98 = arith.constant 0 : index
    %176 = vector.load %arg25[%c0_97, %c0_98] : memref<1x16xf32, #tpu.memory_space<vmem>>, vector<1x16xf32>
    %177 = vector.broadcast %176 : vector<1x16xf32> to vector<16x16xf32>
    %178 = arith.addf %175, %177 : vector<16x16xf32>
    %cst_99 = arith.constant 0.000000e+00 : f32
    %179 = vector.broadcast %cst_99 : f32 to vector<16x16xf32>
    %180 = arith.maximumf %178, %179 : vector<16x16xf32>
    %c0_100 = arith.constant 0 : index
    %c0_101 = arith.constant 0 : index
    %181 = vector.load %arg26[%c0_100, %c0_101] : memref<16x8xf32, #tpu.memory_space<vmem>>, vector<16x8xf32>
    %cst_102 = arith.constant dense<0.000000e+00> : vector<16x8xf32>
    %182 = tpu.matmul %180, %181, %cst_102 {dimension_numbers = #tpu.dot_dimension_numbers<[1], [0], [0], [1], [0, 0, 1, 1], [], []>} : vector<16x16xf32>, vector<16x8xf32>, vector<16x8xf32> -> vector<16x8xf32>
    %c0_103 = arith.constant 0 : index
    %c0_104 = arith.constant 0 : index
    %183 = vector.load %arg27[%c0_103, %c0_104] : memref<1x8xf32, #tpu.memory_space<vmem>>, vector<1x8xf32>
    %184 = vector.broadcast %183 : vector<1x8xf32> to vector<16x8xf32>
    %185 = arith.addf %182, %184 : vector<16x8xf32>
    %186 = arith.addf %185, %149 : vector<16x8xf32>
    %c0_105 = arith.constant 0 : index
    %c0_106 = arith.constant 0 : index
    %187 = vector.load %arg8[%c0_105, %c0_106] : memref<4x8xf32, #tpu.memory_space<vmem>>, vector<4x8xf32>
    %cst_107 = arith.constant dense<0.000000e+00> : vector<16x8xf32>
    %188 = tpu.matmul %3, %187, %cst_107 {dimension_numbers = #tpu.dot_dimension_numbers<[1], [0], [0], [1], [0, 0, 1, 1], [], []>} : vector<16x4xf32>, vector<4x8xf32>, vector<16x8xf32> -> vector<16x8xf32>
    %c0_108 = arith.constant 0 : index
    %c0_109 = arith.constant 0 : index
    %189 = vector.load %arg9[%c0_108, %c0_109] : memref<1x8xf32, #tpu.memory_space<vmem>>, vector<1x8xf32>
    %190 = vector.broadcast %189 : vector<1x8xf32> to vector<16x8xf32>
    %191 = arith.addf %188, %190 : vector<16x8xf32>
    %c0_110 = arith.constant 0 : index
    %c0_111 = arith.constant 0 : index
    %192 = vector.load %arg10[%c0_110, %c0_111] : memref<8x16xf32, #tpu.memory_space<vmem>>, vector<8x16xf32>
    %cst_112 = arith.constant dense<0.000000e+00> : vector<16x16xf32>
    %193 = tpu.matmul %186, %192, %cst_112 {dimension_numbers = #tpu.dot_dimension_numbers<[1], [0], [0], [1], [0, 0, 1, 1], [], []>} : vector<16x8xf32>, vector<8x16xf32>, vector<16x16xf32> -> vector<16x16xf32>
    %c0_113 = arith.constant 0 : index
    %c0_114 = arith.constant 0 : index
    %194 = vector.load %arg11[%c0_113, %c0_114] : memref<1x16xf32, #tpu.memory_space<vmem>>, vector<1x16xf32>
    %195 = vector.broadcast %194 : vector<1x16xf32> to vector<16x16xf32>
    %196 = arith.addf %193, %195 : vector<16x16xf32>
    %c0_115 = arith.constant 0 : index
    %c0_116 = arith.constant 0 : index
    %197 = vector.load %arg12[%c0_115, %c0_116] : memref<8x16xf32, #tpu.memory_space<vmem>>, vector<8x16xf32>
    %cst_117 = arith.constant dense<0.000000e+00> : vector<16x16xf32>
    %198 = tpu.matmul %191, %197, %cst_117 {dimension_numbers = #tpu.dot_dimension_numbers<[1], [0], [0], [1], [0, 0, 1, 1], [], []>} : vector<16x8xf32>, vector<8x16xf32>, vector<16x16xf32> -> vector<16x16xf32>
    %199 = arith.addf %196, %198 : vector<16x16xf32>
    %c0_118 = arith.constant 0 : index
    %c0_119 = arith.constant 0 : index
    %200 = vector.load %arg13[%c0_118, %c0_119] : memref<1x16xf32, #tpu.memory_space<vmem>>, vector<1x16xf32>
    %201 = vector.broadcast %200 : vector<1x16xf32> to vector<16x16xf32>
    %202 = arith.addf %199, %201 : vector<16x16xf32>
    %c0_120 = arith.constant 0 : index
    %c0_121 = arith.constant 0 : index
    %203 = vector.load %arg28[%c0_120, %c0_121] : memref<1x16xf32, #tpu.memory_space<vmem>>, vector<1x16xf32>
    %c0_122 = arith.constant 0 : index
    %c0_123 = arith.constant 0 : index
    %204 = vector.load %arg29[%c0_122, %c0_123] : memref<1x16xf32, #tpu.memory_space<vmem>>, vector<1x16xf32>
    %cst_124 = arith.constant dense<0.000000e+00> : vector<16xf32>
    %205 = vector.multi_reduction <add>, %202, %cst_124 [1] : vector<16x16xf32> to vector<16xf32>
    %206 = vector.shape_cast %205 : vector<16xf32> to vector<16x1xf32>
    %cst_125 = arith.constant 1.600000e+01 : f32
    %207 = vector.broadcast %cst_125 : f32 to vector<16x1xf32>
    %208 = arith.divf %206, %207 : vector<16x1xf32>
    %209 = vector.broadcast %208 : vector<16x1xf32> to vector<16x16xf32>
    %210 = arith.subf %202, %209 : vector<16x16xf32>
    %211 = arith.mulf %210, %210 : vector<16x16xf32>
    %cst_126 = arith.constant dense<0.000000e+00> : vector<16xf32>
    %212 = vector.multi_reduction <add>, %211, %cst_126 [1] : vector<16x16xf32> to vector<16xf32>
    %213 = vector.shape_cast %212 : vector<16xf32> to vector<16x1xf32>
    %cst_127 = arith.constant 1.600000e+01 : f32
    %214 = vector.broadcast %cst_127 : f32 to vector<16x1xf32>
    %215 = arith.divf %213, %214 : vector<16x1xf32>
    %216 = vector.broadcast %208 : vector<16x1xf32> to vector<16x16xf32>
    %217 = arith.subf %202, %216 : vector<16x16xf32>
    %cst_128 = arith.constant 9.99999974E-6 : f32
    %218 = vector.broadcast %cst_128 : f32 to vector<16x1xf32>
    %219 = arith.addf %215, %218 : vector<16x1xf32>
    %220 = math.rsqrt %219 : vector<16x1xf32>
    %221 = vector.broadcast %220 : vector<16x1xf32> to vector<16x16xf32>
    %222 = arith.mulf %217, %221 : vector<16x16xf32>
    %223 = vector.broadcast %203 : vector<1x16xf32> to vector<16x16xf32>
    %224 = arith.mulf %222, %223 : vector<16x16xf32>
    %225 = vector.broadcast %204 : vector<1x16xf32> to vector<16x16xf32>
    %226 = arith.addf %224, %225 : vector<16x16xf32>
    %c0_129 = arith.constant 0 : index
    %c0_130 = arith.constant 0 : index
    %227 = vector.load %arg30[%c0_129, %c0_130] : memref<16x8xf32, #tpu.memory_space<vmem>>, vector<16x8xf32>
    %cst_131 = arith.constant dense<0.000000e+00> : vector<16x8xf32>
    %228 = tpu.matmul %226, %227, %cst_131 {dimension_numbers = #tpu.dot_dimension_numbers<[1], [0], [0], [1], [0, 0, 1, 1], [], []>} : vector<16x16xf32>, vector<16x8xf32>, vector<16x8xf32> -> vector<16x8xf32>
    %c0_132 = arith.constant 0 : index
    %c0_133 = arith.constant 0 : index
    %229 = vector.load %arg31[%c0_132, %c0_133] : memref<16x8xf32, #tpu.memory_space<vmem>>, vector<16x8xf32>
    %cst_134 = arith.constant dense<0.000000e+00> : vector<16x8xf32>
    %230 = tpu.matmul %226, %229, %cst_134 {dimension_numbers = #tpu.dot_dimension_numbers<[1], [0], [0], [1], [0, 0, 1, 1], [], []>} : vector<16x16xf32>, vector<16x8xf32>, vector<16x8xf32> -> vector<16x8xf32>
    %c0_135 = arith.constant 0 : index
    %c0_136 = arith.constant 0 : index
    %231 = vector.load %arg32[%c0_135, %c0_136] : memref<16x8xf32, #tpu.memory_space<vmem>>, vector<16x8xf32>
    %cst_137 = arith.constant dense<0.000000e+00> : vector<16x8xf32>
    %232 = tpu.matmul %226, %231, %cst_137 {dimension_numbers = #tpu.dot_dimension_numbers<[1], [0], [0], [1], [0, 0, 1, 1], [], []>} : vector<16x16xf32>, vector<16x8xf32>, vector<16x8xf32> -> vector<16x8xf32>
    %233 = tpu.iota {dimensions = array<i32: 0>} : vector<8x8xi32>
    %234 = tpu.iota {dimensions = array<i32: 1>} : vector<8x8xi32>
    %235 = arith.cmpi eq, %233, %234 : vector<8x8xi32>
    %236 = vector.extract_strided_slice %228 {offsets = [0, 0], sizes = [8, 4], strides = [1, 1]} : vector<16x8xf32> to vector<8x4xf32>
    %cst_138 = arith.constant 5.000000e-01 : f32
    %237 = vector.broadcast %cst_138 : f32 to vector<8x4xf32>
    %238 = arith.mulf %236, %237 : vector<8x4xf32>
    %239 = vector.extract_strided_slice %230 {offsets = [0, 0], sizes = [8, 4], strides = [1, 1]} : vector<16x8xf32> to vector<8x4xf32>
    %240 = vector.extract_strided_slice %232 {offsets = [0, 0], sizes = [8, 4], strides = [1, 1]} : vector<16x8xf32> to vector<8x4xf32>
    %cst_139 = arith.constant dense<0.000000e+00> : vector<8x8xf32>
    %241 = tpu.matmul %238, %239, %cst_139 {dimension_numbers = #tpu.dot_dimension_numbers<[1], [1], [0], [0], [0, 0, 1, 0], [], []>} : vector<8x4xf32>, vector<8x4xf32>, vector<8x8xf32> -> vector<8x8xf32>
    %cst_140 = arith.constant -1.000000e+09 : f32
    %242 = vector.broadcast %cst_140 : f32 to vector<8x8xf32>
    %243 = arith.select %235, %242, %241 : vector<8x8xi1>, vector<8x8xf32>
    %cst_141 = arith.constant dense<0xFF800000> : vector<8xf32>
    %244 = vector.multi_reduction <maximumf>, %243, %cst_141 [1] : vector<8x8xf32> to vector<8xf32>
    %245 = vector.shape_cast %244 : vector<8xf32> to vector<8x1xf32>
    %246 = vector.broadcast %245 : vector<8x1xf32> to vector<8x8xf32>
    %247 = arith.subf %243, %246 : vector<8x8xf32>
    %248 = math.exp %247 : vector<8x8xf32>
    %cst_142 = arith.constant dense<0.000000e+00> : vector<8xf32>
    %249 = vector.multi_reduction <add>, %248, %cst_142 [1] : vector<8x8xf32> to vector<8xf32>
    %250 = vector.shape_cast %249 : vector<8xf32> to vector<8x1xf32>
    %251 = tpu.reciprocal %250 : vector<8x1xf32> -> vector<8x1xf32>
    %252 = vector.broadcast %251 : vector<8x1xf32> to vector<8x8xf32>
    %253 = arith.mulf %248, %252 : vector<8x8xf32>
    %c0_143 = arith.constant 0 : index
    %c0_144 = arith.constant 0 : index
    %c0_145 = arith.constant 0 : index
    %c0_146 = arith.constant 0 : index
    %254 = vector.load %arg42[%c0_143, %c0_144, %c0_145, %c0_146] : memref<2x2x8x8xf32, #tpu.memory_space<vmem>>, vector<1x1x8x8xf32>
    %255 = vector.shape_cast %254 : vector<1x1x8x8xf32> to vector<8x8xf32>
    %256 = arith.addf %255, %253 : vector<8x8xf32>
    %cst_147 = arith.constant 5.000000e-01 : f32
    %257 = vector.broadcast %cst_147 : f32 to vector<8x8xf32>
    %258 = arith.mulf %256, %257 : vector<8x8xf32>
    %c0_148 = arith.constant 0 : index
    %c0_149 = arith.constant 0 : index
    %c0_150 = arith.constant 0 : index
    %c0_151 = arith.constant 0 : index
    %259 = vector.load %arg42[%c0_148, %c0_149, %c0_150, %c0_151] : memref<2x2x8x8xf32, #tpu.memory_space<vmem>>, vector<1x1x8x8xf32>
    %260 = vector.shape_cast %259 : vector<1x1x8x8xf32> to vector<8x8xf32>
    %261 = vector.shape_cast %258 : vector<8x8xf32> to vector<1x1x8x8xf32>
    tpu.vector_store %arg42[%c0_148, %c0_149, %c0_150, %c0_151], %261 {strides = array<i32>} : memref<2x2x8x8xf32, #tpu.memory_space<vmem>>, vector<1x1x8x8xf32>,
    %cst_152 = arith.constant dense<0.000000e+00> : vector<8x4xf32>
    %262 = tpu.matmul %253, %240, %cst_152 {dimension_numbers = #tpu.dot_dimension_numbers<[1], [0], [0], [1], [0, 0, 1, 1], [], []>} : vector<8x8xf32>, vector<8x4xf32>, vector<8x4xf32> -> vector<8x4xf32>
    %c0_153 = arith.constant 0 : index
    %c0_154 = arith.constant 0 : index
    %263 = vector.load %arg43[%c0_153, %c0_154] : memref<16x8xf32, #tpu.memory_space<vmem>>, vector<8x4xf32>
    tpu.vector_store %arg43[%c0_153, %c0_154], %262 {strides = array<i32>} : memref<16x8xf32, #tpu.memory_space<vmem>>, vector<8x4xf32>,
    %264 = vector.extract_strided_slice %228 {offsets = [0, 4], sizes = [8, 4], strides = [1, 1]} : vector<16x8xf32> to vector<8x4xf32>
    %cst_155 = arith.constant 5.000000e-01 : f32
    %265 = vector.broadcast %cst_155 : f32 to vector<8x4xf32>
    %266 = arith.mulf %264, %265 : vector<8x4xf32>
    %267 = vector.extract_strided_slice %230 {offsets = [0, 4], sizes = [8, 4], strides = [1, 1]} : vector<16x8xf32> to vector<8x4xf32>
    %268 = vector.extract_strided_slice %232 {offsets = [0, 4], sizes = [8, 4], strides = [1, 1]} : vector<16x8xf32> to vector<8x4xf32>
    %cst_156 = arith.constant dense<0.000000e+00> : vector<8x8xf32>
    %269 = tpu.matmul %266, %267, %cst_156 {dimension_numbers = #tpu.dot_dimension_numbers<[1], [1], [0], [0], [0, 0, 1, 0], [], []>} : vector<8x4xf32>, vector<8x4xf32>, vector<8x8xf32> -> vector<8x8xf32>
    %cst_157 = arith.constant -1.000000e+09 : f32
    %270 = vector.broadcast %cst_157 : f32 to vector<8x8xf32>
    %271 = arith.select %235, %270, %269 : vector<8x8xi1>, vector<8x8xf32>
    %cst_158 = arith.constant dense<0xFF800000> : vector<8xf32>
    %272 = vector.multi_reduction <maximumf>, %271, %cst_158 [1] : vector<8x8xf32> to vector<8xf32>
    %273 = vector.shape_cast %272 : vector<8xf32> to vector<8x1xf32>
    %274 = vector.broadcast %273 : vector<8x1xf32> to vector<8x8xf32>
    %275 = arith.subf %271, %274 : vector<8x8xf32>
    %276 = math.exp %275 : vector<8x8xf32>
    %cst_159 = arith.constant dense<0.000000e+00> : vector<8xf32>
    %277 = vector.multi_reduction <add>, %276, %cst_159 [1] : vector<8x8xf32> to vector<8xf32>
    %278 = vector.shape_cast %277 : vector<8xf32> to vector<8x1xf32>
    %279 = tpu.reciprocal %278 : vector<8x1xf32> -> vector<8x1xf32>
    %280 = vector.broadcast %279 : vector<8x1xf32> to vector<8x8xf32>
    %281 = arith.mulf %276, %280 : vector<8x8xf32>
    %c0_160 = arith.constant 0 : index
    %c1_161 = arith.constant 1 : index
    %c0_162 = arith.constant 0 : index
    %c0_163 = arith.constant 0 : index
    %282 = vector.load %arg42[%c0_160, %c1_161, %c0_162, %c0_163] : memref<2x2x8x8xf32, #tpu.memory_space<vmem>>, vector<1x1x8x8xf32>
    %283 = vector.shape_cast %282 : vector<1x1x8x8xf32> to vector<8x8xf32>
    %284 = arith.addf %283, %281 : vector<8x8xf32>
    %cst_164 = arith.constant 5.000000e-01 : f32
    %285 = vector.broadcast %cst_164 : f32 to vector<8x8xf32>
    %286 = arith.mulf %284, %285 : vector<8x8xf32>
    %c0_165 = arith.constant 0 : index
    %c1_166 = arith.constant 1 : index
    %c0_167 = arith.constant 0 : index
    %c0_168 = arith.constant 0 : index
    %287 = vector.load %arg42[%c0_165, %c1_166, %c0_167, %c0_168] : memref<2x2x8x8xf32, #tpu.memory_space<vmem>>, vector<1x1x8x8xf32>
    %288 = vector.shape_cast %287 : vector<1x1x8x8xf32> to vector<8x8xf32>
    %289 = vector.shape_cast %286 : vector<8x8xf32> to vector<1x1x8x8xf32>
    tpu.vector_store %arg42[%c0_165, %c1_166, %c0_167, %c0_168], %289 {strides = array<i32>} : memref<2x2x8x8xf32, #tpu.memory_space<vmem>>, vector<1x1x8x8xf32>,
    %cst_169 = arith.constant dense<0.000000e+00> : vector<8x4xf32>
    %290 = tpu.matmul %281, %268, %cst_169 {dimension_numbers = #tpu.dot_dimension_numbers<[1], [0], [0], [1], [0, 0, 1, 1], [], []>} : vector<8x8xf32>, vector<8x4xf32>, vector<8x4xf32> -> vector<8x4xf32>
    %c0_170 = arith.constant 0 : index
    %c4_171 = arith.constant 4 : index
    %291 = vector.load %arg43[%c0_170, %c4_171] : memref<16x8xf32, #tpu.memory_space<vmem>>, vector<8x4xf32>
    tpu.vector_store %arg43[%c0_170, %c4_171], %290 {strides = array<i32>} : memref<16x8xf32, #tpu.memory_space<vmem>>, vector<8x4xf32>,
    %292 = vector.extract_strided_slice %228 {offsets = [8, 0], sizes = [8, 4], strides = [1, 1]} : vector<16x8xf32> to vector<8x4xf32>
    %cst_172 = arith.constant 5.000000e-01 : f32
    %293 = vector.broadcast %cst_172 : f32 to vector<8x4xf32>
    %294 = arith.mulf %292, %293 : vector<8x4xf32>
    %295 = vector.extract_strided_slice %230 {offsets = [8, 0], sizes = [8, 4], strides = [1, 1]} : vector<16x8xf32> to vector<8x4xf32>
    %296 = vector.extract_strided_slice %232 {offsets = [8, 0], sizes = [8, 4], strides = [1, 1]} : vector<16x8xf32> to vector<8x4xf32>
    %cst_173 = arith.constant dense<0.000000e+00> : vector<8x8xf32>
    %297 = tpu.matmul %294, %295, %cst_173 {dimension_numbers = #tpu.dot_dimension_numbers<[1], [1], [0], [0], [0, 0, 1, 0], [], []>} : vector<8x4xf32>, vector<8x4xf32>, vector<8x8xf32> -> vector<8x8xf32>
    %cst_174 = arith.constant -1.000000e+09 : f32
    %298 = vector.broadcast %cst_174 : f32 to vector<8x8xf32>
    %299 = arith.select %235, %298, %297 : vector<8x8xi1>, vector<8x8xf32>
    %cst_175 = arith.constant dense<0xFF800000> : vector<8xf32>
    %300 = vector.multi_reduction <maximumf>, %299, %cst_175 [1] : vector<8x8xf32> to vector<8xf32>
    %301 = vector.shape_cast %300 : vector<8xf32> to vector<8x1xf32>
    %302 = vector.broadcast %301 : vector<8x1xf32> to vector<8x8xf32>
    %303 = arith.subf %299, %302 : vector<8x8xf32>
    %304 = math.exp %303 : vector<8x8xf32>
    %cst_176 = arith.constant dense<0.000000e+00> : vector<8xf32>
    %305 = vector.multi_reduction <add>, %304, %cst_176 [1] : vector<8x8xf32> to vector<8xf32>
    %306 = vector.shape_cast %305 : vector<8xf32> to vector<8x1xf32>
    %307 = tpu.reciprocal %306 : vector<8x1xf32> -> vector<8x1xf32>
    %308 = vector.broadcast %307 : vector<8x1xf32> to vector<8x8xf32>
    %309 = arith.mulf %304, %308 : vector<8x8xf32>
    %c1_177 = arith.constant 1 : index
    %c0_178 = arith.constant 0 : index
    %c0_179 = arith.constant 0 : index
    %c0_180 = arith.constant 0 : index
    %310 = vector.load %arg42[%c1_177, %c0_178, %c0_179, %c0_180] : memref<2x2x8x8xf32, #tpu.memory_space<vmem>>, vector<1x1x8x8xf32>
    %311 = vector.shape_cast %310 : vector<1x1x8x8xf32> to vector<8x8xf32>
    %312 = arith.addf %311, %309 : vector<8x8xf32>
    %cst_181 = arith.constant 5.000000e-01 : f32
    %313 = vector.broadcast %cst_181 : f32 to vector<8x8xf32>
    %314 = arith.mulf %312, %313 : vector<8x8xf32>
    %c1_182 = arith.constant 1 : index
    %c0_183 = arith.constant 0 : index
    %c0_184 = arith.constant 0 : index
    %c0_185 = arith.constant 0 : index
    %315 = vector.load %arg42[%c1_182, %c0_183, %c0_184, %c0_185] : memref<2x2x8x8xf32, #tpu.memory_space<vmem>>, vector<1x1x8x8xf32>
    %316 = vector.shape_cast %315 : vector<1x1x8x8xf32> to vector<8x8xf32>
    %317 = vector.shape_cast %314 : vector<8x8xf32> to vector<1x1x8x8xf32>
    tpu.vector_store %arg42[%c1_182, %c0_183, %c0_184, %c0_185], %317 {strides = array<i32>} : memref<2x2x8x8xf32, #tpu.memory_space<vmem>>, vector<1x1x8x8xf32>,
    %cst_186 = arith.constant dense<0.000000e+00> : vector<8x4xf32>
    %318 = tpu.matmul %309, %296, %cst_186 {dimension_numbers = #tpu.dot_dimension_numbers<[1], [0], [0], [1], [0, 0, 1, 1], [], []>} : vector<8x8xf32>, vector<8x4xf32>, vector<8x4xf32> -> vector<8x4xf32>
    %c8_187 = arith.constant 8 : index
    %c0_188 = arith.constant 0 : index
    %319 = vector.load %arg43[%c8_187, %c0_188] : memref<16x8xf32, #tpu.memory_space<vmem>>, vector<8x4xf32>
    tpu.vector_store %arg43[%c8_187, %c0_188], %318 {strides = array<i32>} : memref<16x8xf32, #tpu.memory_space<vmem>>, vector<8x4xf32>,
    %320 = vector.extract_strided_slice %228 {offsets = [8, 4], sizes = [8, 4], strides = [1, 1]} : vector<16x8xf32> to vector<8x4xf32>
    %cst_189 = arith.constant 5.000000e-01 : f32
    %321 = vector.broadcast %cst_189 : f32 to vector<8x4xf32>
    %322 = arith.mulf %320, %321 : vector<8x4xf32>
    %323 = vector.extract_strided_slice %230 {offsets = [8, 4], sizes = [8, 4], strides = [1, 1]} : vector<16x8xf32> to vector<8x4xf32>
    %324 = vector.extract_strided_slice %232 {offsets = [8, 4], sizes = [8, 4], strides = [1, 1]} : vector<16x8xf32> to vector<8x4xf32>
    %cst_190 = arith.constant dense<0.000000e+00> : vector<8x8xf32>
    %325 = tpu.matmul %322, %323, %cst_190 {dimension_numbers = #tpu.dot_dimension_numbers<[1], [1], [0], [0], [0, 0, 1, 0], [], []>} : vector<8x4xf32>, vector<8x4xf32>, vector<8x8xf32> -> vector<8x8xf32>
    %cst_191 = arith.constant -1.000000e+09 : f32
    %326 = vector.broadcast %cst_191 : f32 to vector<8x8xf32>
    %327 = arith.select %235, %326, %325 : vector<8x8xi1>, vector<8x8xf32>
    %cst_192 = arith.constant dense<0xFF800000> : vector<8xf32>
    %328 = vector.multi_reduction <maximumf>, %327, %cst_192 [1] : vector<8x8xf32> to vector<8xf32>
    %329 = vector.shape_cast %328 : vector<8xf32> to vector<8x1xf32>
    %330 = vector.broadcast %329 : vector<8x1xf32> to vector<8x8xf32>
    %331 = arith.subf %327, %330 : vector<8x8xf32>
    %332 = math.exp %331 : vector<8x8xf32>
    %cst_193 = arith.constant dense<0.000000e+00> : vector<8xf32>
    %333 = vector.multi_reduction <add>, %332, %cst_193 [1] : vector<8x8xf32> to vector<8xf32>
    %334 = vector.shape_cast %333 : vector<8xf32> to vector<8x1xf32>
    %335 = tpu.reciprocal %334 : vector<8x1xf32> -> vector<8x1xf32>
    %336 = vector.broadcast %335 : vector<8x1xf32> to vector<8x8xf32>
    %337 = arith.mulf %332, %336 : vector<8x8xf32>
    %c1_194 = arith.constant 1 : index
    %c1_195 = arith.constant 1 : index
    %c0_196 = arith.constant 0 : index
    %c0_197 = arith.constant 0 : index
    %338 = vector.load %arg42[%c1_194, %c1_195, %c0_196, %c0_197] : memref<2x2x8x8xf32, #tpu.memory_space<vmem>>, vector<1x1x8x8xf32>
    %339 = vector.shape_cast %338 : vector<1x1x8x8xf32> to vector<8x8xf32>
    %340 = arith.addf %339, %337 : vector<8x8xf32>
    %cst_198 = arith.constant 5.000000e-01 : f32
    %341 = vector.broadcast %cst_198 : f32 to vector<8x8xf32>
    %342 = arith.mulf %340, %341 : vector<8x8xf32>
    %c1_199 = arith.constant 1 : index
    %c1_200 = arith.constant 1 : index
    %c0_201 = arith.constant 0 : index
    %c0_202 = arith.constant 0 : index
    %343 = vector.load %arg42[%c1_199, %c1_200, %c0_201, %c0_202] : memref<2x2x8x8xf32, #tpu.memory_space<vmem>>, vector<1x1x8x8xf32>
    %344 = vector.shape_cast %343 : vector<1x1x8x8xf32> to vector<8x8xf32>
    %345 = vector.shape_cast %342 : vector<8x8xf32> to vector<1x1x8x8xf32>
    tpu.vector_store %arg42[%c1_199, %c1_200, %c0_201, %c0_202], %345 {strides = array<i32>} : memref<2x2x8x8xf32, #tpu.memory_space<vmem>>, vector<1x1x8x8xf32>,
    %cst_203 = arith.constant dense<0.000000e+00> : vector<8x4xf32>
    %346 = tpu.matmul %337, %324, %cst_203 {dimension_numbers = #tpu.dot_dimension_numbers<[1], [0], [0], [1], [0, 0, 1, 1], [], []>} : vector<8x8xf32>, vector<8x4xf32>, vector<8x4xf32> -> vector<8x4xf32>
    %c8_204 = arith.constant 8 : index
    %c4_205 = arith.constant 4 : index
    %347 = vector.load %arg43[%c8_204, %c4_205] : memref<16x8xf32, #tpu.memory_space<vmem>>, vector<8x4xf32>
    tpu.vector_store %arg43[%c8_204, %c4_205], %346 {strides = array<i32>} : memref<16x8xf32, #tpu.memory_space<vmem>>, vector<8x4xf32>,
    %c0_206 = arith.constant 0 : index
    %c0_207 = arith.constant 0 : index
    %348 = vector.load %arg43[%c0_206, %c0_207] : memref<16x8xf32, #tpu.memory_space<vmem>>, vector<16x8xf32>
    %c0_208 = arith.constant 0 : index
    %c0_209 = arith.constant 0 : index
    %349 = vector.load %arg33[%c0_208, %c0_209] : memref<8x16xf32, #tpu.memory_space<vmem>>, vector<8x16xf32>
    %cst_210 = arith.constant dense<0.000000e+00> : vector<16x16xf32>
    %350 = tpu.matmul %348, %349, %cst_210 {dimension_numbers = #tpu.dot_dimension_numbers<[1], [0], [0], [1], [0, 0, 1, 1], [], []>} : vector<16x8xf32>, vector<8x16xf32>, vector<16x16xf32> -> vector<16x16xf32>
    %351 = arith.addf %350, %202 : vector<16x16xf32>
    %c0_211 = arith.constant 0 : index
    %c0_212 = arith.constant 0 : index
    %352 = vector.load %arg34[%c0_211, %c0_212] : memref<1x16xf32, #tpu.memory_space<vmem>>, vector<1x16xf32>
    %c0_213 = arith.constant 0 : index
    %c0_214 = arith.constant 0 : index
    %353 = vector.load %arg35[%c0_213, %c0_214] : memref<1x16xf32, #tpu.memory_space<vmem>>, vector<1x16xf32>
    %cst_215 = arith.constant dense<0.000000e+00> : vector<16xf32>
    %354 = vector.multi_reduction <add>, %351, %cst_215 [1] : vector<16x16xf32> to vector<16xf32>
    %355 = vector.shape_cast %354 : vector<16xf32> to vector<16x1xf32>
    %cst_216 = arith.constant 1.600000e+01 : f32
    %356 = vector.broadcast %cst_216 : f32 to vector<16x1xf32>
    %357 = arith.divf %355, %356 : vector<16x1xf32>
    %358 = vector.broadcast %357 : vector<16x1xf32> to vector<16x16xf32>
    %359 = arith.subf %351, %358 : vector<16x16xf32>
    %360 = arith.mulf %359, %359 : vector<16x16xf32>
    %cst_217 = arith.constant dense<0.000000e+00> : vector<16xf32>
    %361 = vector.multi_reduction <add>, %360, %cst_217 [1] : vector<16x16xf32> to vector<16xf32>
    %362 = vector.shape_cast %361 : vector<16xf32> to vector<16x1xf32>
    %cst_218 = arith.constant 1.600000e+01 : f32
    %363 = vector.broadcast %cst_218 : f32 to vector<16x1xf32>
    %364 = arith.divf %362, %363 : vector<16x1xf32>
    %365 = vector.broadcast %357 : vector<16x1xf32> to vector<16x16xf32>
    %366 = arith.subf %351, %365 : vector<16x16xf32>
    %cst_219 = arith.constant 9.99999997E-7 : f32
    %367 = vector.broadcast %cst_219 : f32 to vector<16x1xf32>
    %368 = arith.addf %364, %367 : vector<16x1xf32>
    %369 = math.rsqrt %368 : vector<16x1xf32>
    %370 = vector.broadcast %369 : vector<16x1xf32> to vector<16x16xf32>
    %371 = arith.mulf %366, %370 : vector<16x16xf32>
    %372 = vector.broadcast %352 : vector<1x16xf32> to vector<16x16xf32>
    %373 = arith.mulf %371, %372 : vector<16x16xf32>
    %374 = vector.broadcast %353 : vector<1x16xf32> to vector<16x16xf32>
    %375 = arith.addf %373, %374 : vector<16x16xf32>
    %c0_220 = arith.constant 0 : index
    %c0_221 = arith.constant 0 : index
    %376 = vector.load %arg36[%c0_220, %c0_221] : memref<16x16xf32, #tpu.memory_space<vmem>>, vector<16x16xf32>
    %cst_222 = arith.constant dense<0.000000e+00> : vector<16x16xf32>
    %377 = tpu.matmul %375, %376, %cst_222 {dimension_numbers = #tpu.dot_dimension_numbers<[1], [0], [0], [1], [0, 0, 1, 1], [], []>} : vector<16x16xf32>, vector<16x16xf32>, vector<16x16xf32> -> vector<16x16xf32>
    %c0_223 = arith.constant 0 : index
    %c0_224 = arith.constant 0 : index
    %378 = vector.load %arg37[%c0_223, %c0_224] : memref<1x16xf32, #tpu.memory_space<vmem>>, vector<1x16xf32>
    %379 = vector.broadcast %378 : vector<1x16xf32> to vector<16x16xf32>
    %380 = arith.addf %377, %379 : vector<16x16xf32>
    %cst_225 = arith.constant 0.000000e+00 : f32
    %381 = vector.broadcast %cst_225 : f32 to vector<16x16xf32>
    %382 = arith.maximumf %380, %381 : vector<16x16xf32>
    %c0_226 = arith.constant 0 : index
    %c0_227 = arith.constant 0 : index
    %383 = vector.load %arg38[%c0_226, %c0_227] : memref<16x16xf32, #tpu.memory_space<vmem>>, vector<16x16xf32>
    %cst_228 = arith.constant dense<0.000000e+00> : vector<16x16xf32>
    %384 = tpu.matmul %382, %383, %cst_228 {dimension_numbers = #tpu.dot_dimension_numbers<[1], [0], [0], [1], [0, 0, 1, 1], [], []>} : vector<16x16xf32>, vector<16x16xf32>, vector<16x16xf32> -> vector<16x16xf32>
    %c0_229 = arith.constant 0 : index
    %c0_230 = arith.constant 0 : index
    %385 = vector.load %arg39[%c0_229, %c0_230] : memref<1x16xf32, #tpu.memory_space<vmem>>, vector<1x16xf32>
    %386 = vector.broadcast %385 : vector<1x16xf32> to vector<16x16xf32>
    %387 = arith.addf %384, %386 : vector<16x16xf32>
    %388 = arith.addf %387, %351 : vector<16x16xf32>
    %389 = vector.extract_strided_slice %388 {offsets = [0, 0], sizes = [16, 8], strides = [1, 1]} : vector<16x16xf32> to vector<16x8xf32>
    %390 = arith.negf %389 : vector<16x8xf32>
    %391 = math.exp %390 : vector<16x8xf32>
    %cst_231 = arith.constant 1.000000e+00 : f32
    %392 = vector.broadcast %cst_231 : f32 to vector<16x8xf32>
    %393 = arith.addf %392, %391 : vector<16x8xf32>
    %394 = arith.divf %392, %393 : vector<16x8xf32>
    %395 = vector.extract_strided_slice %388 {offsets = [0, 8], sizes = [16, 8], strides = [1, 1]} : vector<16x16xf32> to vector<16x8xf32>
    %396 = math.tanh %395 : vector<16x8xf32>
    %397 = arith.mulf %394, %396 : vector<16x8xf32>
    %c0_232 = arith.constant 0 : index
    %c0_233 = arith.constant 0 : index
    %398 = vector.load %arg14[%c0_232, %c0_233] : memref<8x8xf32, #tpu.memory_space<vmem>>, vector<8x8xf32>
    %cst_234 = arith.constant dense<0.000000e+00> : vector<16x8xf32>
    %399 = tpu.matmul %397, %398, %cst_234 {dimension_numbers = #tpu.dot_dimension_numbers<[1], [0], [0], [1], [0, 0, 1, 1], [], []>} : vector<16x8xf32>, vector<8x8xf32>, vector<16x8xf32> -> vector<16x8xf32>
    %c0_235 = arith.constant 0 : index
    %c0_236 = arith.constant 0 : index
    %400 = vector.load %arg15[%c0_235, %c0_236] : memref<1x8xf32, #tpu.memory_space<vmem>>, vector<1x8xf32>
    %401 = vector.broadcast %400 : vector<1x8xf32> to vector<16x8xf32>
    %402 = arith.addf %399, %401 : vector<16x8xf32>
    %403 = vector.extract_strided_slice %402 {offsets = [0, 0], sizes = [16, 4], strides = [1, 1]} : vector<16x8xf32> to vector<16x4xf32>
    %404 = arith.addf %1, %403 : vector<16x4xf32>
    %cst_237 = arith.constant 0.707106769 : f32
    %405 = vector.broadcast %cst_237 : f32 to vector<16x4xf32>
    %406 = arith.mulf %404, %405 : vector<16x4xf32>
    %407 = vector.shape_cast %406 : vector<16x4xf32> to vector<2x8x4xf32>
    %c0_238 = arith.constant 0 : index
    %c0_239 = arith.constant 0 : index
    %c0_240 = arith.constant 0 : index
    %408 = vector.load %arg40[%c0_238, %c0_239, %c0_240] : memref<2x8x4xf32, #tpu.memory_space<vmem>>, vector<2x8x4xf32>
    tpu.vector_store %arg40[%c0_238, %c0_239, %c0_240], %407 {strides = array<i32>} : memref<2x8x4xf32, #tpu.memory_space<vmem>>, vector<2x8x4xf32>,
    %409 = vector.extract_strided_slice %402 {offsets = [0, 4], sizes = [16, 4], strides = [1, 1]} : vector<16x8xf32> to vector<16x4xf32>
    %410 = vector.shape_cast %409 : vector<16x4xf32> to vector<2x8x4xf32>
    %c0_241 = arith.constant 0 : index
    %c0_242 = arith.constant 0 : index
    %c0_243 = arith.constant 0 : index
    %411 = vector.load %arg41[%c0_241, %c0_242, %c0_243] : memref<2x8x4xf32, #tpu.memory_space<vmem>>, vector<2x8x4xf32>
    tpu.vector_store %arg41[%c0_241, %c0_242, %c0_243], %410 {strides = array<i32>} : memref<2x8x4xf32, #tpu.memory_space<vmem>>, vector<2x8x4xf32>,
    return
  }
  func.func @transform_0(%arg0: i32) -> (i32, i32, i32) {
    %c0_i32 = arith.constant 0 : i32
    %c0_i32_0 = arith.constant 0 : i32
    %c0_i32_1 = arith.constant 0 : i32
    return %arg0, %c0_i32, %c0_i32_0 : i32, i32, i32
  }
  func.func @transform_1(%arg0: i32) -> (i32, i32, i32) {
    %c0_i32 = arith.constant 0 : i32
    %c0_i32_0 = arith.constant 0 : i32
    %c0_i32_1 = arith.constant 0 : i32
    return %arg0, %c0_i32, %c0_i32_0 : i32, i32, i32
  }
  func.func @transform_2(%arg0: i32) -> (i32, i32, i32) {
    %c0_i32 = arith.constant 0 : i32
    %c0_i32_0 = arith.constant 0 : i32
    %c0_i32_1 = arith.constant 0 : i32
    return %arg0, %c0_i32, %c0_i32_0 : i32, i32, i32
  }
  func.func @transform_3(%arg0: i32) -> (i32, i32) {
    %c0_i32 = arith.constant 0 : i32
    %c0_i32_0 = arith.constant 0 : i32
    %c0_i32_1 = arith.constant 0 : i32
    return %c0_i32, %c0_i32_0 : i32, i32
  }
  func.func @transform_4(%arg0: i32) -> (i32, i32) {
    %c0_i32 = arith.constant 0 : i32
    %c0_i32_0 = arith.constant 0 : i32
    %c0_i32_1 = arith.constant 0 : i32
    return %c0_i32, %c0_i32_0 : i32, i32
  }
  func.func @transform_5(%arg0: i32) -> (i32, i32) {
    %c0_i32 = arith.constant 0 : i32
    %c0_i32_0 = arith.constant 0 : i32
    %c0_i32_1 = arith.constant 0 : i32
    return %c0_i32, %c0_i32_0 : i32, i32
  }
  func.func @transform_6(%arg0: i32) -> (i32, i32) {
    %c0_i32 = arith.constant 0 : i32
    %c0_i32_0 = arith.constant 0 : i32
    %c0_i32_1 = arith.constant 0 : i32
    return %c0_i32, %c0_i32_0 : i32, i32
  }
  func.func @transform_7(%arg0: i32) -> (i32, i32) {
    %c0_i32 = arith.constant 0 : i32
    %c0_i32_0 = arith.constant 0 : i32
    %c0_i32_1 = arith.constant 0 : i32
    return %c0_i32, %c0_i32_0 : i32, i32
  }
  func.func @transform_8(%arg0: i32) -> (i32, i32) {
    %c0_i32 = arith.constant 0 : i32
    %c0_i32_0 = arith.constant 0 : i32
    %c0_i32_1 = arith.constant 0 : i32
    return %c0_i32, %c0_i32_0 : i32, i32
  }
  func.func @transform_9(%arg0: i32) -> (i32, i32) {
    %c0_i32 = arith.constant 0 : i32
    %c0_i32_0 = arith.constant 0 : i32
    %c0_i32_1 = arith.constant 0 : i32
    return %c0_i32, %c0_i32_0 : i32, i32
  }
  func.func @transform_10(%arg0: i32) -> (i32, i32) {
    %c0_i32 = arith.constant 0 : i32
    %c0_i32_0 = arith.constant 0 : i32
    %c0_i32_1 = arith.constant 0 : i32
    return %c0_i32, %c0_i32_0 : i32, i32
  }
  func.func @transform_11(%arg0: i32) -> (i32, i32) {
    %c0_i32 = arith.constant 0 : i32
    %c0_i32_0 = arith.constant 0 : i32
    %c0_i32_1 = arith.constant 0 : i32
    return %c0_i32, %c0_i32_0 : i32, i32
  }
  func.func @transform_12(%arg0: i32) -> (i32, i32) {
    %c0_i32 = arith.constant 0 : i32
    %c0_i32_0 = arith.constant 0 : i32
    %c0_i32_1 = arith.constant 0 : i32
    return %c0_i32, %c0_i32_0 : i32, i32
  }
  func.func @transform_13(%arg0: i32) -> (i32, i32) {
    %c0_i32 = arith.constant 0 : i32
    %c0_i32_0 = arith.constant 0 : i32
    %c0_i32_1 = arith.constant 0 : i32
    return %c0_i32, %c0_i32_0 : i32, i32
  }
  func.func @transform_14(%arg0: i32) -> (i32, i32) {
    %c0_i32 = arith.constant 0 : i32
    %c0_i32_0 = arith.constant 0 : i32
    %c0_i32_1 = arith.constant 0 : i32
    return %c0_i32, %c0_i32_0 : i32, i32
  }
  func.func @transform_15(%arg0: i32) -> (i32, i32) {
    %c0_i32 = arith.constant 0 : i32
    %c0_i32_0 = arith.constant 0 : i32
    %c0_i32_1 = arith.constant 0 : i32
    return %c0_i32, %c0_i32_0 : i32, i32
  }
  func.func @transform_16(%arg0: i32) -> (i32, i32) {
    %c0_i32 = arith.constant 0 : i32
    %c0_i32_0 = arith.constant 0 : i32
    %c0_i32_1 = arith.constant 0 : i32
    return %c0_i32, %c0_i32_0 : i32, i32
  }
  func.func @transform_17(%arg0: i32) -> (i32, i32) {
    %c0_i32 = arith.constant 0 : i32
    %c0_i32_0 = arith.constant 0 : i32
    %c0_i32_1 = arith.constant 0 : i32
    return %c0_i32, %c0_i32_0 : i32, i32
  }
  func.func @transform_18(%arg0: i32) -> (i32, i32) {
    %c0_i32 = arith.constant 0 : i32
    %c0_i32_0 = arith.constant 0 : i32
    %c0_i32_1 = arith.constant 0 : i32
    return %c0_i32, %c0_i32_0 : i32, i32
  }
  func.func @transform_19(%arg0: i32) -> (i32, i32) {
    %c0_i32 = arith.constant 0 : i32
    %c0_i32_0 = arith.constant 0 : i32
    %c0_i32_1 = arith.constant 0 : i32
    return %c0_i32, %c0_i32_0 : i32, i32
  }
  func.func @transform_20(%arg0: i32) -> (i32, i32) {
    %c0_i32 = arith.constant 0 : i32
    %c0_i32_0 = arith.constant 0 : i32
    %c0_i32_1 = arith.constant 0 : i32
    return %c0_i32, %c0_i32_0 : i32, i32
  }
  func.func @transform_21(%arg0: i32) -> (i32, i32) {
    %c0_i32 = arith.constant 0 : i32
    %c0_i32_0 = arith.constant 0 : i32
    %c0_i32_1 = arith.constant 0 : i32
    return %c0_i32, %c0_i32_0 : i32, i32
  }
  func.func @transform_22(%arg0: i32) -> (i32, i32) {
    %c0_i32 = arith.constant 0 : i32
    %c0_i32_0 = arith.constant 0 : i32
    %c0_i32_1 = arith.constant 0 : i32
    return %c0_i32, %c0_i32_0 : i32, i32
  }
  func.func @transform_23(%arg0: i32) -> (i32, i32) {
    %c0_i32 = arith.constant 0 : i32
    %c0_i32_0 = arith.constant 0 : i32
    %c0_i32_1 = arith.constant 0 : i32
    return %c0_i32, %c0_i32_0 : i32, i32
  }
  func.func @transform_24(%arg0: i32) -> (i32, i32) {
    %c0_i32 = arith.constant 0 : i32
    %c0_i32_0 = arith.constant 0 : i32
    %c0_i32_1 = arith.constant 0 : i32
    return %c0_i32, %c0_i32_0 : i32, i32
  }
  func.func @transform_25(%arg0: i32) -> (i32, i32) {
    %c0_i32 = arith.constant 0 : i32
    %c0_i32_0 = arith.constant 0 : i32
    %c0_i32_1 = arith.constant 0 : i32
    return %c0_i32, %c0_i32_0 : i32, i32
  }
  func.func @transform_26(%arg0: i32) -> (i32, i32) {
    %c0_i32 = arith.constant 0 : i32
    %c0_i32_0 = arith.constant 0 : i32
    %c0_i32_1 = arith.constant 0 : i32
    return %c0_i32, %c0_i32_0 : i32, i32
  }
  func.func @transform_27(%arg0: i32) -> (i32, i32) {
    %c0_i32 = arith.constant 0 : i32
    %c0_i32_0 = arith.constant 0 : i32
    %c0_i32_1 = arith.constant 0 : i32
    return %c0_i32, %c0_i32_0 : i32, i32
  }
  func.func @transform_28(%arg0: i32) -> (i32, i32) {
    %c0_i32 = arith.constant 0 : i32
    %c0_i32_0 = arith.constant 0 : i32
    %c0_i32_1 = arith.constant 0 : i32
    return %c0_i32, %c0_i32_0 : i32, i32
  }
  func.func @transform_29(%arg0: i32) -> (i32, i32) {
    %c0_i32 = arith.constant 0 : i32
    %c0_i32_0 = arith.constant 0 : i32
    %c0_i32_1 = arith.constant 0 : i32
    return %c0_i32, %c0_i32_0 : i32, i32
  }
  func.func @transform_30(%arg0: i32) -> (i32, i32) {
    %c0_i32 = arith.constant 0 : i32
    %c0_i32_0 = arith.constant 0 : i32
    %c0_i32_1 = arith.constant 0 : i32
    return %c0_i32, %c0_i32_0 : i32, i32
  }
  func.func @transform_31(%arg0: i32) -> (i32, i32) {
    %c0_i32 = arith.constant 0 : i32
    %c0_i32_0 = arith.constant 0 : i32
    %c0_i32_1 = arith.constant 0 : i32
    return %c0_i32, %c0_i32_0 : i32, i32
  }
  func.func @transform_32(%arg0: i32) -> (i32, i32) {
    %c0_i32 = arith.constant 0 : i32
    %c0_i32_0 = arith.constant 0 : i32
    %c0_i32_1 = arith.constant 0 : i32
    return %c0_i32, %c0_i32_0 : i32, i32
  }
  func.func @transform_33(%arg0: i32) -> (i32, i32) {
    %c0_i32 = arith.constant 0 : i32
    %c0_i32_0 = arith.constant 0 : i32
    %c0_i32_1 = arith.constant 0 : i32
    return %c0_i32, %c0_i32_0 : i32, i32
  }
  func.func @transform_34(%arg0: i32) -> (i32, i32) {
    %c0_i32 = arith.constant 0 : i32
    %c0_i32_0 = arith.constant 0 : i32
    %c0_i32_1 = arith.constant 0 : i32
    return %c0_i32, %c0_i32_0 : i32, i32
  }
  func.func @transform_35(%arg0: i32) -> (i32, i32) {
    %c0_i32 = arith.constant 0 : i32
    %c0_i32_0 = arith.constant 0 : i32
    %c0_i32_1 = arith.constant 0 : i32
    return %c0_i32, %c0_i32_0 : i32, i32
  }
  func.func @transform_36(%arg0: i32) -> (i32, i32) {
    %c0_i32 = arith.constant 0 : i32
    %c0_i32_0 = arith.constant 0 : i32
    %c0_i32_1 = arith.constant 0 : i32
    return %c0_i32, %c0_i32_0 : i32, i32
  }
  func.func @transform_37(%arg0: i32) -> (i32, i32) {
    %c0_i32 = arith.constant 0 : i32
    %c0_i32_0 = arith.constant 0 : i32
    %c0_i32_1 = arith.constant 0 : i32
    return %c0_i32, %c0_i32_0 : i32, i32
  }
  func.func @transform_38(%arg0: i32) -> (i32, i32) {
    %c0_i32 = arith.constant 0 : i32
    %c0_i32_0 = arith.constant 0 : i32
    %c0_i32_1 = arith.constant 0 : i32
    return %c0_i32, %c0_i32_0 : i32, i32
  }
  func.func @transform_39(%arg0: i32) -> (i32, i32, i32) {
    %c0_i32 = arith.constant 0 : i32
    %c0_i32_0 = arith.constant 0 : i32
    %c0_i32_1 = arith.constant 0 : i32
    return %arg0, %c0_i32, %c0_i32_0 : i32, i32, i32
  }
  func.func @transform_40(%arg0: i32) -> (i32, i32, i32) {
    %c0_i32 = arith.constant 0 : i32
    %c0_i32_0 = arith.constant 0 : i32
    %c0_i32_1 = arith.constant 0 : i32
    return %arg0, %c0_i32, %c0_i32_0 : i32, i32, i32
  }
  func.func @transform_41(%arg0: i32) -> (i32, i32, i32, i32) {
    %c0_i32 = arith.constant 0 : i32
    %c0_i32_0 = arith.constant 0 : i32
    %c0_i32_1 = arith.constant 0 : i32
    %c0_i32_2 = arith.constant 0 : i32
    return %arg0, %c0_i32, %c0_i32_0, %c0_i32_1 : i32, i32, i32, i32
  }
}

</mosaic_0001>

<llo_original>
// kernel: gta_forward.1
$region0: #{gta_forward.1}
  #allocation0 [shape = 'u32[]', space=smem, size = 0x4, offset = 0x4, fixed_abs, tag = 'smem constant byte address 0x4 - core index']
  #allocation1 [shape = 'u32[72,128]{1,0:T(1,128)}', space=vmem, size = 0x9000, scoped, tag = 'internal scratch']
  #allocation2 [shape = 'f32[16,8]{1,0:T(8,128)}', space=vmem, size = 0x2000, scoped, tag = 'scratch operand']
  %s0 = inlined_call_operand.smem [shape: u32[42], index: -1, kind: input, shape index: {}]
  %s1 = sld [smem:[%s0]]
  %s2 = scalar_lea.smem %s0, 1
  %s3 = sld [smem:[%s2]]
  %s4 = scalar_lea.smem %s0, 2
  %s5 = sld [smem:[%s4]]
  %s6 = scalar_lea.smem %s0, 3
  %s7 = sld [smem:[%s6]]
  %s8 = scalar_lea.smem %s0, 4
  %s9 = sld [smem:[%s8]]
  %s10 = scalar_lea.smem %s0, 5
  %s11 = sld [smem:[%s10]]
  %s12 = scalar_lea.smem %s0, 6
  %s13 = sld [smem:[%s12]]
  %s14 = scalar_lea.smem %s0, 7
  %s15 = sld [smem:[%s14]]
  %s16 = scalar_lea.smem %s0, 8
  %s17 = sld [smem:[%s16]]
  %s18 = scalar_lea.smem %s0, 9
  %s19 = sld [smem:[%s18]]
  %s20 = scalar_lea.smem %s0, 10
  %s21 = sld [smem:[%s20]]
  %s22 = scalar_lea.smem %s0, 11
  %s23 = sld [smem:[%s22]]
  %s24 = scalar_lea.smem %s0, 12
  %s25 = sld [smem:[%s24]]
  %s26 = scalar_lea.smem %s0, 13
  %s27 = sld [smem:[%s26]]
  %s28 = scalar_lea.smem %s0, 14
  %s29 = sld [smem:[%s28]]
  %s30 = scalar_lea.smem %s0, 15
  %s31 = sld [smem:[%s30]]
  %s32 = scalar_lea.smem %s0, 16
  %s33 = sld [smem:[%s32]]
  %s34 = scalar_lea.smem %s0, 17
  %s35 = sld [smem:[%s34]]
  %s36 = scalar_lea.smem %s0, 18
  %s37 = sld [smem:[%s36]]
  %s38 = scalar_lea.smem %s0, 19
  %s39 = sld [smem:[%s38]]
  %s40 = scalar_lea.smem %s0, 20
  %s41 = sld [smem:[%s40]]
  %s42 = scalar_lea.smem %s0, 21
  %s43 = sld [smem:[%s42]]
  %s44 = scalar_lea.smem %s0, 22
  %s45 = sld [smem:[%s44]]
  %s46 = scalar_lea.smem %s0, 23
  %s47 = sld [smem:[%s46]]
  %s48 = scalar_lea.smem %s0, 24
  %s49 = sld [smem:[%s48]]
  %s50 = scalar_lea.smem %s0, 25
  %s51 = sld [smem:[%s50]]
  %s52 = scalar_lea.smem %s0, 26
  %s53 = sld [smem:[%s52]]
  %s54 = scalar_lea.smem %s0, 27
  %s55 = sld [smem:[%s54]]
  %s56 = scalar_lea.smem %s0, 28
  %s57 = sld [smem:[%s56]]
  %s58 = scalar_lea.smem %s0, 29
  %s59 = sld [smem:[%s58]]
  %s60 = scalar_lea.smem %s0, 30
  %s61 = sld [smem:[%s60]]
  %s62 = scalar_lea.smem %s0, 31
  %s63 = sld [smem:[%s62]]
  %s64 = scalar_lea.smem %s0, 32
  %s65 = sld [smem:[%s64]]
  %s66 = scalar_lea.smem %s0, 33
  %s67 = sld [smem:[%s66]]
  %s68 = scalar_lea.smem %s0, 34
  %s69 = sld [smem:[%s68]]
  %s70 = scalar_lea.smem %s0, 35
  %s71 = sld [smem:[%s70]]
  %s72 = scalar_lea.smem %s0, 36
  %s73 = sld [smem:[%s72]]
  %s74 = scalar_lea.smem %s0, 37
  %s75 = sld [smem:[%s74]]
  %s76 = scalar_lea.smem %s0, 38
  %s77 = sld [smem:[%s76]]
  %s78 = scalar_lea.smem %s0, 39
  %s79 = sld [smem:[%s78]]
  %s80 = scalar_lea.smem %s0, 40
  %s81 = sld [smem:[%s80]]
  %s82 = scalar_lea.smem %s0, 41
  %s83 = sld [smem:[%s82]]
  %84 = xla_tuple %s79, %s81, %s83
  %s85 = sld [smem:[#allocation0]]
  $region182: #{gta_forward.1} parent=0
    _
  %s87 = ssub.s32 1, %s85
  %s88 = scalar_select 0, %s87, %s85
  $region1: #{gta_forward.1} parent=0
    #allocation3 [shape = 'u8[16384]{0}', space=vmem, size = 0x4000, scoped, tag = 'output window, operand 2, single buffered']
    #allocation4 [shape = 's32[1]{0}', space=sflag, size = 0x4, scoped, tag = 'scoped memory for gta_forward.1']
    %89 = vsyncpa [#allocation4], 0
    // Predicated region
    $region2: #{gta_forward.1} parent=1 // pred_check
      _
    $region3: #{gta_forward.1} parent=1 // pred_check_branch
      %91 = sbr.rel (0) target = $region5
    $region4: #{gta_forward.1} parent=1 // pred_region
      _
    $region5: #{gta_forward.1} parent=1 // pred_fallthru
      _
    // Predicated region
    $region6: #{gta_forward.1} parent=1 // pred_check
      _
    $region7: #{gta_forward.1} parent=1 // pred_check_branch
      %93 = sbr.rel (0) target = $region9
    $region8: #{gta_forward.1} parent=1 // pred_region
      _
    $region9: #{gta_forward.1} parent=1 // pred_fallthru
      _
    // Predicated region
    $region10: #{gta_forward.1} parent=1 // pred_check
      _
    $region11: #{gta_forward.1} parent=1 // pred_check_branch
      %95 = sbr.rel (0) target = $region13
    $region12: #{gta_forward.1} parent=1 // pred_region
      _
    $region13: #{gta_forward.1} parent=1 // pred_fallthru
      _
    // Predicated region
    $region14: #{gta_forward.1} parent=1 // pred_check
      _
    $region15: #{gta_forward.1} parent=1 // pred_check_branch
      %97 = sbr.rel (0) target = $region17
    $region16: #{gta_forward.1} parent=1 // pred_region
      _
    $region17: #{gta_forward.1} parent=1 // pred_fallthru
      _
    // Predicated region
    $region18: #{gta_forward.1} parent=1 // pred_check
      _
    $region19: #{gta_forward.1} parent=1 // pred_check_branch
      %99 = sbr.rel (0) target = $region21
    $region20: #{gta_forward.1} parent=1 // pred_region
      _
    $region21: #{gta_forward.1} parent=1 // pred_fallthru
      _
    // Predicated region
    $region22: #{gta_forward.1} parent=1 // pred_check
      _
    $region23: #{gta_forward.1} parent=1 // pred_check_branch
      %101 = sbr.rel (0) target = $region25
    $region24: #{gta_forward.1} parent=1 // pred_region
      _
    $region25: #{gta_forward.1} parent=1 // pred_fallthru
      _
    // Predicated region
    $region26: #{gta_forward.1} parent=1 // pred_check
      _
    $region27: #{gta_forward.1} parent=1 // pred_check_branch
      %103 = sbr.rel (0) target = $region29
    $region28: #{gta_forward.1} parent=1 // pred_region
      _
    $region29: #{gta_forward.1} parent=1 // pred_fallthru
      _
    // Predicated region
    $region30: #{gta_forward.1} parent=1 // pred_check
      _
    $region31: #{gta_forward.1} parent=1 // pred_check_branch
      %105 = sbr.rel (0) target = $region33
    $region32: #{gta_forward.1} parent=1 // pred_region
      _
    $region33: #{gta_forward.1} parent=1 // pred_fallthru
      _
    // Predicated region
    $region34: #{gta_forward.1} parent=1 // pred_check
      _
    $region35: #{gta_forward.1} parent=1 // pred_check_branch
      %107 = sbr.rel (0) target = $region37
    $region36: #{gta_forward.1} parent=1 // pred_region
      _
    $region37: #{gta_forward.1} parent=1 // pred_fallthru
      _
    // Predicated region
    $region38: #{gta_forward.1} parent=1 // pred_check
      _
    $region39: #{gta_forward.1} parent=1 // pred_check_branch
      %109 = sbr.rel (0) target = $region41
    $region40: #{gta_forward.1} parent=1 // pred_region
      _
    $region41: #{gta_forward.1} parent=1 // pred_fallthru
      _
    // Predicated region
    $region42: #{gta_forward.1} parent=1 // pred_check
      _
    $region43: #{gta_forward.1} parent=1 // pred_check_branch
      %111 = sbr.rel (0) target = $region45
    $region44: #{gta_forward.1} parent=1 // pred_region
      _
    $region45: #{gta_forward.1} parent=1 // pred_fallthru
      _
    // Predicated region
    $region46: #{gta_forward.1} parent=1 // pred_check
      _
    $region47: #{gta_forward.1} parent=1 // pred_check_branch
      %113 = sbr.rel (0) target = $region49
    $region48: #{gta_forward.1} parent=1 // pred_region
      _
    $region49: #{gta_forward.1} parent=1 // pred_fallthru
      _
    // Predicated region
    $region50: #{gta_forward.1} parent=1 // pred_check
      _
    $region51: #{gta_forward.1} parent=1 // pred_check_branch
      %115 = sbr.rel (0) target = $region53
    $region52: #{gta_forward.1} parent=1 // pred_region
      _
    $region53: #{gta_forward.1} parent=1 // pred_fallthru
      _
    // Predicated region
    $region54: #{gta_forward.1} parent=1 // pred_check
      _
    $region55: #{gta_forward.1} parent=1 // pred_check_branch
      %117 = sbr.rel (0) target = $region57
    $region56: #{gta_forward.1} parent=1 // pred_region
      _
    $region57: #{gta_forward.1} parent=1 // pred_fallthru
      _
    // Predicated region
    $region58: #{gta_forward.1} parent=1 // pred_check
      _
    $region59: #{gta_forward.1} parent=1 // pred_check_branch
      %119 = sbr.rel (0) target = $region61
    $region60: #{gta_forward.1} parent=1 // pred_region
      _
    $region61: #{gta_forward.1} parent=1 // pred_fallthru
      _
    // Predicated region
    $region62: #{gta_forward.1} parent=1 // pred_check
      _
    $region63: #{gta_forward.1} parent=1 // pred_check_branch
      %121 = sbr.rel (0) target = $region65
    $region64: #{gta_forward.1} parent=1 // pred_region
      _
    $region65: #{gta_forward.1} parent=1 // pred_fallthru
      _
    // Predicated region
    $region66: #{gta_forward.1} parent=1 // pred_check
      _
    $region67: #{gta_forward.1} parent=1 // pred_check_branch
      %123 = sbr.rel (0) target = $region69
    $region68: #{gta_forward.1} parent=1 // pred_region
      _
    $region69: #{gta_forward.1} parent=1 // pred_fallthru
      _
    // Predicated region
    $region70: #{gta_forward.1} parent=1 // pred_check
      _
    $region71: #{gta_forward.1} parent=1 // pred_check_branch
      %125 = sbr.rel (0) target = $region73
    $region72: #{gta_forward.1} parent=1 // pred_region
      _
    $region73: #{gta_forward.1} parent=1 // pred_fallthru
      _
    // Predicated region
    $region74: #{gta_forward.1} parent=1 // pred_check
      _
    $region75: #{gta_forward.1} parent=1 // pred_check_branch
      %127 = sbr.rel (0) target = $region77
    $region76: #{gta_forward.1} parent=1 // pred_region
      _
    $region77: #{gta_forward.1} parent=1 // pred_fallthru
      _
    // Predicated region
    $region78: #{gta_forward.1} parent=1 // pred_check
      _
    $region79: #{gta_forward.1} parent=1 // pred_check_branch
      %129 = sbr.rel (0) target = $region81
    $region80: #{gta_forward.1} parent=1 // pred_region
      _
    $region81: #{gta_forward.1} parent=1 // pred_fallthru
      _
    // Predicated region
    $region82: #{gta_forward.1} parent=1 // pred_check
      _
    $region83: #{gta_forward.1} parent=1 // pred_check_branch
      %131 = sbr.rel (0) target = $region85
    $region84: #{gta_forward.1} parent=1 // pred_region
      _
    $region85: #{gta_forward.1} parent=1 // pred_fallthru
      _
    // Predicated region
    $region86: #{gta_forward.1} parent=1 // pred_check
      _
    $region87: #{gta_forward.1} parent=1 // pred_check_branch
      %133 = sbr.rel (0) target = $region89
    $region88: #{gta_forward.1} parent=1 // pred_region
      _
    $region89: #{gta_forward.1} parent=1 // pred_fallthru
      _
    // Predicated region
    $region90: #{gta_forward.1} parent=1 // pred_check
      _
    $region91: #{gta_forward.1} parent=1 // pred_check_branch
      %135 = sbr.rel (0) target = $region93
    $region92: #{gta_forward.1} parent=1 // pred_region
      _
    $region93: #{gta_forward.1} parent=1 // pred_fallthru
      _
    // Predicated region
    $region94: #{gta_forward.1} parent=1 // pred_check
      _
    $region95: #{gta_forward.1} parent=1 // pred_check_branch
      %137 = sbr.rel (0) target = $region97
    $region96: #{gta_forward.1} parent=1 // pred_region
      _
    $region97: #{gta_forward.1} parent=1 // pred_fallthru
      _
    // Predicated region
    $region98: #{gta_forward.1} parent=1 // pred_check
      _
    $region99: #{gta_forward.1} parent=1 // pred_check_branch
      %139 = sbr.rel (0) target = $region101
    $region100: #{gta_forward.1} parent=1 // pred_region
      _
    $region101: #{gta_forward.1} parent=1 // pred_fallthru
      _
    // Predicated region
    $region102: #{gta_forward.1} parent=1 // pred_check
      _
    $region103: #{gta_forward.1} parent=1 // pred_check_branch
      %141 = sbr.rel (0) target = $region105
    $region104: #{gta_forward.1} parent=1 // pred_region
      _
    $region105: #{gta_forward.1} parent=1 // pred_fallthru
      _
    // Predicated region
    $region106: #{gta_forward.1} parent=1 // pred_check
      _
    $region107: #{gta_forward.1} parent=1 // pred_check_branch
      %143 = sbr.rel (0) target = $region109
    $region108: #{gta_forward.1} parent=1 // pred_region
      _
    $region109: #{gta_forward.1} parent=1 // pred_fallthru
      _
    // Predicated region
    $region110: #{gta_forward.1} parent=1 // pred_check
      _
    $region111: #{gta_forward.1} parent=1 // pred_check_branch
      %145 = sbr.rel (0) target = $region113
    $region112: #{gta_forward.1} parent=1 // pred_region
      _
    $region113: #{gta_forward.1} parent=1 // pred_fallthru
      _
    // Predicated region
    $region114: #{gta_forward.1} parent=1 // pred_check
      _
    $region115: #{gta_forward.1} parent=1 // pred_check_branch
      %147 = sbr.rel (0) target = $region117
    $region116: #{gta_forward.1} parent=1 // pred_region
      _
    $region117: #{gta_forward.1} parent=1 // pred_fallthru
      _
    // Predicated region
    $region118: #{gta_forward.1} parent=1 // pred_check
      _
    $region119: #{gta_forward.1} parent=1 // pred_check_branch
      %149 = sbr.rel (0) target = $region121
    $region120: #{gta_forward.1} parent=1 // pred_region
      _
    $region121: #{gta_forward.1} parent=1 // pred_fallthru
      _
    // Predicated region
    $region122: #{gta_forward.1} parent=1 // pred_check
      _
    $region123: #{gta_forward.1} parent=1 // pred_check_branch
      %151 = sbr.rel (0) target = $region125
    $region124: #{gta_forward.1} parent=1 // pred_region
      _
    $region125: #{gta_forward.1} parent=1 // pred_fallthru
      _
    // Predicated region
    $region126: #{gta_forward.1} parent=1 // pred_check
      _
    $region127: #{gta_forward.1} parent=1 // pred_check_branch
      %153 = sbr.rel (0) target = $region129
    $region128: #{gta_forward.1} parent=1 // pred_region
      _
    $region129: #{gta_forward.1} parent=1 // pred_fallthru
      _
    // Predicated region
    $region130: #{gta_forward.1} parent=1 // pred_check
      _
    $region131: #{gta_forward.1} parent=1 // pred_check_branch
      %155 = sbr.rel (0) target = $region133
    $region132: #{gta_forward.1} parent=1 // pred_region
      _
    $region133: #{gta_forward.1} parent=1 // pred_fallthru
      _
    // Predicated region
    $region134: #{gta_forward.1} parent=1 // pred_check
      _
    $region135: #{gta_forward.1} parent=1 // pred_check_branch
      %157 = sbr.rel (0) target = $region137
    $region136: #{gta_forward.1} parent=1 // pred_region
      _
    $region137: #{gta_forward.1} parent=1 // pred_fallthru
      _
    // Predicated region
    $region138: #{gta_forward.1} parent=1 // pred_check
      _
    $region139: #{gta_forward.1} parent=1 // pred_check_branch
      %159 = sbr.rel (0) target = $region141
    $region140: #{gta_forward.1} parent=1 // pred_region
      _
    $region141: #{gta_forward.1} parent=1 // pred_fallthru
      _
    // Predicated region
    $region142: #{gta_forward.1} parent=1 // pred_check
      _
    $region143: #{gta_forward.1} parent=1 // pred_check_branch
      %161 = sbr.rel (0) target = $region145
    $region144: #{gta_forward.1} parent=1 // pred_region
      _
    $region145: #{gta_forward.1} parent=1 // pred_fallthru
      _
    // Predicated region
    $region146: #{gta_forward.1} parent=1 // pred_check
      _
    $region147: #{gta_forward.1} parent=1 // pred_check_branch
      %163 = sbr.rel (0) target = $region149
    $region148: #{gta_forward.1} parent=1 // pred_region
      _
    $region149: #{gta_forward.1} parent=1 // pred_fallthru
      _
    // Predicated region
    $region150: #{gta_forward.1} parent=1 // pred_check
      _
    $region151: #{gta_forward.1} parent=1 // pred_check_branch
      %165 = sbr.rel (0) target = $region153
    $region152: #{gta_forward.1} parent=1 // pred_region
      _
    $region153: #{gta_forward.1} parent=1 // pred_fallthru
      _
    // Predicated region
    $region154: #{gta_forward.1} parent=1 // pred_check
      _
    $region155: #{gta_forward.1} parent=1 // pred_check_branch
      %167 = sbr.rel (0) target = $region157
    $region156: #{gta_forward.1} parent=1 // pred_region
      _
    $region157: #{gta_forward.1} parent=1 // pred_fallthru
      _
    %v168 = vld [vmem:[%s1] sm:$0xff]
    %v169 = vld [vmem:[%s1 + $0x8] sm:$0xff]
    %v170 = vld [vmem:[%s3] sm:$0xff]
    %v171 = vld [vmem:[%s3 + $0x8] sm:$0xff]
    %v172 = vld [vmem:[%s5] sm:$0x1]
    %v173 = vld [vmem:[%s5 + $0x1] sm:$0x1]
    %v174 = vld [vmem:[%s7] sm:$0xff]
    %v175 = vld [vmem:[%s7 + $0x8] sm:$0xff]
    %v176 = vld [vmem:[%s9] sm:$0x1]
    %v178 = vperm.slane %v176, 0
    %182 = vst [vmem:[#allocation1] ss:$9 sm:$0xff] %v172
    %s183 = scalar_lea.vmem [#allocation1], 1
    %184 = vst [vmem:[%s183] ss:$9 sm:$0xff] %v173
    %v185 = vld [vmem:[#allocation1] sm:$0xff]
    %vm186 = vcmask 130048
    %v187 = vsel %vm186, %v185, 0
    %189 = vmatpush.msra.mxu0 0.0
    %190 = vmatpush.msra.mxu0 0.0
    %191 = vmatpush.msra.mxu0 0.0
    %192 = vmatpush.msra.mxu0 0.0
    %193 = vmatpush.msra.mxu0 0.0
    %194 = vmatpush.msra.mxu0 0.0
    %195 = vmatpush.msra.mxu0 0.0
    %196 = vmatpush.msra.mxu0 0.0
    %197 = vmatpush.msra.mxu0 0.0
    %198 = vmatpush.msra.mxu0 0.0
    %199 = vmatpush.msra.mxu0 0.0
    %200 = vmatpush.msra.mxu0 0.0
    %201 = vmatpush.msra.mxu0 0.0
    %202 = vmatpush.msra.mxu0 0.0
    %203 = vmatpush.msra.mxu0 %v175
    %204 = vmatpush.msra.mxu0 %v174
    %205 = vmatmul.f32.gmra.mxu0 %v187
    %v206 = vpop.f32.mrf.mxu0
    %v207 = vadd.f32 %v178, %v206
    %208 = vdwg.mxu0
    %v209 = vld [vmem:[%s11] sm:$0xf]
    %v210 = vld [vmem:[%s13] sm:$0x1]
    %v212 = vperm.slane %v210, 0
    %vm214 = vcmask 31744
    %v216 = vsel %vm214, %v168, 0
    %v219 = vsel %vm214, %v169, 0
    %vm221 = vcmask 1043456
    %v223 = vsel %vm221, %v209, 0
    %225 = vmatpush.msra.mxu0 0.0
    %226 = vmatpush.msra.mxu0 0.0
    %227 = vmatpush.msra.mxu0 0.0
    %228 = vmatpush.msra.mxu0 0.0
    %229 = vmatpush.msra.mxu0 0.0
    %230 = vmatpush.msra.mxu0 0.0
    %231 = vmatpush.msra.mxu0 0.0
    %232 = vmatpush.msra.mxu0 0.0
    %233 = vmatpush.msra.mxu0 0.0
    %234 = vmatpush.msra.mxu0 0.0
    %235 = vmatpush.msra.mxu0 0.0
    %236 = vmatpush.msra.mxu0 0.0
    %237 = vmatpush.msra.mxu0 0.0
    %238 = vmatpush.msra.mxu0 0.0
    %239 = vmatpush.msra.mxu0 0.0
    %240 = vmatpush.msra.mxu0 %v223
    %241 = vmatmul.f32.gmra.mxu0 %v216
    %v242 = vpop.f32.mrf.mxu0
    %v243 = vadd.f32 %v212, %v242
    %244 = vmatmul.f32.gmra.mxu0 %v219
    %v245 = vpop.f32.mrf.mxu0
    %v246 = vadd.f32 %v212, %v245
    %247 = vdwg.mxu0
    %v249 = vrot.slane %v207, 1
    %v250 = vperm.slane %v207, 0
    %v251 = vperm.slane %v249, 0
    %v254 = vadd.f32 %v243, %v250
    %v255 = vadd.f32 %v246, %v251
    %v256 = vld [vmem:[%s31] sm:$0x1]
    %v257 = vld [vmem:[%s33] sm:$0x1]
    %vm258 = vcmask 64512
    %v259 = vsel %vm258, %v254, 0.0
    %260 = vadd.xlane.f32.xlu0 %v259
    %v261 = vpop.xlane.xlu0 %260
    %v262 = vsel %vm258, %v255, 0.0
    %263 = vadd.xlane.f32.xlu0 %v262
    %v264 = vpop.xlane.xlu0 %263
    %v265 = vrcp.pop 8.0
    %v266 = vmul.f32 8.0, %v265
    %v267 = vsub.f32 1.0, %v266
    %v268 = vmul.f32 %v265, %v267
    %v269 = vadd.f32 %v265, %v268
    %vm270 = vweird.f32 %v265
    %v271 = vsel %vm270, %v265, %v269
    %v272 = vmul.f32 %v261, %v271
    %v273 = vmul.f32 %v264, %v271
    %v274 = vsub.f32 %v254, %v272
    %v275 = vsub.f32 %v255, %v273
    %v276 = vmul.f32 %v274, %v274
    %v277 = vmul.f32 %v275, %v275
    %v278 = vsel %vm258, %v276, 0.0
    %279 = vadd.xlane.f32.xlu0 %v278
    %v280 = vpop.xlane.xlu0 %279
    %v281 = vsel %vm258, %v277, 0.0
    %282 = vadd.xlane.f32.xlu0 %v281
    %v283 = vpop.xlane.xlu0 %282
    %v284 = vmul.f32 %v280, %v271
    %v285 = vmul.f32 %v283, %v271
    %v286 = vadd.f32 %v284, 1e-05
    %v287 = vadd.f32 %v285, 1e-05
    %v288 = vrsqrt.pop %v286
    %v289 = vmul.f32 %v288, %v286
    %v290 = vmul.f32 %v289, %v288
    %v291 = vmul.f32 0.5, %v290
    %v292 = vsub.f32 1.5, %v291
    %v293 = vmul.f32 %v288, %v292
    %vm294 = vweird.f32 %v286
    %vm295 = vweird.f32 %v288
    %vm296 = vmor %vm294, %vm295
    %v297 = vsel %vm296, %v288, %v293
    %v298 = vrsqrt.pop %v287
    %v299 = vmul.f32 %v298, %v287
    %v300 = vmul.f32 %v299, %v298
    %v301 = vmul.f32 0.5, %v300
    %v302 = vsub.f32 1.5, %v301
    %v303 = vmul.f32 %v298, %v302
    %vm304 = vweird.f32 %v287
    %vm305 = vweird.f32 %v298
    %vm306 = vmor %vm304, %vm305
    %v307 = vsel %vm306, %v298, %v303
    %v308 = vmul.f32 %v274, %v297
    %v309 = vmul.f32 %v275, %v307
    %v311 = vperm.slane %v256, 0
    %v313 = vmul.f32 %v308, %v311
    %v314 = vmul.f32 %v309, %v311
    %v316 = vperm.slane %v257, 0
    %v318 = vadd.f32 %v313, %v316
    %v319 = vadd.f32 %v314, %v316
    %v320 = vld [vmem:[%s35] sm:$0xff]
    %v322 = vsel %vm258, %v318, 0
    %v325 = vsel %vm258, %v319, 0
    %327 = vmatpush.msra.mxu0 0.0
    %328 = vmatpush.msra.mxu0 0.0
    %329 = vmatpush.msra.mxu0 0.0
    %330 = vmatpush.msra.mxu0 0.0
    %331 = vmatpush.msra.mxu0 0.0
    %332 = vmatpush.msra.mxu0 0.0
    %333 = vmatpush.msra.mxu0 0.0
    %334 = vmatpush.msra.mxu0 0.0
    %335 = vmatpush.msra.mxu0 0.0
    %336 = vmatpush.msra.mxu0 0.0
    %337 = vmatpush.msra.mxu0 0.0
    %338 = vmatpush.msra.mxu0 0.0
    %339 = vmatpush.msra.mxu0 0.0
    %340 = vmatpush.msra.mxu0 0.0
    %341 = vmatpush.msra.mxu0 0.0
    %342 = vmatpush.msra.mxu0 %v320
    %343 = vmatmul.f32.gmra.mxu0 %v322
    %v344 = vpop.f32.mrf.mxu0
    %v345 = vadd.f32 0.0, %v344
    %346 = vmatmul.f32.gmra.mxu0 %v325
    %v347 = vpop.f32.mrf.mxu0
    %v348 = vadd.f32 0.0, %v347
    %349 = vdwg.mxu0
    %v350 = vld [vmem:[%s37] sm:$0xff]
    %351 = vmatpush.msra.mxu0 0.0
    %352 = vmatpush.msra.mxu0 0.0
    %353 = vmatpush.msra.mxu0 0.0
    %354 = vmatpush.msra.mxu0 0.0
    %355 = vmatpush.msra.mxu0 0.0
    %356 = vmatpush.msra.mxu0 0.0
    %357 = vmatpush.msra.mxu0 0.0
    %358 = vmatpush.msra.mxu0 0.0
    %359 = vmatpush.msra.mxu0 0.0
    %360 = vmatpush.msra.mxu0 0.0
    %361 = vmatpush.msra.mxu0 0.0
    %362 = vmatpush.msra.mxu0 0.0
    %363 = vmatpush.msra.mxu0 0.0
    %364 = vmatpush.msra.mxu0 0.0
    %365 = vmatpush.msra.mxu0 0.0
    %366 = vmatpush.msra.mxu0 %v350
    %367 = vmatmul.f32.gmra.mxu0 %v322
    %v368 = vpop.f32.mrf.mxu0
    %v369 = vadd.f32 0.0, %v368
    %370 = vmatmul.f32.gmra.mxu0 %v325
    %v371 = vpop.f32.mrf.mxu0
    %v372 = vadd.f32 0.0, %v371
    %373 = vdwg.mxu0
    %v374 = vld [vmem:[%s39] sm:$0xff]
    %375 = vmatpush.msra.mxu0 0.0
    %376 = vmatpush.msra.mxu0 0.0
    %377 = vmatpush.msra.mxu0 0.0
    %378 = vmatpush.msra.mxu0 0.0
    %379 = vmatpush.msra.mxu0 0.0
    %380 = vmatpush.msra.mxu0 0.0
    %381 = vmatpush.msra.mxu0 0.0
    %382 = vmatpush.msra.mxu0 0.0
    %383 = vmatpush.msra.mxu0 0.0
    %384 = vmatpush.msra.mxu0 0.0
    %385 = vmatpush.msra.mxu0 0.0
    %386 = vmatpush.msra.mxu0 0.0
    %387 = vmatpush.msra.mxu0 0.0
    %388 = vmatpush.msra.mxu0 0.0
    %389 = vmatpush.msra.mxu0 0.0
    %390 = vmatpush.msra.mxu0 %v374
    %391 = vmatmul.f32.gmra.mxu0 %v322
    %v392 = vpop.f32.mrf.mxu0
    %v393 = vadd.f32 0.0, %v392
    %394 = vmatmul.f32.gmra.mxu0 %v325
    %v395 = vpop.f32.mrf.mxu0
    %v396 = vadd.f32 0.0, %v395
    %397 = vdwg.mxu0
    %v398 = vlaneseq
    %v399 = vshrl.u32 %v398, 7
    %v400 = vlaneseq
    %v401 = vand.u32 %v400, 127
    %vm402 = vcmp.eq.s32.totalorder %v399, %v401
    %v403 = vmul.f32 %v345, 0.5
    %v405 = vsel %vm214, %v403, 0
    %v408 = vsel %vm214, %v369, 0
    %410 = vmatpush.xpose.msra.mxu0 0.0
    %411 = vmatpush.xpose.msra.mxu0 0.0
    %412 = vmatpush.xpose.msra.mxu0 0.0
    %413 = vmatpush.xpose.msra.mxu0 0.0
    %414 = vmatpush.xpose.msra.mxu0 0.0
    %415 = vmatpush.xpose.msra.mxu0 0.0
    %416 = vmatpush.xpose.msra.mxu0 0.0
    %417 = vmatpush.xpose.msra.mxu0 0.0
    %418 = vmatpush.xpose.msra.mxu0 0.0
    %419 = vmatpush.xpose.msra.mxu0 0.0
    %420 = vmatpush.xpose.msra.mxu0 0.0
    %421 = vmatpush.xpose.msra.mxu0 0.0
    %422 = vmatpush.xpose.msra.mxu0 0.0
    %423 = vmatpush.xpose.msra.mxu0 0.0
    %424 = vmatpush.xpose.msra.mxu0 0.0
    %425 = vmatpush.xpose.msra.mxu0 %v408
    %426 = vmatmul.f32.gmra.mxu0 %v405
    %v427 = vpop.f32.mrf.mxu0
    %v428 = vadd.f32 0.0, %v427
    %429 = vdwg.mxu0
    %v430 = vsel %vm402, -1e+09, %v428
    %v431 = vsel %vm258, %v430, -inf
    %432 = vmax.xlane.f32.xlu0 %v431
    %v433 = vpop.xlane.xlu0 %432
    %v434 = vsub.f32 %v430, %v433
    %v435 = vmul.f32 %v434, 1.442695
    %v436 = vpow.pop %v435
    %v437 = vsel %vm258, %v436, 0.0
    %438 = vadd.xlane.f32.xlu0 %v437
    %v439 = vpop.xlane.xlu0 %438
    %v440 = vrcp.pop %v439
    %v441 = vmul.f32 %v439, %v440
    %v442 = vsub.f32 1.0, %v441
    %v443 = vmul.f32 %v440, %v442
    %v444 = vadd.f32 %v440, %v443
    %vm445 = vweird.f32 %v439
    %vm446 = vweird.f32 %v440
    %vm447 = vmor %vm445, %vm446
    %v448 = vsel %vm447, %v440, %v444
    %v449 = vand.u32 2147483647, %v439
    %vm450 = vcmp.eq.f32.partialorder %v449, 8.507059e+37
    %v451 = vand.u32 %v439, 2147483648
    %v452 = vor.u32 1.1754944e-38, %v451
    %v453 = vsel %vm450, %v452, %v448
    %v454 = vmul.f32 %v436, %v453
    %455 = vst.msk [vmem:[#allocation3] sm:$0xff] %vm258, %v454
    %v457 = vsel %vm258, %v454, 0
    %459 = vmatpush.msra.mxu0 0.0
    %460 = vmatpush.msra.mxu0 0.0
    %461 = vmatpush.msra.mxu0 0.0
    %462 = vmatpush.msra.mxu0 0.0
    %463 = vmatpush.msra.mxu0 0.0
    %464 = vmatpush.msra.mxu0 0.0
    %465 = vmatpush.msra.mxu0 0.0
    %466 = vmatpush.msra.mxu0 0.0
    %467 = vmatpush.msra.mxu0 0.0
    %468 = vmatpush.msra.mxu0 0.0
    %469 = vmatpush.msra.mxu0 0.0
    %470 = vmatpush.msra.mxu0 0.0
    %471 = vmatpush.msra.mxu0 0.0
    %472 = vmatpush.msra.mxu0 0.0
    %473 = vmatpush.msra.mxu0 0.0
    %474 = vmatpush.msra.mxu0 %v393
    %475 = vmatmul.f32.gmra.mxu0 %v457
    %v476 = vpop.f32.mrf.mxu0
    %v477 = vadd.f32 0.0, %v476
    %478 = vdwg.mxu0
    %479 = vst.msk [vmem:[#allocation2] sm:$0xff] %vm214, %v477
    %480 = vrot.lane.b32.xlu0 %v403, 124
    %v481 = vpop.permute.xlu0 %480
    %482 = vrot.lane.b32.xlu0 %v369, 124
    %v483 = vpop.permute.xlu0 %482
    %v484 = vsel %vm214, %v481, 0
    %v486 = vsel %vm214, %v483, 0
    %488 = vmatpush.xpose.msra.mxu0 0.0
    %489 = vmatpush.xpose.msra.mxu0 0.0
    %490 = vmatpush.xpose.msra.mxu0 0.0
    %491 = vmatpush.xpose.msra.mxu0 0.0
    %492 = vmatpush.xpose.msra.mxu0 0.0
    %493 = vmatpush.xpose.msra.mxu0 0.0
    %494 = vmatpush.xpose.msra.mxu0 0.0
    %495 = vmatpush.xpose.msra.mxu0 0.0
    %496 = vmatpush.xpose.msra.mxu0 0.0
    %497 = vmatpush.xpose.msra.mxu0 0.0
    %498 = vmatpush.xpose.msra.mxu0 0.0
    %499 = vmatpush.xpose.msra.mxu0 0.0
    %500 = vmatpush.xpose.msra.mxu0 0.0
    %501 = vmatpush.xpose.msra.mxu0 0.0
    %502 = vmatpush.xpose.msra.mxu0 0.0
    %503 = vmatpush.xpose.msra.mxu0 %v486
    %504 = vmatmul.f32.gmra.mxu0 %v484
    %v505 = vpop.f32.mrf.mxu0
    %v506 = vadd.f32 0.0, %v505
    %507 = vdwg.mxu0
    %v508 = vsel %vm402, -1e+09, %v506
    %v509 = vsel %vm258, %v508, -inf
    %510 = vmax.xlane.f32.xlu0 %v509
    %v511 = vpop.xlane.xlu0 %510
    %v512 = vsub.f32 %v508, %v511
    %v513 = vmul.f32 %v512, 1.442695
    %v514 = vpow.pop %v513
    %v515 = vsel %vm258, %v514, 0.0
    %516 = vadd.xlane.f32.xlu0 %v515
    %v517 = vpop.xlane.xlu0 %516
    %v518 = vrcp.pop %v517
    %v519 = vmul.f32 %v517, %v518
    %v520 = vsub.f32 1.0, %v519
    %v521 = vmul.f32 %v518, %v520
    %v522 = vadd.f32 %v518, %v521
    %vm523 = vweird.f32 %v517
    %vm524 = vweird.f32 %v518
    %vm525 = vmor %vm523, %vm524
    %v526 = vsel %vm525, %v518, %v522
    %v527 = vand.u32 2147483647, %v517
    %vm528 = vcmp.eq.f32.partialorder %v527, 8.507059e+37
    %v529 = vand.u32 %v517, 2147483648
    %v530 = vor.u32 1.1754944e-38, %v529
    %v531 = vsel %vm528, %v530, %v526
    %v532 = vmul.f32 %v514, %v531
    %s533 = scalar_lea.vmem [#allocation3], 8
    %534 = vst.msk [vmem:[%s533] sm:$0xff] %vm258, %v532
    %536 = vrot.lane.b32.xlu0 %v393, 124
    %v537 = vpop.permute.xlu0 %536
    %v540 = vsel %vm258, %v532, 0
    %542 = vmatpush.msra.mxu0 0.0
    %543 = vmatpush.msra.mxu0 0.0
    %544 = vmatpush.msra.mxu0 0.0
    %545 = vmatpush.msra.mxu0 0.0
    %546 = vmatpush.msra.mxu0 0.0
    %547 = vmatpush.msra.mxu0 0.0
    %548 = vmatpush.msra.mxu0 0.0
    %549 = vmatpush.msra.mxu0 0.0
    %550 = vmatpush.msra.mxu0 0.0
    %551 = vmatpush.msra.mxu0 0.0
    %552 = vmatpush.msra.mxu0 0.0
    %553 = vmatpush.msra.mxu0 0.0
    %554 = vmatpush.msra.mxu0 0.0
    %555 = vmatpush.msra.mxu0 0.0
    %556 = vmatpush.msra.mxu0 0.0
    %557 = vmatpush.msra.mxu0 %v537
    %558 = vmatmul.f32.gmra.mxu0 %v540
    %v559 = vpop.f32.mrf.mxu0
    %v560 = vadd.f32 0.0, %v559
    %561 = vdwg.mxu0
    %563 = vrot.lane.b32.xlu0 %v560, 4
    %v564 = vpop.permute.xlu0 %563
    %vm566 = vcmask 64544
    %567 = vst.msk [vmem:[#allocation2] sm:$0xff] %vm566, %v564
    %v568 = vmul.f32 %v348, 0.5
    %v570 = vsel %vm214, %v568, 0
    %v573 = vsel %vm214, %v372, 0
    %575 = vmatpush.xpose.msra.mxu0 0.0
    %576 = vmatpush.xpose.msra.mxu0 0.0
    %577 = vmatpush.xpose.msra.mxu0 0.0
    %578 = vmatpush.xpose.msra.mxu0 0.0
    %579 = vmatpush.xpose.msra.mxu0 0.0
    %580 = vmatpush.xpose.msra.mxu0 0.0
    %581 = vmatpush.xpose.msra.mxu0 0.0
    %582 = vmatpush.xpose.msra.mxu0 0.0
    %583 = vmatpush.xpose.msra.mxu0 0.0
    %584 = vmatpush.xpose.msra.mxu0 0.0
    %585 = vmatpush.xpose.msra.mxu0 0.0
    %586 = vmatpush.xpose.msra.mxu0 0.0
    %587 = vmatpush.xpose.msra.mxu0 0.0
    %588 = vmatpush.xpose.msra.mxu0 0.0
    %589 = vmatpush.xpose.msra.mxu0 0.0
    %590 = vmatpush.xpose.msra.mxu0 %v573
    %591 = vmatmul.f32.gmra.mxu0 %v570
    %v592 = vpop.f32.mrf.mxu0
    %v593 = vadd.f32 0.0, %v592
    %594 = vdwg.mxu0
    %v595 = vsel %vm402, -1e+09, %v593
    %v596 = vsel %vm258, %v595, -inf
    %597 = vmax.xlane.f32.xlu0 %v596
    %v598 = vpop.xlane.xlu0 %597
    %v599 = vsub.f32 %v595, %v598
    %v600 = vmul.f32 %v599, 1.442695
    %v601 = vpow.pop %v600
    %v602 = vsel %vm258, %v601, 0.0
    %603 = vadd.xlane.f32.xlu0 %v602
    %v604 = vpop.xlane.xlu0 %603
    %v605 = vrcp.pop %v604
    %v606 = vmul.f32 %v604, %v605
    %v607 = vsub.f32 1.0, %v606
    %v608 = vmul.f32 %v605, %v607
    %v609 = vadd.f32 %v605, %v608
    %vm610 = vweird.f32 %v604
    %vm611 = vweird.f32 %v605
    %vm612 = vmor %vm610, %vm611
    %v613 = vsel %vm612, %v605, %v609
    %v614 = vand.u32 2147483647, %v604
    %vm615 = vcmp.eq.f32.partialorder %v614, 8.507059e+37
    %v616 = vand.u32 %v604, 2147483648
    %v617 = vor.u32 1.1754944e-38, %v616
    %v618 = vsel %vm615, %v617, %v613
    %v619 = vmul.f32 %v601, %v618
    %s620 = scalar_lea.vmem [#allocation3], 16
    %621 = vst.msk [vmem:[%s620] sm:$0xff] %vm258, %v619
    %v623 = vsel %vm258, %v619, 0
    %625 = vmatpush.msra.mxu0 0.0
    %626 = vmatpush.msra.mxu0 0.0
    %627 = vmatpush.msra.mxu0 0.0
    %628 = vmatpush.msra.mxu0 0.0
    %629 = vmatpush.msra.mxu0 0.0
    %630 = vmatpush.msra.mxu0 0.0
    %631 = vmatpush.msra.mxu0 0.0
    %632 = vmatpush.msra.mxu0 0.0
    %633 = vmatpush.msra.mxu0 0.0
    %634 = vmatpush.msra.mxu0 0.0
    %635 = vmatpush.msra.mxu0 0.0
    %636 = vmatpush.msra.mxu0 0.0
    %637 = vmatpush.msra.mxu0 0.0
    %638 = vmatpush.msra.mxu0 0.0
    %639 = vmatpush.msra.mxu0 0.0
    %640 = vmatpush.msra.mxu0 %v396
    %641 = vmatmul.f32.gmra.mxu0 %v623
    %v642 = vpop.f32.mrf.mxu0
    %v643 = vadd.f32 0.0, %v642
    %644 = vdwg.mxu0
    %645 = vst.msk [vmem:[#allocation2 + $0x8] sm:$0xff] %vm214, %v643
    %646 = vrot.lane.b32.xlu0 %v568, 124
    %v647 = vpop.permute.xlu0 %646
    %648 = vrot.lane.b32.xlu0 %v372, 124
    %v649 = vpop.permute.xlu0 %648
    %v650 = vsel %vm214, %v647, 0
    %v652 = vsel %vm214, %v649, 0
    %654 = vmatpush.xpose.msra.mxu0 0.0
    %655 = vmatpush.xpose.msra.mxu0 0.0
    %656 = vmatpush.xpose.msra.mxu0 0.0
    %657 = vmatpush.xpose.msra.mxu0 0.0
    %658 = vmatpush.xpose.msra.mxu0 0.0
    %659 = vmatpush.xpose.msra.mxu0 0.0
    %660 = vmatpush.xpose.msra.mxu0 0.0
    %661 = vmatpush.xpose.msra.mxu0 0.0
    %662 = vmatpush.xpose.msra.mxu0 0.0
    %663 = vmatpush.xpose.msra.mxu0 0.0
    %664 = vmatpush.xpose.msra.mxu0 0.0
    %665 = vmatpush.xpose.msra.mxu0 0.0
    %666 = vmatpush.xpose.msra.mxu0 0.0
    %667 = vmatpush.xpose.msra.mxu0 0.0
    %668 = vmatpush.xpose.msra.mxu0 0.0
    %669 = vmatpush.xpose.msra.mxu0 %v652
    %670 = vmatmul.f32.gmra.mxu0 %v650
    %v671 = vpop.f32.mrf.mxu0
    %v672 = vadd.f32 0.0, %v671
    %673 = vdwg.mxu0
    %v674 = vsel %vm402, -1e+09, %v672
    %v675 = vsel %vm258, %v674, -inf
    %676 = vmax.xlane.f32.xlu0 %v675
    %v677 = vpop.xlane.xlu0 %676
    %v678 = vsub.f32 %v674, %v677
    %v679 = vmul.f32 %v678, 1.442695
    %v680 = vpow.pop %v679
    %v681 = vsel %vm258, %v680, 0.0
    %682 = vadd.xlane.f32.xlu0 %v681
    %v683 = vpop.xlane.xlu0 %682
    %v684 = vrcp.pop %v683
    %v685 = vmul.f32 %v683, %v684
    %v686 = vsub.f32 1.0, %v685
    %v687 = vmul.f32 %v684, %v686
    %v688 = vadd.f32 %v684, %v687
    %vm689 = vweird.f32 %v683
    %vm690 = vweird.f32 %v684
    %vm691 = vmor %vm689, %vm690
    %v692 = vsel %vm691, %v684, %v688
    %v693 = vand.u32 2147483647, %v683
    %vm694 = vcmp.eq.f32.partialorder %v693, 8.507059e+37
    %v695 = vand.u32 %v683, 2147483648
    %v696 = vor.u32 1.1754944e-38, %v695
    %v697 = vsel %vm694, %v696, %v692
    %v698 = vmul.f32 %v680, %v697
    %s699 = scalar_lea.vmem [#allocation3], 24
    %700 = vst.msk [vmem:[%s699] sm:$0xff] %vm258, %v698
    %702 = vrot.lane.b32.xlu0 %v396, 124
    %v703 = vpop.permute.xlu0 %702
    %v706 = vsel %vm258, %v698, 0
    %708 = vmatpush.msra.mxu0 0.0
    %709 = vmatpush.msra.mxu0 0.0
    %710 = vmatpush.msra.mxu0 0.0
    %711 = vmatpush.msra.mxu0 0.0
    %712 = vmatpush.msra.mxu0 0.0
    %713 = vmatpush.msra.mxu0 0.0
    %714 = vmatpush.msra.mxu0 0.0
    %715 = vmatpush.msra.mxu0 0.0
    %716 = vmatpush.msra.mxu0 0.0
    %717 = vmatpush.msra.mxu0 0.0
    %718 = vmatpush.msra.mxu0 0.0
    %719 = vmatpush.msra.mxu0 0.0
    %720 = vmatpush.msra.mxu0 0.0
    %721 = vmatpush.msra.mxu0 0.0
    %722 = vmatpush.msra.mxu0 0.0
    %723 = vmatpush.msra.mxu0 %v703
    %724 = vmatmul.f32.gmra.mxu0 %v706
    %v725 = vpop.f32.mrf.mxu0
    %v726 = vadd.f32 0.0, %v725
    %727 = vdwg.mxu0
    %729 = vrot.lane.b32.xlu0 %v726, 4
    %v730 = vpop.permute.xlu0 %729
    %732 = vst.msk [vmem:[#allocation2 + $0x8] sm:$0xff] %vm566, %v730
    %v733 = vld [vmem:[#allocation2] sm:$0xff]
    %v734 = vld [vmem:[#allocation2 + $0x8] sm:$0xff]
    %v735 = vld [vmem:[%s41] sm:$0xff]
    %v737 = vsel %vm258, %v733, 0
    %v740 = vsel %vm258, %v734, 0
    %742 = vmatpush.msra.mxu0 0.0
    %743 = vmatpush.msra.mxu0 0.0
    %744 = vmatpush.msra.mxu0 0.0
    %745 = vmatpush.msra.mxu0 0.0
    %746 = vmatpush.msra.mxu0 0.0
    %747 = vmatpush.msra.mxu0 0.0
    %748 = vmatpush.msra.mxu0 0.0
    %749 = vmatpush.msra.mxu0 0.0
    %750 = vmatpush.msra.mxu0 0.0
    %751 = vmatpush.msra.mxu0 0.0
    %752 = vmatpush.msra.mxu0 0.0
    %753 = vmatpush.msra.mxu0 0.0
    %754 = vmatpush.msra.mxu0 0.0
    %755 = vmatpush.msra.mxu0 0.0
    %756 = vmatpush.msra.mxu0 0.0
    %757 = vmatpush.msra.mxu0 %v735
    %758 = vmatmul.f32.gmra.mxu0 %v737
    %v759 = vpop.f32.mrf.mxu0
    %v760 = vadd.f32 %v254, %v759
    %761 = vmatmul.f32.gmra.mxu0 %v740
    %v762 = vpop.f32.mrf.mxu0
    %v763 = vadd.f32 %v255, %v762
    %764 = vdwg.mxu0
    %v765 = vld [vmem:[%s43] sm:$0x1]
    %v766 = vld [vmem:[%s45] sm:$0x1]
    %v767 = vsel %vm258, %v760, 0.0
    %768 = vadd.xlane.f32.xlu0 %v767
    %v769 = vpop.xlane.xlu0 %768
    %v770 = vsel %vm258, %v763, 0.0
    %771 = vadd.xlane.f32.xlu0 %v770
    %v772 = vpop.xlane.xlu0 %771
    %v773 = vmul.f32 %v769, %v271
    %v774 = vmul.f32 %v772, %v271
    %v775 = vsub.f32 %v760, %v773
    %v776 = vsub.f32 %v763, %v774
    %v777 = vmul.f32 %v775, %v775
    %v778 = vmul.f32 %v776, %v776
    %v779 = vsel %vm258, %v777, 0.0
    %780 = vadd.xlane.f32.xlu0 %v779
    %v781 = vpop.xlane.xlu0 %780
    %v782 = vsel %vm258, %v778, 0.0
    %783 = vadd.xlane.f32.xlu0 %v782
    %v784 = vpop.xlane.xlu0 %783
    %v785 = vmul.f32 %v781, %v271
    %v786 = vmul.f32 %v784, %v271
    %v787 = vadd.f32 %v785, 1e-06
    %v788 = vadd.f32 %v786, 1e-06
    %v789 = vrsqrt.pop %v787
    %v790 = vmul.f32 %v789, %v787
    %v791 = vmul.f32 %v790, %v789
    %v792 = vmul.f32 0.5, %v791
    %v793 = vsub.f32 1.5, %v792
    %v794 = vmul.f32 %v789, %v793
    %vm795 = vweird.f32 %v787
    %vm796 = vweird.f32 %v789
    %vm797 = vmor %vm795, %vm796
    %v798 = vsel %vm797, %v789, %v794
    %v799 = vrsqrt.pop %v788
    %v800 = vmul.f32 %v799, %v788
    %v801 = vmul.f32 %v800, %v799
    %v802 = vmul.f32 0.5, %v801
    %v803 = vsub.f32 1.5, %v802
    %v804 = vmul.f32 %v799, %v803
    %vm805 = vweird.f32 %v788
    %vm806 = vweird.f32 %v799
    %vm807 = vmor %vm805, %vm806
    %v808 = vsel %vm807, %v799, %v804
    %v809 = vmul.f32 %v775, %v798
    %v810 = vmul.f32 %v776, %v808
    %v812 = vperm.slane %v765, 0
    %v814 = vmul.f32 %v809, %v812
    %v815 = vmul.f32 %v810, %v812
    %v817 = vperm.slane %v766, 0
    %v819 = vadd.f32 %v814, %v817
    %v820 = vadd.f32 %v815, %v817
    %v821 = vld [vmem:[%s47] sm:$0xff]
    %v822 = vld [vmem:[%s49] sm:$0x1]
    %v824 = vperm.slane %v822, 0
    %v827 = vsel %vm258, %v819, 0
    %v830 = vsel %vm258, %v820, 0
    %832 = vmatpush.msra.mxu0 0.0
    %833 = vmatpush.msra.mxu0 0.0
    %834 = vmatpush.msra.mxu0 0.0
    %835 = vmatpush.msra.mxu0 0.0
    %836 = vmatpush.msra.mxu0 0.0
    %837 = vmatpush.msra.mxu0 0.0
    %838 = vmatpush.msra.mxu0 0.0
    %839 = vmatpush.msra.mxu0 0.0
    %840 = vmatpush.msra.mxu0 0.0
    %841 = vmatpush.msra.mxu0 0.0
    %842 = vmatpush.msra.mxu0 0.0
    %843 = vmatpush.msra.mxu0 0.0
    %844 = vmatpush.msra.mxu0 0.0
    %845 = vmatpush.msra.mxu0 0.0
    %846 = vmatpush.msra.mxu0 0.0
    %847 = vmatpush.msra.mxu0 %v821
    %848 = vmatmul.f32.gmra.mxu0 %v827
    %v849 = vpop.f32.mrf.mxu0
    %v850 = vadd.f32 %v824, %v849
    %851 = vmatmul.f32.gmra.mxu0 %v830
    %v852 = vpop.f32.mrf.mxu0
    %v853 = vadd.f32 %v824, %v852
    %854 = vdwg.mxu0
    %v855 = vmax.f32 %v850, 0.0
    %v856 = vmax.f32 %v853, 0.0
    %v857 = vld [vmem:[%s51] sm:$0xff]
    %v858 = vld [vmem:[%s51 + $0x8] sm:$0xff]
    %v859 = vld [vmem:[%s53] sm:$0x1]
    %v861 = vperm.slane %v859, 0
    %v864 = vsel %vm186, %v855, 0
    %v867 = vsel %vm186, %v856, 0
    %869 = vmatpush.msra.mxu0 0.0
    %870 = vmatpush.msra.mxu0 0.0
    %871 = vmatpush.msra.mxu0 0.0
    %872 = vmatpush.msra.mxu0 0.0
    %873 = vmatpush.msra.mxu0 0.0
    %874 = vmatpush.msra.mxu0 0.0
    %875 = vmatpush.msra.mxu0 0.0
    %876 = vmatpush.msra.mxu0 0.0
    %877 = vmatpush.msra.mxu0 0.0
    %878 = vmatpush.msra.mxu0 0.0
    %879 = vmatpush.msra.mxu0 0.0
    %880 = vmatpush.msra.mxu0 0.0
    %881 = vmatpush.msra.mxu0 0.0
    %882 = vmatpush.msra.mxu0 0.0
    %883 = vmatpush.msra.mxu0 %v858
    %884 = vmatpush.msra.mxu0 %v857
    %885 = vmatmul.f32.gmra.mxu0 %v864
    %v886 = vpop.f32.mrf.mxu0
    %v887 = vadd.f32 %v861, %v886
    %888 = vmatmul.f32.gmra.mxu0 %v867
    %v889 = vpop.f32.mrf.mxu0
    %v890 = vadd.f32 %v861, %v889
    %891 = vdwg.mxu0
    %v892 = vadd.f32 %v887, %v760
    %v893 = vadd.f32 %v890, %v763
    %v894 = vld [vmem:[%s15] sm:$0xf]
    %v895 = vld [vmem:[%s17] sm:$0x1]
    %v897 = vperm.slane %v895, 0
    %v900 = vsel %vm214, %v170, 0
    %v903 = vsel %vm214, %v171, 0
    %v906 = vsel %vm221, %v894, 0
    %908 = vmatpush.msra.mxu0 0.0
    %909 = vmatpush.msra.mxu0 0.0
    %910 = vmatpush.msra.mxu0 0.0
    %911 = vmatpush.msra.mxu0 0.0
    %912 = vmatpush.msra.mxu0 0.0
    %913 = vmatpush.msra.mxu0 0.0
    %914 = vmatpush.msra.mxu0 0.0
    %915 = vmatpush.msra.mxu0 0.0
    %916 = vmatpush.msra.mxu0 0.0
    %917 = vmatpush.msra.mxu0 0.0
    %918 = vmatpush.msra.mxu0 0.0
    %919 = vmatpush.msra.mxu0 0.0
    %920 = vmatpush.msra.mxu0 0.0
    %921 = vmatpush.msra.mxu0 0.0
    %922 = vmatpush.msra.mxu0 0.0
    %923 = vmatpush.msra.mxu0 %v906
    %924 = vmatmul.f32.gmra.mxu0 %v900
    %v925 = vpop.f32.mrf.mxu0
    %v926 = vadd.f32 %v897, %v925
    %927 = vmatmul.f32.gmra.mxu0 %v903
    %v928 = vpop.f32.mrf.mxu0
    %v929 = vadd.f32 %v897, %v928
    %930 = vdwg.mxu0
    %v931 = vld [vmem:[%s19] sm:$0xff]
    %v932 = vld [vmem:[%s21] sm:$0x1]
    %v934 = vperm.slane %v932, 0
    %v937 = vsel %vm258, %v892, 0
    %v940 = vsel %vm258, %v893, 0
    %942 = vmatpush.msra.mxu0 0.0
    %943 = vmatpush.msra.mxu0 0.0
    %944 = vmatpush.msra.mxu0 0.0
    %945 = vmatpush.msra.mxu0 0.0
    %946 = vmatpush.msra.mxu0 0.0
    %947 = vmatpush.msra.mxu0 0.0
    %948 = vmatpush.msra.mxu0 0.0
    %949 = vmatpush.msra.mxu0 0.0
    %950 = vmatpush.msra.mxu0 0.0
    %951 = vmatpush.msra.mxu0 0.0
    %952 = vmatpush.msra.mxu0 0.0
    %953 = vmatpush.msra.mxu0 0.0
    %954 = vmatpush.msra.mxu0 0.0
    %955 = vmatpush.msra.mxu0 0.0
    %956 = vmatpush.msra.mxu0 0.0
    %957 = vmatpush.msra.mxu0 %v931
    %958 = vmatmul.f32.gmra.mxu0 %v937
    %v959 = vpop.f32.mrf.mxu0
    %v960 = vadd.f32 %v934, %v959
    %961 = vmatmul.f32.gmra.mxu0 %v940
    %v962 = vpop.f32.mrf.mxu0
    %v963 = vadd.f32 %v934, %v962
    %964 = vdwg.mxu0
    %v965 = vld [vmem:[%s23] sm:$0xff]
    %v967 = vsel %vm258, %v926, 0
    %v970 = vsel %vm258, %v929, 0
    %972 = vmatpush.msra.mxu0 0.0
    %973 = vmatpush.msra.mxu0 0.0
    %974 = vmatpush.msra.mxu0 0.0
    %975 = vmatpush.msra.mxu0 0.0
    %976 = vmatpush.msra.mxu0 0.0
    %977 = vmatpush.msra.mxu0 0.0
    %978 = vmatpush.msra.mxu0 0.0
    %979 = vmatpush.msra.mxu0 0.0
    %980 = vmatpush.msra.mxu0 0.0
    %981 = vmatpush.msra.mxu0 0.0
    %982 = vmatpush.msra.mxu0 0.0
    %983 = vmatpush.msra.mxu0 0.0
    %984 = vmatpush.msra.mxu0 0.0
    %985 = vmatpush.msra.mxu0 0.0
    %986 = vmatpush.msra.mxu0 0.0
    %987 = vmatpush.msra.mxu0 %v965
    %988 = vmatmul.f32.gmra.mxu0 %v967
    %v989 = vpop.f32.mrf.mxu0
    %v990 = vadd.f32 0.0, %v989
    %991 = vmatmul.f32.gmra.mxu0 %v970
    %v992 = vpop.f32.mrf.mxu0
    %v993 = vadd.f32 0.0, %v992
    %994 = vdwg.mxu0
    %v995 = vadd.f32 %v960, %v990
    %v996 = vadd.f32 %v963, %v993
    %v997 = vld [vmem:[%s25] sm:$0x1]
    %v999 = vperm.slane %v997, 0
    %v1001 = vadd.f32 %v995, %v999
    %v1002 = vadd.f32 %v996, %v999
    %v1003 = vld [vmem:[%s55] sm:$0x1]
    %v1004 = vld [vmem:[%s57] sm:$0x1]
    %v1005 = vsel %vm186, %v1001, 0.0
    %1006 = vadd.xlane.f32.xlu0 %v1005
    %v1007 = vpop.xlane.xlu0 %1006
    %v1008 = vsel %vm186, %v1002, 0.0
    %1009 = vadd.xlane.f32.xlu0 %v1008
    %v1010 = vpop.xlane.xlu0 %1009
    %v1011 = vrcp.pop 16.0
    %v1012 = vmul.f32 16.0, %v1011
    %v1013 = vsub.f32 1.0, %v1012
    %v1014 = vmul.f32 %v1011, %v1013
    %v1015 = vadd.f32 %v1011, %v1014
    %vm1016 = vweird.f32 %v1011
    %v1017 = vsel %vm1016, %v1011, %v1015
    %v1018 = vmul.f32 %v1007, %v1017
    %v1019 = vmul.f32 %v1010, %v1017
    %v1020 = vsub.f32 %v1001, %v1018
    %v1021 = vsub.f32 %v1002, %v1019
    %v1022 = vmul.f32 %v1020, %v1020
    %v1023 = vmul.f32 %v1021, %v1021
    %v1024 = vsel %vm186, %v1022, 0.0
    %1025 = vadd.xlane.f32.xlu0 %v1024
    %v1026 = vpop.xlane.xlu0 %1025
    %v1027 = vsel %vm186, %v1023, 0.0
    %1028 = vadd.xlane.f32.xlu0 %v1027
    %v1029 = vpop.xlane.xlu0 %1028
    %v1030 = vmul.f32 %v1026, %v1017
    %v1031 = vmul.f32 %v1029, %v1017
    %v1032 = vadd.f32 %v1030, 1e-05
    %v1033 = vadd.f32 %v1031, 1e-05
    %v1034 = vrsqrt.pop %v1032
    %v1035 = vmul.f32 %v1034, %v1032
    %v1036 = vmul.f32 %v1035, %v1034
    %v1037 = vmul.f32 0.5, %v1036
    %v1038 = vsub.f32 1.5, %v1037
    %v1039 = vmul.f32 %v1034, %v1038
    %vm1040 = vweird.f32 %v1032
    %vm1041 = vweird.f32 %v1034
    %vm1042 = vmor %vm1040, %vm1041
    %v1043 = vsel %vm1042, %v1034, %v1039
    %v1044 = vrsqrt.pop %v1033
    %v1045 = vmul.f32 %v1044, %v1033
    %v1046 = vmul.f32 %v1045, %v1044
    %v1047 = vmul.f32 0.5, %v1046
    %v1048 = vsub.f32 1.5, %v1047
    %v1049 = vmul.f32 %v1044, %v1048
    %vm1050 = vweird.f32 %v1033
    %vm1051 = vweird.f32 %v1044
    %vm1052 = vmor %vm1050, %vm1051
    %v1053 = vsel %vm1052, %v1044, %v1049
    %v1054 = vmul.f32 %v1020, %v1043
    %v1055 = vmul.f32 %v1021, %v1053
    %v1057 = vperm.slane %v1003, 0
    %v1059 = vmul.f32 %v1054, %v1057
    %v1060 = vmul.f32 %v1055, %v1057
    %v1062 = vperm.slane %v1004, 0
    %v1064 = vadd.f32 %v1059, %v1062
    %v1065 = vadd.f32 %v1060, %v1062
    %v1066 = vld [vmem:[%s59] sm:$0xff]
    %v1067 = vld [vmem:[%s59 + $0x8] sm:$0xff]
    %v1069 = vsel %vm186, %v1064, 0
    %v1072 = vsel %vm186, %v1065, 0
    %1074 = vmatpush.msra.mxu0 0.0
    %1075 = vmatpush.msra.mxu0 0.0
    %1076 = vmatpush.msra.mxu0 0.0
    %1077 = vmatpush.msra.mxu0 0.0
    %1078 = vmatpush.msra.mxu0 0.0
    %1079 = vmatpush.msra.mxu0 0.0
    %1080 = vmatpush.msra.mxu0 0.0
    %1081 = vmatpush.msra.mxu0 0.0
    %1082 = vmatpush.msra.mxu0 0.0
    %1083 = vmatpush.msra.mxu0 0.0
    %1084 = vmatpush.msra.mxu0 0.0
    %1085 = vmatpush.msra.mxu0 0.0
    %1086 = vmatpush.msra.mxu0 0.0
    %1087 = vmatpush.msra.mxu0 0.0
    %1088 = vmatpush.msra.mxu0 %v1067
    %1089 = vmatpush.msra.mxu0 %v1066
    %1090 = vmatmul.f32.gmra.mxu0 %v1069
    %v1091 = vpop.f32.mrf.mxu0
    %v1092 = vadd.f32 0.0, %v1091
    %1093 = vmatmul.f32.gmra.mxu0 %v1072
    %v1094 = vpop.f32.mrf.mxu0
    %v1095 = vadd.f32 0.0, %v1094
    %1096 = vdwg.mxu0
    %v1097 = vld [vmem:[%s61] sm:$0xff]
    %v1098 = vld [vmem:[%s61 + $0x8] sm:$0xff]
    %1099 = vmatpush.msra.mxu0 0.0
    %1100 = vmatpush.msra.mxu0 0.0
    %1101 = vmatpush.msra.mxu0 0.0
    %1102 = vmatpush.msra.mxu0 0.0
    %1103 = vmatpush.msra.mxu0 0.0
    %1104 = vmatpush.msra.mxu0 0.0
    %1105 = vmatpush.msra.mxu0 0.0
    %1106 = vmatpush.msra.mxu0 0.0
    %1107 = vmatpush.msra.mxu0 0.0
    %1108 = vmatpush.msra.mxu0 0.0
    %1109 = vmatpush.msra.mxu0 0.0
    %1110 = vmatpush.msra.mxu0 0.0
    %1111 = vmatpush.msra.mxu0 0.0
    %1112 = vmatpush.msra.mxu0 0.0
    %1113 = vmatpush.msra.mxu0 %v1098
    %1114 = vmatpush.msra.mxu0 %v1097
    %1115 = vmatmul.f32.gmra.mxu0 %v1069
    %v1116 = vpop.f32.mrf.mxu0
    %v1117 = vadd.f32 0.0, %v1116
    %1118 = vmatmul.f32.gmra.mxu0 %v1072
    %v1119 = vpop.f32.mrf.mxu0
    %v1120 = vadd.f32 0.0, %v1119
    %1121 = vdwg.mxu0
    %v1122 = vld [vmem:[%s63] sm:$0xff]
    %v1123 = vld [vmem:[%s63 + $0x8] sm:$0xff]
    %1124 = vmatpush.msra.mxu0 0.0
    %1125 = vmatpush.msra.mxu0 0.0
    %1126 = vmatpush.msra.mxu0 0.0
    %1127 = vmatpush.msra.mxu0 0.0
    %1128 = vmatpush.msra.mxu0 0.0
    %1129 = vmatpush.msra.mxu0 0.0
    %1130 = vmatpush.msra.mxu0 0.0
    %1131 = vmatpush.msra.mxu0 0.0
    %1132 = vmatpush.msra.mxu0 0.0
    %1133 = vmatpush.msra.mxu0 0.0
    %1134 = vmatpush.msra.mxu0 0.0
    %1135 = vmatpush.msra.mxu0 0.0
    %1136 = vmatpush.msra.mxu0 0.0
    %1137 = vmatpush.msra.mxu0 0.0
    %1138 = vmatpush.msra.mxu0 %v1123
    %1139 = vmatpush.msra.mxu0 %v1122
    %1140 = vmatmul.f32.gmra.mxu0 %v1069
    %v1141 = vpop.f32.mrf.mxu0
    %v1142 = vadd.f32 0.0, %v1141
    %1143 = vmatmul.f32.gmra.mxu0 %v1072
    %v1144 = vpop.f32.mrf.mxu0
    %v1145 = vadd.f32 0.0, %v1144
    %1146 = vdwg.mxu0
    %v1147 = vmul.f32 %v1092, 0.5
    %v1149 = vsel %vm214, %v1147, 0
    %v1152 = vsel %vm214, %v1117, 0
    %1154 = vmatpush.xpose.msra.mxu0 0.0
    %1155 = vmatpush.xpose.msra.mxu0 0.0
    %1156 = vmatpush.xpose.msra.mxu0 0.0
    %1157 = vmatpush.xpose.msra.mxu0 0.0
    %1158 = vmatpush.xpose.msra.mxu0 0.0
    %1159 = vmatpush.xpose.msra.mxu0 0.0
    %1160 = vmatpush.xpose.msra.mxu0 0.0
    %1161 = vmatpush.xpose.msra.mxu0 0.0
    %1162 = vmatpush.xpose.msra.mxu0 0.0
    %1163 = vmatpush.xpose.msra.mxu0 0.0
    %1164 = vmatpush.xpose.msra.mxu0 0.0
    %1165 = vmatpush.xpose.msra.mxu0 0.0
    %1166 = vmatpush.xpose.msra.mxu0 0.0
    %1167 = vmatpush.xpose.msra.mxu0 0.0
    %1168 = vmatpush.xpose.msra.mxu0 0.0
    %1169 = vmatpush.xpose.msra.mxu0 %v1152
    %1170 = vmatmul.f32.gmra.mxu0 %v1149
    %v1171 = vpop.f32.mrf.mxu0
    %v1172 = vadd.f32 0.0, %v1171
    %1173 = vdwg.mxu0
    %v1174 = vsel %vm402, -1e+09, %v1172
    %v1175 = vsel %vm258, %v1174, -inf
    %1176 = vmax.xlane.f32.xlu0 %v1175
    %v1177 = vpop.xlane.xlu0 %1176
    %v1178 = vsub.f32 %v1174, %v1177
    %v1179 = vmul.f32 %v1178, 1.442695
    %v1180 = vpow.pop %v1179
    %v1181 = vsel %vm258, %v1180, 0.0
    %1182 = vadd.xlane.f32.xlu0 %v1181
    %v1183 = vpop.xlane.xlu0 %1182
    %v1184 = vrcp.pop %v1183
    %v1185 = vmul.f32 %v1183, %v1184
    %v1186 = vsub.f32 1.0, %v1185
    %v1187 = vmul.f32 %v1184, %v1186
    %v1188 = vadd.f32 %v1184, %v1187
    %vm1189 = vweird.f32 %v1183
    %vm1190 = vweird.f32 %v1184
    %vm1191 = vmor %vm1189, %vm1190
    %v1192 = vsel %vm1191, %v1184, %v1188
    %v1193 = vand.u32 2147483647, %v1183
    %vm1194 = vcmp.eq.f32.partialorder %v1193, 8.507059e+37
    %v1195 = vand.u32 %v1183, 2147483648
    %v1196 = vor.u32 1.1754944e-38, %v1195
    %v1197 = vsel %vm1194, %v1196, %v1192
    %v1198 = vmul.f32 %v1180, %v1197
    %v1199 = vld [vmem:[#allocation3] sm:$0xff]
    %v1200 = vadd.f32 %v1199, %v1198
    %v1201 = vmul.f32 %v1200, 0.5
    %1202 = vst.msk [vmem:[#allocation3] sm:$0xff] %vm258, %v1201
    %v1204 = vsel %vm258, %v1198, 0
    %1206 = vmatpush.msra.mxu0 0.0
    %1207 = vmatpush.msra.mxu0 0.0
    %1208 = vmatpush.msra.mxu0 0.0
    %1209 = vmatpush.msra.mxu0 0.0
    %1210 = vmatpush.msra.mxu0 0.0
    %1211 = vmatpush.msra.mxu0 0.0
    %1212 = vmatpush.msra.mxu0 0.0
    %1213 = vmatpush.msra.mxu0 0.0
    %1214 = vmatpush.msra.mxu0 0.0
    %1215 = vmatpush.msra.mxu0 0.0
    %1216 = vmatpush.msra.mxu0 0.0
    %1217 = vmatpush.msra.mxu0 0.0
    %1218 = vmatpush.msra.mxu0 0.0
    %1219 = vmatpush.msra.mxu0 0.0
    %1220 = vmatpush.msra.mxu0 0.0
    %1221 = vmatpush.msra.mxu0 %v1142
    %1222 = vmatmul.f32.gmra.mxu0 %v1204
    %v1223 = vpop.f32.mrf.mxu0
    %v1224 = vadd.f32 0.0, %v1223
    %1225 = vdwg.mxu0
    %1226 = vst.msk [vmem:[#allocation2] sm:$0xff] %vm214, %v1224
    %1227 = vrot.lane.b32.xlu0 %v1147, 124
    %v1228 = vpop.permute.xlu0 %1227
    %1229 = vrot.lane.b32.xlu0 %v1117, 124
    %v1230 = vpop.permute.xlu0 %1229
    %v1231 = vsel %vm214, %v1228, 0
    %v1233 = vsel %vm214, %v1230, 0
    %1235 = vmatpush.xpose.msra.mxu0 0.0
    %1236 = vmatpush.xpose.msra.mxu0 0.0
    %1237 = vmatpush.xpose.msra.mxu0 0.0
    %1238 = vmatpush.xpose.msra.mxu0 0.0
    %1239 = vmatpush.xpose.msra.mxu0 0.0
    %1240 = vmatpush.xpose.msra.mxu0 0.0
    %1241 = vmatpush.xpose.msra.mxu0 0.0
    %1242 = vmatpush.xpose.msra.mxu0 0.0
    %1243 = vmatpush.xpose.msra.mxu0 0.0
    %1244 = vmatpush.xpose.msra.mxu0 0.0
    %1245 = vmatpush.xpose.msra.mxu0 0.0
    %1246 = vmatpush.xpose.msra.mxu0 0.0
    %1247 = vmatpush.xpose.msra.mxu0 0.0
    %1248 = vmatpush.xpose.msra.mxu0 0.0
    %1249 = vmatpush.xpose.msra.mxu0 0.0
    %1250 = vmatpush.xpose.msra.mxu0 %v1233
    %1251 = vmatmul.f32.gmra.mxu0 %v1231
    %v1252 = vpop.f32.mrf.mxu0
    %v1253 = vadd.f32 0.0, %v1252
    %1254 = vdwg.mxu0
    %v1255 = vsel %vm402, -1e+09, %v1253
    %v1256 = vsel %vm258, %v1255, -inf
    %1257 = vmax.xlane.f32.xlu0 %v1256
    %v1258 = vpop.xlane.xlu0 %1257
    %v1259 = vsub.f32 %v1255, %v1258
    %v1260 = vmul.f32 %v1259, 1.442695
    %v1261 = vpow.pop %v1260
    %v1262 = vsel %vm258, %v1261, 0.0
    %1263 = vadd.xlane.f32.xlu0 %v1262
    %v1264 = vpop.xlane.xlu0 %1263
    %v1265 = vrcp.pop %v1264
    %v1266 = vmul.f32 %v1264, %v1265
    %v1267 = vsub.f32 1.0, %v1266
    %v1268 = vmul.f32 %v1265, %v1267
    %v1269 = vadd.f32 %v1265, %v1268
    %vm1270 = vweird.f32 %v1264
    %vm1271 = vweird.f32 %v1265
    %vm1272 = vmor %vm1270, %vm1271
    %v1273 = vsel %vm1272, %v1265, %v1269
    %v1274 = vand.u32 2147483647, %v1264
    %vm1275 = vcmp.eq.f32.partialorder %v1274, 8.507059e+37
    %v1276 = vand.u32 %v1264, 2147483648
    %v1277 = vor.u32 1.1754944e-38, %v1276
    %v1278 = vsel %vm1275, %v1277, %v1273
    %v1279 = vmul.f32 %v1261, %v1278
    %v1280 = vld [vmem:[%s533] sm:$0xff]
    %v1281 = vadd.f32 %v1280, %v1279
    %v1282 = vmul.f32 %v1281, 0.5
    %1283 = vst.msk [vmem:[%s533] sm:$0xff] %vm258, %v1282
    %1285 = vrot.lane.b32.xlu0 %v1142, 124
    %v1286 = vpop.permute.xlu0 %1285
    %v1289 = vsel %vm258, %v1279, 0
    %1291 = vmatpush.msra.mxu0 0.0
    %1292 = vmatpush.msra.mxu0 0.0
    %1293 = vmatpush.msra.mxu0 0.0
    %1294 = vmatpush.msra.mxu0 0.0
    %1295 = vmatpush.msra.mxu0 0.0
    %1296 = vmatpush.msra.mxu0 0.0
    %1297 = vmatpush.msra.mxu0 0.0
    %1298 = vmatpush.msra.mxu0 0.0
    %1299 = vmatpush.msra.mxu0 0.0
    %1300 = vmatpush.msra.mxu0 0.0
    %1301 = vmatpush.msra.mxu0 0.0
    %1302 = vmatpush.msra.mxu0 0.0
    %1303 = vmatpush.msra.mxu0 0.0
    %1304 = vmatpush.msra.mxu0 0.0
    %1305 = vmatpush.msra.mxu0 0.0
    %1306 = vmatpush.msra.mxu0 %v1286
    %1307 = vmatmul.f32.gmra.mxu0 %v1289
    %v1308 = vpop.f32.mrf.mxu0
    %v1309 = vadd.f32 0.0, %v1308
    %1310 = vdwg.mxu0
    %1312 = vrot.lane.b32.xlu0 %v1309, 4
    %v1313 = vpop.permute.xlu0 %1312
    %1315 = vst.msk [vmem:[#allocation2] sm:$0xff] %vm566, %v1313
    %v1316 = vmul.f32 %v1095, 0.5
    %v1318 = vsel %vm214, %v1316, 0
    %v1321 = vsel %vm214, %v1120, 0
    %1323 = vmatpush.xpose.msra.mxu0 0.0
    %1324 = vmatpush.xpose.msra.mxu0 0.0
    %1325 = vmatpush.xpose.msra.mxu0 0.0
    %1326 = vmatpush.xpose.msra.mxu0 0.0
    %1327 = vmatpush.xpose.msra.mxu0 0.0
    %1328 = vmatpush.xpose.msra.mxu0 0.0
    %1329 = vmatpush.xpose.msra.mxu0 0.0
    %1330 = vmatpush.xpose.msra.mxu0 0.0
    %1331 = vmatpush.xpose.msra.mxu0 0.0
    %1332 = vmatpush.xpose.msra.mxu0 0.0
    %1333 = vmatpush.xpose.msra.mxu0 0.0
    %1334 = vmatpush.xpose.msra.mxu0 0.0
    %1335 = vmatpush.xpose.msra.mxu0 0.0
    %1336 = vmatpush.xpose.msra.mxu0 0.0
    %1337 = vmatpush.xpose.msra.mxu0 0.0
    %1338 = vmatpush.xpose.msra.mxu0 %v1321
    %1339 = vmatmul.f32.gmra.mxu0 %v1318
    %v1340 = vpop.f32.mrf.mxu0
    %v1341 = vadd.f32 0.0, %v1340
    %1342 = vdwg.mxu0
    %v1343 = vsel %vm402, -1e+09, %v1341
    %v1344 = vsel %vm258, %v1343, -inf
    %1345 = vmax.xlane.f32.xlu0 %v1344
    %v1346 = vpop.xlane.xlu0 %1345
    %v1347 = vsub.f32 %v1343, %v1346
    %v1348 = vmul.f32 %v1347, 1.442695
    %v1349 = vpow.pop %v1348
    %v1350 = vsel %vm258, %v1349, 0.0
    %1351 = vadd.xlane.f32.xlu0 %v1350
    %v1352 = vpop.xlane.xlu0 %1351
    %v1353 = vrcp.pop %v1352
    %v1354 = vmul.f32 %v1352, %v1353
    %v1355 = vsub.f32 1.0, %v1354
    %v1356 = vmul.f32 %v1353, %v1355
    %v1357 = vadd.f32 %v1353, %v1356
    %vm1358 = vweird.f32 %v1352
    %vm1359 = vweird.f32 %v1353
    %vm1360 = vmor %vm1358, %vm1359
    %v1361 = vsel %vm1360, %v1353, %v1357
    %v1362 = vand.u32 2147483647, %v1352
    %vm1363 = vcmp.eq.f32.partialorder %v1362, 8.507059e+37
    %v1364 = vand.u32 %v1352, 2147483648
    %v1365 = vor.u32 1.1754944e-38, %v1364
    %v1366 = vsel %vm1363, %v1365, %v1361
    %v1367 = vmul.f32 %v1349, %v1366
    %v1368 = vld [vmem:[%s620] sm:$0xff]
    %v1369 = vadd.f32 %v1368, %v1367
    %v1370 = vmul.f32 %v1369, 0.5
    %1371 = vst.msk [vmem:[%s620] sm:$0xff] %vm258, %v1370
    %v1373 = vsel %vm258, %v1367, 0
    %1375 = vmatpush.msra.mxu0 0.0
    %1376 = vmatpush.msra.mxu0 0.0
    %1377 = vmatpush.msra.mxu0 0.0
    %1378 = vmatpush.msra.mxu0 0.0
    %1379 = vmatpush.msra.mxu0 0.0
    %1380 = vmatpush.msra.mxu0 0.0
    %1381 = vmatpush.msra.mxu0 0.0
    %1382 = vmatpush.msra.mxu0 0.0
    %1383 = vmatpush.msra.mxu0 0.0
    %1384 = vmatpush.msra.mxu0 0.0
    %1385 = vmatpush.msra.mxu0 0.0
    %1386 = vmatpush.msra.mxu0 0.0
    %1387 = vmatpush.msra.mxu0 0.0
    %1388 = vmatpush.msra.mxu0 0.0
    %1389 = vmatpush.msra.mxu0 0.0
    %1390 = vmatpush.msra.mxu0 %v1145
    %1391 = vmatmul.f32.gmra.mxu0 %v1373
    %v1392 = vpop.f32.mrf.mxu0
    %v1393 = vadd.f32 0.0, %v1392
    %1394 = vdwg.mxu0
    %1395 = vst.msk [vmem:[#allocation2 + $0x8] sm:$0xff] %vm214, %v1393
    %1396 = vrot.lane.b32.xlu0 %v1316, 124
    %v1397 = vpop.permute.xlu0 %1396
    %1398 = vrot.lane.b32.xlu0 %v1120, 124
    %v1399 = vpop.permute.xlu0 %1398
    %v1400 = vsel %vm214, %v1397, 0
    %v1402 = vsel %vm214, %v1399, 0
    %1404 = vmatpush.xpose.msra.mxu0 0.0
    %1405 = vmatpush.xpose.msra.mxu0 0.0
    %1406 = vmatpush.xpose.msra.mxu0 0.0
    %1407 = vmatpush.xpose.msra.mxu0 0.0
    %1408 = vmatpush.xpose.msra.mxu0 0.0
    %1409 = vmatpush.xpose.msra.mxu0 0.0
    %1410 = vmatpush.xpose.msra.mxu0 0.0
    %1411 = vmatpush.xpose.msra.mxu0 0.0
    %1412 = vmatpush.xpose.msra.mxu0 0.0
    %1413 = vmatpush.xpose.msra.mxu0 0.0
    %1414 = vmatpush.xpose.msra.mxu0 0.0
    %1415 = vmatpush.xpose.msra.mxu0 0.0
    %1416 = vmatpush.xpose.msra.mxu0 0.0
    %1417 = vmatpush.xpose.msra.mxu0 0.0
    %1418 = vmatpush.xpose.msra.mxu0 0.0
    %1419 = vmatpush.xpose.msra.mxu0 %v1402
    %1420 = vmatmul.f32.gmra.mxu0 %v1400
    %v1421 = vpop.f32.mrf.mxu0
    %v1422 = vadd.f32 0.0, %v1421
    %1423 = vdwg.mxu0
    %v1424 = vsel %vm402, -1e+09, %v1422
    %v1425 = vsel %vm258, %v1424, -inf
    %1426 = vmax.xlane.f32.xlu0 %v1425
    %v1427 = vpop.xlane.xlu0 %1426
    %v1428 = vsub.f32 %v1424, %v1427
    %v1429 = vmul.f32 %v1428, 1.442695
    %v1430 = vpow.pop %v1429
    %v1431 = vsel %vm258, %v1430, 0.0
    %1432 = vadd.xlane.f32.xlu0 %v1431
    %v1433 = vpop.xlane.xlu0 %1432
    %v1434 = vrcp.pop %v1433
    %v1435 = vmul.f32 %v1433, %v1434
    %v1436 = vsub.f32 1.0, %v1435
    %v1437 = vmul.f32 %v1434, %v1436
    %v1438 = vadd.f32 %v1434, %v1437
    %vm1439 = vweird.f32 %v1433
    %vm1440 = vweird.f32 %v1434
    %vm1441 = vmor %vm1439, %vm1440
    %v1442 = vsel %vm1441, %v1434, %v1438
    %v1443 = vand.u32 2147483647, %v1433
    %vm1444 = vcmp.eq.f32.partialorder %v1443, 8.507059e+37
    %v1445 = vand.u32 %v1433, 2147483648
    %v1446 = vor.u32 1.1754944e-38, %v1445
    %v1447 = vsel %vm1444, %v1446, %v1442
    %v1448 = vmul.f32 %v1430, %v1447
    %v1449 = vld [vmem:[%s699] sm:$0xff]
    %v1450 = vadd.f32 %v1449, %v1448
    %v1451 = vmul.f32 %v1450, 0.5
    %1452 = vst.msk [vmem:[%s699] sm:$0xff] %vm258, %v1451
    %1454 = vrot.lane.b32.xlu0 %v1145, 124
    %v1455 = vpop.permute.xlu0 %1454
    %v1458 = vsel %vm258, %v1448, 0
    %1460 = vmatpush.msra.mxu0 0.0
    %1461 = vmatpush.msra.mxu0 0.0
    %1462 = vmatpush.msra.mxu0 0.0
    %1463 = vmatpush.msra.mxu0 0.0
    %1464 = vmatpush.msra.mxu0 0.0
    %1465 = vmatpush.msra.mxu0 0.0
    %1466 = vmatpush.msra.mxu0 0.0
    %1467 = vmatpush.msra.mxu0 0.0
    %1468 = vmatpush.msra.mxu0 0.0
    %1469 = vmatpush.msra.mxu0 0.0
    %1470 = vmatpush.msra.mxu0 0.0
    %1471 = vmatpush.msra.mxu0 0.0
    %1472 = vmatpush.msra.mxu0 0.0
    %1473 = vmatpush.msra.mxu0 0.0
    %1474 = vmatpush.msra.mxu0 0.0
    %1475 = vmatpush.msra.mxu0 %v1455
    %1476 = vmatmul.f32.gmra.mxu0 %v1458
    %v1477 = vpop.f32.mrf.mxu0
    %v1478 = vadd.f32 0.0, %v1477
    %1479 = vdwg.mxu0
    %1481 = vrot.lane.b32.xlu0 %v1478, 4
    %v1482 = vpop.permute.xlu0 %1481
    %1484 = vst.msk [vmem:[#allocation2 + $0x8] sm:$0xff] %vm566, %v1482
    %v1485 = vld [vmem:[#allocation2] sm:$0xff]
    %v1486 = vld [vmem:[#allocation2 + $0x8] sm:$0xff]
    %v1487 = vld [vmem:[%s65] sm:$0xff]
    %v1489 = vsel %vm258, %v1485, 0
    %v1492 = vsel %vm258, %v1486, 0
    %1494 = vmatpush.msra.mxu0 0.0
    %1495 = vmatpush.msra.mxu0 0.0
    %1496 = vmatpush.msra.mxu0 0.0
    %1497 = vmatpush.msra.mxu0 0.0
    %1498 = vmatpush.msra.mxu0 0.0
    %1499 = vmatpush.msra.mxu0 0.0
    %1500 = vmatpush.msra.mxu0 0.0
    %1501 = vmatpush.msra.mxu0 0.0
    %1502 = vmatpush.msra.mxu0 0.0
    %1503 = vmatpush.msra.mxu0 0.0
    %1504 = vmatpush.msra.mxu0 0.0
    %1505 = vmatpush.msra.mxu0 0.0
    %1506 = vmatpush.msra.mxu0 0.0
    %1507 = vmatpush.msra.mxu0 0.0
    %1508 = vmatpush.msra.mxu0 0.0
    %1509 = vmatpush.msra.mxu0 %v1487
    %1510 = vmatmul.f32.gmra.mxu0 %v1489
    %v1511 = vpop.f32.mrf.mxu0
    %v1512 = vadd.f32 %v1001, %v1511
    %1513 = vmatmul.f32.gmra.mxu0 %v1492
    %v1514 = vpop.f32.mrf.mxu0
    %v1515 = vadd.f32 %v1002, %v1514
    %1516 = vdwg.mxu0
    %v1517 = vld [vmem:[%s67] sm:$0x1]
    %v1518 = vld [vmem:[%s69] sm:$0x1]
    %v1519 = vsel %vm186, %v1512, 0.0
    %1520 = vadd.xlane.f32.xlu0 %v1519
    %v1521 = vpop.xlane.xlu0 %1520
    %v1522 = vsel %vm186, %v1515, 0.0
    %1523 = vadd.xlane.f32.xlu0 %v1522
    %v1524 = vpop.xlane.xlu0 %1523
    %v1525 = vmul.f32 %v1521, %v1017
    %v1526 = vmul.f32 %v1524, %v1017
    %v1527 = vsub.f32 %v1512, %v1525
    %v1528 = vsub.f32 %v1515, %v1526
    %v1529 = vmul.f32 %v1527, %v1527
    %v1530 = vmul.f32 %v1528, %v1528
    %v1531 = vsel %vm186, %v1529, 0.0
    %1532 = vadd.xlane.f32.xlu0 %v1531
    %v1533 = vpop.xlane.xlu0 %1532
    %v1534 = vsel %vm186, %v1530, 0.0
    %1535 = vadd.xlane.f32.xlu0 %v1534
    %v1536 = vpop.xlane.xlu0 %1535
    %v1537 = vmul.f32 %v1533, %v1017
    %v1538 = vmul.f32 %v1536, %v1017
    %v1539 = vadd.f32 %v1537, 1e-06
    %v1540 = vadd.f32 %v1538, 1e-06
    %v1541 = vrsqrt.pop %v1539
    %v1542 = vmul.f32 %v1541, %v1539
    %v1543 = vmul.f32 %v1542, %v1541
    %v1544 = vmul.f32 0.5, %v1543
    %v1545 = vsub.f32 1.5, %v1544
    %v1546 = vmul.f32 %v1541, %v1545
    %vm1547 = vweird.f32 %v1539
    %vm1548 = vweird.f32 %v1541
    %vm1549 = vmor %vm1547, %vm1548
    %v1550 = vsel %vm1549, %v1541, %v1546
    %v1551 = vrsqrt.pop %v1540
    %v1552 = vmul.f32 %v1551, %v1540
    %v1553 = vmul.f32 %v1552, %v1551
    %v1554 = vmul.f32 0.5, %v1553
    %v1555 = vsub.f32 1.5, %v1554
    %v1556 = vmul.f32 %v1551, %v1555
    %vm1557 = vweird.f32 %v1540
    %vm1558 = vweird.f32 %v1551
    %vm1559 = vmor %vm1557, %vm1558
    %v1560 = vsel %vm1559, %v1551, %v1556
    %v1561 = vmul.f32 %v1527, %v1550
    %v1562 = vmul.f32 %v1528, %v1560
    %v1564 = vperm.slane %v1517, 0
    %v1566 = vmul.f32 %v1561, %v1564
    %v1567 = vmul.f32 %v1562, %v1564
    %v1569 = vperm.slane %v1518, 0
    %v1571 = vadd.f32 %v1566, %v1569
    %v1572 = vadd.f32 %v1567, %v1569
    %v1573 = vld [vmem:[%s71] sm:$0xff]
    %v1574 = vld [vmem:[%s71 + $0x8] sm:$0xff]
    %v1575 = vld [vmem:[%s73] sm:$0x1]
    %v1577 = vperm.slane %v1575, 0
    %v1580 = vsel %vm186, %v1571, 0
    %v1583 = vsel %vm186, %v1572, 0
    %1585 = vmatpush.msra.mxu0 0.0
    %1586 = vmatpush.msra.mxu0 0.0
    %1587 = vmatpush.msra.mxu0 0.0
    %1588 = vmatpush.msra.mxu0 0.0
    %1589 = vmatpush.msra.mxu0 0.0
    %1590 = vmatpush.msra.mxu0 0.0
    %1591 = vmatpush.msra.mxu0 0.0
    %1592 = vmatpush.msra.mxu0 0.0
    %1593 = vmatpush.msra.mxu0 0.0
    %1594 = vmatpush.msra.mxu0 0.0
    %1595 = vmatpush.msra.mxu0 0.0
    %1596 = vmatpush.msra.mxu0 0.0
    %1597 = vmatpush.msra.mxu0 0.0
    %1598 = vmatpush.msra.mxu0 0.0
    %1599 = vmatpush.msra.mxu0 %v1574
    %1600 = vmatpush.msra.mxu0 %v1573
    %1601 = vmatmul.f32.gmra.mxu0 %v1580
    %v1602 = vpop.f32.mrf.mxu0
    %v1603 = vadd.f32 %v1577, %v1602
    %1604 = vmatmul.f32.gmra.mxu0 %v1583
    %v1605 = vpop.f32.mrf.mxu0
    %v1606 = vadd.f32 %v1577, %v1605
    %1607 = vdwg.mxu0
    %v1608 = vmax.f32 %v1603, 0.0
    %v1609 = vmax.f32 %v1606, 0.0
    %v1610 = vld [vmem:[%s75] sm:$0xff]
    %v1611 = vld [vmem:[%s75 + $0x8] sm:$0xff]
    %v1612 = vld [vmem:[%s77] sm:$0x1]
    %v1614 = vperm.slane %v1612, 0
    %v1617 = vsel %vm186, %v1608, 0
    %v1620 = vsel %vm186, %v1609, 0
    %1622 = vmatpush.msra.mxu0 0.0
    %1623 = vmatpush.msra.mxu0 0.0
    %1624 = vmatpush.msra.mxu0 0.0
    %1625 = vmatpush.msra.mxu0 0.0
    %1626 = vmatpush.msra.mxu0 0.0
    %1627 = vmatpush.msra.mxu0 0.0
    %1628 = vmatpush.msra.mxu0 0.0
    %1629 = vmatpush.msra.mxu0 0.0
    %1630 = vmatpush.msra.mxu0 0.0
    %1631 = vmatpush.msra.mxu0 0.0
    %1632 = vmatpush.msra.mxu0 0.0
    %1633 = vmatpush.msra.mxu0 0.0
    %1634 = vmatpush.msra.mxu0 0.0
    %1635 = vmatpush.msra.mxu0 0.0
    %1636 = vmatpush.msra.mxu0 %v1611
    %1637 = vmatpush.msra.mxu0 %v1610
    %1638 = vmatmul.f32.gmra.mxu0 %v1617
    %v1639 = vpop.f32.mrf.mxu0
    %v1640 = vadd.f32 %v1614, %v1639
    %1641 = vmatmul.f32.gmra.mxu0 %v1620
    %v1642 = vpop.f32.mrf.mxu0
    %v1643 = vadd.f32 %v1614, %v1642
    %1644 = vdwg.mxu0
    %v1645 = vadd.f32 %v1640, %v1512
    %v1646 = vadd.f32 %v1643, %v1515
    %v1647 = vxor.u32 %v1645, 2147483648
    %v1648 = vxor.u32 %v1646, 2147483648
    %v1649 = vmul.f32 %v1647, 1.442695
    %v1650 = vpow.pop %v1649
    %v1651 = vmul.f32 %v1648, 1.442695
    %v1652 = vpow.pop %v1651
    %v1653 = vadd.f32 %v1650, 1.0
    %v1654 = vadd.f32 %v1652, 1.0
    %v1655 = vrcp.pop %v1653
    %v1656 = vmul.f32 %v1653, %v1655
    %v1657 = vsub.f32 1.0, %v1656
    %v1658 = vmul.f32 %v1655, %v1657
    %v1659 = vadd.f32 %v1655, %v1658
    %vm1660 = vweird.f32 %v1653
    %vm1661 = vweird.f32 %v1655
    %vm1662 = vmor %vm1660, %vm1661
    %v1663 = vsel %vm1662, %v1655, %v1659
    %v1664 = vand.u32 2147483647, %v1653
    %vm1665 = vcmp.eq.f32.partialorder %v1664, 8.507059e+37
    %v1666 = vand.u32 %v1653, 2147483648
    %v1667 = vor.u32 1.1754944e-38, %v1666
    %v1668 = vsel %vm1665, %v1667, %v1663
    %v1669 = vmul.f32 1.0, %v1668
    %v1670 = vrcp.pop %v1654
    %v1671 = vmul.f32 %v1654, %v1670
    %v1672 = vsub.f32 1.0, %v1671
    %v1673 = vmul.f32 %v1670, %v1672
    %v1674 = vadd.f32 %v1670, %v1673
    %vm1675 = vweird.f32 %v1654
    %vm1676 = vweird.f32 %v1670
    %vm1677 = vmor %vm1675, %vm1676
    %v1678 = vsel %vm1677, %v1670, %v1674
    %v1679 = vand.u32 2147483647, %v1654
    %vm1680 = vcmp.eq.f32.partialorder %v1679, 8.507059e+37
    %v1681 = vand.u32 %v1654, 2147483648
    %v1682 = vor.u32 1.1754944e-38, %v1681
    %v1683 = vsel %vm1680, %v1682, %v1678
    %v1684 = vmul.f32 1.0, %v1683
    %v1685 = vtanh.pop %v1645
    %v1686 = vtanh.pop %v1646
    %1689 = vrot.lane.b32.xlu0 %v1685, 120
    %v1690 = vpop.permute.xlu0 %1689
    %1691 = vrot.lane.b32.xlu0 %v1686, 120
    %v1692 = vpop.permute.xlu0 %1691
    %v1695 = vmul.f32 %v1669, %v1690
    %v1696 = vmul.f32 %v1684, %v1692
    %v1697 = vld [vmem:[%s27] sm:$0xff]
    %v1698 = vld [vmem:[%s29] sm:$0x1]
    %v1700 = vperm.slane %v1698, 0
    %v1703 = vsel %vm258, %v1695, 0
    %v1706 = vsel %vm258, %v1696, 0
    %1708 = vmatpush.msra.mxu0 0.0
    %1709 = vmatpush.msra.mxu0 0.0
    %1710 = vmatpush.msra.mxu0 0.0
    %1711 = vmatpush.msra.mxu0 0.0
    %1712 = vmatpush.msra.mxu0 0.0
    %1713 = vmatpush.msra.mxu0 0.0
    %1714 = vmatpush.msra.mxu0 0.0
    %1715 = vmatpush.msra.mxu0 0.0
    %1716 = vmatpush.msra.mxu0 0.0
    %1717 = vmatpush.msra.mxu0 0.0
    %1718 = vmatpush.msra.mxu0 0.0
    %1719 = vmatpush.msra.mxu0 0.0
    %1720 = vmatpush.msra.mxu0 0.0
    %1721 = vmatpush.msra.mxu0 0.0
    %1722 = vmatpush.msra.mxu0 0.0
    %1723 = vmatpush.msra.mxu0 %v1697
    %1724 = vmatmul.f32.gmra.mxu0 %v1703
    %v1725 = vpop.f32.mrf.mxu0
    %v1726 = vadd.f32 %v1700, %v1725
    %1727 = vmatmul.f32.gmra.mxu0 %v1706
    %v1728 = vpop.f32.mrf.mxu0
    %v1729 = vadd.f32 %v1700, %v1728
    %1730 = vdwg.mxu0
    %v1731 = vadd.f32 %v168, %v1726
    %v1732 = vadd.f32 %v169, %v1729
    %v1733 = vmul.f32 %v1731, 0.70710677
    %v1734 = vmul.f32 %v1732, 0.70710677
    %1735 = vst.msk [vmem:[%s79] sm:$0xff] %vm214, %v1733
    %1736 = vst.msk [vmem:[%s79 + $0x8] sm:$0xff] %vm214, %v1734
    %1739 = vrot.lane.b32.xlu0 %v1726, 124
    %v1740 = vpop.permute.xlu0 %1739
    %1741 = vrot.lane.b32.xlu0 %v1729, 124
    %v1742 = vpop.permute.xlu0 %1741
    %1745 = vst.msk [vmem:[%s81] sm:$0xff] %vm214, %v1740
    %1746 = vst.msk [vmem:[%s81 + $0x8] sm:$0xff] %vm214, %v1742
    // Predicated region
    $region158: #{gta_forward.1} parent=1 // pred_check
      _
    $region159: #{gta_forward.1} parent=1 // pred_check_branch
      %1748 = sbr.rel (0) target = $region161
    $region160: #{gta_forward.1} parent=1 // pred_region
      _
    $region161: #{gta_forward.1} parent=1 // pred_fallthru
      _
    // Predicated region
    $region162: #{gta_forward.1} parent=1 // pred_check
      _
    $region163: #{gta_forward.1} parent=1 // pred_check_branch
      %1750 = sbr.rel (0) target = $region165
    $region164: #{gta_forward.1} parent=1 // pred_region
      _
    $region165: #{gta_forward.1} parent=1 // pred_fallthru
      _
    // Predicated region
    $region166: #{gta_forward.1} parent=1 // pred_check
      _
    $region167: #{gta_forward.1} parent=1 // pred_check_branch
      %1752 = sbr.rel (0) target = $region169
    $region168: #{gta_forward.1} parent=1 // pred_region
      %1754 = vsyncadd [#allocation4], 0
      %s1755 = sshll.u32 [#allocation3], 4
      %s1756 = int_to_ptr.vmem [resolvable:$true] %s1755
      %s1757 = sshll.u32 %s83, 4
      %s1758 = int_to_ptr.hbm [resolvable:$true] %s1757
      %1763 = dma.vmem_to_hbm [thread:$0]  %s1756, 512, %s1758, [#allocation4], 128, 128, 8
    $region169: #{gta_forward.1} parent=1 // pred_fallthru
      _
    // Predicated region
    $region170: #{gta_forward.1} parent=1 // pred_check
      _
    $region171: #{gta_forward.1} parent=1 // pred_check_branch
      %1765 = sbr.rel (0) target = $region173
    $region172: #{gta_forward.1} parent=1 // pred_region
      _
    $region173: #{gta_forward.1} parent=1 // pred_fallthru
      _
    // Predicated region
    $region174: #{gta_forward.1} parent=1 // pred_check
      _
    $region175: #{gta_forward.1} parent=1 // pred_check_branch
      %1767 = sbr.rel (0) target = $region177
    $region176: #{gta_forward.1} parent=1 // pred_region
      _
    $region177: #{gta_forward.1} parent=1 // pred_fallthru
      _
    // Predicated region
    $region178: #{gta_forward.1} parent=1 // pred_check
      _
    $region179: #{gta_forward.1} parent=1 // pred_check_branch
      %1769 = sbr.rel (0) target = $region181
    $region180: #{gta_forward.1} parent=1 // pred_region
      %1771 = dma.done [#allocation4], 512
    $region181: #{gta_forward.1} parent=1 // pred_fallthru
      _
    %1772 = vsyncpa [#allocation4], 1

</llo_original>
